<compile_context>
chip_gen: v5e
topology: v5e:2x2
jax: 0.10.0
libtpu: 0.0.40
codegen_flags: <defaults>
</compile_context>

<pallas_src>
import functools

import jax
import jax.numpy as jnp
from jax.experimental import pallas as pl
from jax.experimental.pallas import tpu as pltpu


# ----------------------------------------------------------------------------
# Fused kernel: edge transform + scatter-add + node MLP + output projection
# ----------------------------------------------------------------------------
def output_block_kernel(idx_ref, x_ref, rbf_t_ref,
                        w_rbf_hbm, w_lay_hbm, b_lay_hbm, w_out_hbm,
                        o_ref,
                        acc_ref, w_rbf_v, w_lay_v, b_lay_v, w_out_v, sem,
                        *, num_layers, n_pad, compute_dtype):
    step = pl.program_id(0)

    @pl.when(step == 0)
    def _init():
        acc_ref[...] = jnp.zeros_like(acc_ref)
        # Single-buffered resident weights: one DMA into VMEM scratch at step 0,
        # reused for the whole grid (no per-step double-buffered weight copies).
        copies = (
            pltpu.make_async_copy(w_rbf_hbm, w_rbf_v, sem.at[0]),
            pltpu.make_async_copy(w_lay_hbm, w_lay_v, sem.at[1]),
            pltpu.make_async_copy(b_lay_hbm, b_lay_v, sem.at[2]),
            pltpu.make_async_copy(w_out_hbm, w_out_v, sem.at[3]),
        )
        for cp in copies:
            cp.start()
        for cp in copies:
            cp.wait()

    # ---- edge stage: (rbf @ W_rbf) * x -------------------------------------
    # rbf arrives lane-dense as [R, tile_e]; contract over R = LHS dim 0
    # (same transposed-LHS dot pattern used by the TPU flash-attention bwd).
    proj = jax.lax.dot_general(
        rbf_t_ref[...], w_rbf_v[...],
        dimension_numbers=(((0,), (0,)), ((), ())),
        preferred_element_type=jnp.float32)                     # (tile_e, H) f32
    # TODO(synk): on v6e/v7x this elementwise multiply could stay in bf16
    # (bf16 VALU); kept in f32 so the same kernel is also right for v5e.
    edge = (proj * x_ref[...].astype(jnp.float32)).astype(compute_dtype)

    # ---- scatter-add as a one-hot MXU matmul -------------------------------
    # onehot[n, e] = (i[e] == n);  acc[n, :] += sum_e onehot[n, e] * edge[e, :]
    tile_e = x_ref.shape[0]
    onehot = (idx_ref[...] ==
              jax.lax.broadcasted_iota(jnp.int32, (n_pad, tile_e), 0)
              ).astype(compute_dtype)
    acc_ref[...] += jnp.dot(onehot, edge, preferred_element_type=jnp.float32)

    # ---- node stage (runs once, after all edge tiles are accumulated) ------
    @pl.when(step == pl.num_programs(0) - 1)
    def _finalize():
        h = acc_ref[...]                                        # f32 (n_pad, H)
        for l in range(num_layers):                             # static unroll
            pre = (jnp.dot(h, w_lay_v[l], preferred_element_type=jnp.float32)
                   + b_lay_v[l])
            h = pre * jax.nn.sigmoid(pre)                       # SiLU in f32
        o_ref[...] = jnp.dot(h, w_out_v[...],
                             preferred_element_type=jnp.float32
                             ).astype(o_ref.dtype)


# ----------------------------------------------------------------------------
# Wrapper
# ----------------------------------------------------------------------------
def output_block(x, rbf, i, num_nodes, params, *,
                 tile_edges=1024, compute_dtype=jnp.bfloat16):
    """Pallas implementation of OutputBlock.forward.

    x:   [E, H]          float32  (edge messages)
    rbf: [E, num_radial] float32
    i:   [E]             int32    (edge -> node scatter index)
    """
    E, H = x.shape
    _, R = rbf.shape
    w_lay = params["w_lay"]                          # [L, H, H]
    num_layers = w_lay.shape[0]
    O = params["w_out"].shape[1]
    assert num_layers >= 1
    assert tile_edges % 128 == 0                     # lane-aligned edge tiles

    e_pad = pl.cdiv(E, tile_edges) * tile_edges
    # Full MXU M-dimension / full sublane groups for the node-side matmuls.
    n_pad = max(128, pl.cdiv(num_nodes, 128) * 128)

    # Zero-pad edge rows so padded edges contribute exactly 0 to the scatter.
    if e_pad != E:
        x = jnp.pad(x, ((0, e_pad - E), (0, 0)))
        rbf = jnp.pad(rbf, ((0, e_pad - E), (0, 0)))
        i = jnp.pad(i, ((0, e_pad - E),))
    idx = i.astype(jnp.int32).reshape(1, e_pad)

    xc = x.astype(compute_dtype)                     # big stream -> bf16
    rbf_t = rbf.astype(jnp.float32).T                # [R, E] lane-dense, tiny stream
    w_rbf = params["w_rbf"].astype(jnp.float32)
    w_layc = w_lay.astype(jnp.float32)               # node stage stays f32
    b_lay = params["b_lay"].astype(jnp.float32)
    w_out = params["w_out"].astype(jnp.float32)

    kernel = functools.partial(output_block_kernel, num_layers=num_layers,
                               n_pad=n_pad, compute_dtype=compute_dtype)

    out = pl.pallas_call(
        kernel,
        out_shape=jax.ShapeDtypeStruct((n_pad, O), jnp.float32),
        grid=(e_pad // tile_edges,),
        in_specs=[
            pl.BlockSpec((1, tile_edges), lambda e: (0, e)),        # i
            pl.BlockSpec((tile_edges, H), lambda e: (e, 0)),        # x
            pl.BlockSpec((R, tile_edges), lambda e: (0, e)),        # rbf^T
            pl.BlockSpec(memory_space=pl.ANY),                      # W_rbf (HBM)
            pl.BlockSpec(memory_space=pl.ANY),                      # W_l   (HBM)
            pl.BlockSpec(memory_space=pl.ANY),                      # b_l   (HBM)
            pl.BlockSpec(memory_space=pl.ANY),                      # W_out (HBM)
        ],
        out_specs=pl.BlockSpec((n_pad, O), lambda e: (0, 0)),
        scratch_shapes=[
            pltpu.VMEM((n_pad, H), jnp.float32),                    # node acc
            pltpu.VMEM((R, H), jnp.float32),                        # W_rbf
            pltpu.VMEM((num_layers, H, H), jnp.float32),            # layer W
            pltpu.VMEM((num_layers, 1, H), jnp.float32),            # layer b
            pltpu.VMEM((H, O), jnp.float32),                        # W_out
            pltpu.SemaphoreType.DMA((4,)),                          # weight DMAs
        ],
        compiler_params=pltpu.CompilerParams(
            # Node accumulator is carried across grid steps -> sequential grid.
            dimension_semantics=("arbitrary",),
            vmem_limit_bytes=32 * 1024 * 1024,   # explicit budget; fits v5e/v6e/v7x
        ),
    )(idx, xc, rbf_t, w_rbf, w_layc, b_lay, w_out)

    # TODO(synk): for num_nodes >> a few hundred, switch to a node-tiled
    # two-pass variant (one-hot scatter cost grows O(n_pad) per edge and the
    # resident accumulator grows n_pad*H*4 B; size the ceiling against v7x's
    # 64 MiB VMEM, not v5e/v6e's 128 MiB).
    # TODO(synk): on v7x, split the edge axis across the 2 TensorCores
    # (pl.core_map / core-parallel leading grid axis) with per-core partial
    # accumulators reduced before the node MLP.
    return out[:num_nodes]


# ----------------------------------------------------------------------------
# Parameter init. (PyTorch reset_parameters uses glorot_orthogonal / zeros;
# the forward pass is init-agnostic, so random weights make the check
# meaningful.)
# ----------------------------------------------------------------------------
def init_params(key, num_radial, hidden, out_channels, num_layers):
    ks = jax.random.split(key, num_layers + 3)

    def unif(k, shape, fan_in):
        bound = 1.0 / jnp.sqrt(jnp.float32(fan_in))
        return jax.random.uniform(k, shape, jnp.float32, -bound, bound)

    w_rbf = unif(ks[0], (num_radial, hidden), num_radial)               # bias=False
    w_lay = jnp.stack([unif(ks[1 + l], (hidden, hidden), hidden)
                       for l in range(num_layers)])                     # [L, H, H]
    b_lay = 0.1 * jax.random.normal(ks[num_layers + 1],
                                    (num_layers, 1, hidden), jnp.float32)
    w_out = unif(ks[num_layers + 2], (hidden, out_channels), hidden)    # bias=False
    return dict(w_rbf=w_rbf, w_lay=w_lay, b_lay=b_lay, w_out=w_out)


# ----------------------------------------------------------------------------
# Pure-JAX reference (mirrors the PyTorch forward exactly, f32 throughout)
# ----------------------------------------------------------------------------
def reference(x, rbf, i, num_nodes, p):
    silu = lambda v: v * jax.nn.sigmoid(v)
    h = (rbf @ p["w_rbf"]) * x
    h = jnp.zeros((num_nodes, x.shape[1]), jnp.float32).at[i].add(h)
    for l in range(p["w_lay"].shape[0]):
        h = silu(h @ p["w_lay"][l] + p["b_lay"][l])
    return h @ p["w_out"]


if __name__ == "__main__":
    num_radial, hidden, out_channels, num_layers = 8, 128, 128, 2
    # 1500 edges -> two 1024-edge grid steps (exercises padding + accumulation);
    # 80 nodes -> n_pad rounds up to 128.
    num_nodes, num_edges = 80, 1500

    key = jax.random.PRNGKey(0)
    kx, kr, ki, kp = jax.random.split(key, 4)

    x = jax.random.normal(kx, (num_edges, hidden), jnp.float32)
    rbf = jax.random.normal(kr, (num_edges, num_radial), jnp.float32)
    i = jax.random.randint(ki, (num_edges,), 0, num_nodes, jnp.int32)

    params = init_params(kp, num_radial, hidden, out_channels, num_layers)

    out = jax.block_until_ready(output_block(x, rbf, i, num_nodes, params))
    ref = reference(x, rbf, i, num_nodes, params)

    assert out.shape == (num_nodes, out_channels), out.shape
    # bf16 edge terms / f32 accumulation vs an all-f32 reference
    err = float(jnp.max(jnp.abs(out - ref)))
    assert jnp.allclose(out, ref, atol=5e-2, rtol=5e-2), err

    print("KERNEL_OK")
</pallas_src>

<mosaic_0001>
module attributes {stable_mosaic.version = 11 : i64} {
  func.func @output_block_kernel(%arg0: i32, %arg1: memref<1x1024xi32, #tpu.memory_space<vmem>>, %arg2: memref<1024x128xbf16, #tpu.memory_space<vmem>>, %arg3: memref<8x1024xf32, #tpu.memory_space<vmem>>, %arg4: memref<8x128xf32, #tpu.memory_space<any>>, %arg5: memref<2x128x128xf32, #tpu.memory_space<any>>, %arg6: memref<2x1x128xf32, #tpu.memory_space<any>>, %arg7: memref<128x128xf32, #tpu.memory_space<any>>, %arg8: memref<128x128xf32, #tpu.memory_space<vmem>>, %arg9: memref<128x128xf32, #tpu.memory_space<vmem>>, %arg10: memref<8x128xf32, #tpu.memory_space<vmem>>, %arg11: memref<2x128x128xf32, #tpu.memory_space<vmem>>, %arg12: memref<2x1x128xf32, #tpu.memory_space<vmem>>, %arg13: memref<128x128xf32, #tpu.memory_space<vmem>>, %arg14: memref<4x!tpu.dma_semaphore, #tpu.memory_space<semaphore_mem>>) attributes {dimension_semantics = [#tpu.dimension_semantics<arbitrary>], iteration_bounds = array<i64: 2>, scalar_prefetch = 0 : i64, scratch_operands = 6 : i64, tpu.core_type = #tpu.core_type<tc>, window_params = [{transform_indices = @transform_0, window_bounds = array<i64: 1, 1024>}, {transform_indices = @transform_1, window_bounds = array<i64: 1024, 128>}, {transform_indices = @transform_2, window_bounds = array<i64: 8, 1024>}, {}, {}, {}, {}, {pipeline_mode = #tpu.pipeline_mode<synchronous>, transform_indices = @transform_7, window_bounds = array<i64: 128, 128>}]} {
    %c0_i32 = arith.constant 0 : i32
    %0 = arith.cmpi eq, %arg0, %c0_i32 : i32
    %1 = arith.extui %0 : i1 to i32
    %c0_i32_0 = arith.constant 0 : i32
    %2 = arith.cmpi ne, %1, %c0_i32_0 : i32
    scf.if %2 {
      %cst_14 = arith.constant 0.000000e+00 : f32
      %24 = vector.broadcast %cst_14 : f32 to vector<128x128xf32>
      %c0_15 = arith.constant 0 : index
      %c0_16 = arith.constant 0 : index
      %25 = vector.load %arg9[%c0_15, %c0_16] : memref<128x128xf32, #tpu.memory_space<vmem>>, vector<128x128xf32>
      tpu.vector_store %arg9[%c0_15, %c0_16], %24 {strides = array<i32>} : memref<128x128xf32, #tpu.memory_space<vmem>>, vector<128x128xf32>,
      %c0_i32_17 = arith.constant 0 : i32
      %26 = tpu.memref_slice %arg14[%c0_i32_17] : memref<4x!tpu.dma_semaphore, #tpu.memory_space<semaphore_mem>> -> memref<1x!tpu.dma_semaphore, #tpu.memory_space<semaphore_mem>>
      %27 = tpu.memref_squeeze %26 : memref<1x!tpu.dma_semaphore, #tpu.memory_space<semaphore_mem>> -> memref<!tpu.dma_semaphore, #tpu.memory_space<semaphore_mem>>
      tpu.enqueue_dma source(%arg4 : memref<8x128xf32, #tpu.memory_space<any>>) target(%arg10 : memref<8x128xf32, #tpu.memory_space<vmem>>) target_semaphore(%27 : memref<!tpu.dma_semaphore, #tpu.memory_space<semaphore_mem>>)
      %c1_i32_18 = arith.constant 1 : i32
      %28 = tpu.memref_slice %arg14[%c1_i32_18] : memref<4x!tpu.dma_semaphore, #tpu.memory_space<semaphore_mem>> -> memref<1x!tpu.dma_semaphore, #tpu.memory_space<semaphore_mem>>
      %29 = tpu.memref_squeeze %28 : memref<1x!tpu.dma_semaphore, #tpu.memory_space<semaphore_mem>> -> memref<!tpu.dma_semaphore, #tpu.memory_space<semaphore_mem>>
      tpu.enqueue_dma source(%arg5 : memref<2x128x128xf32, #tpu.memory_space<any>>) target(%arg11 : memref<2x128x128xf32, #tpu.memory_space<vmem>>) target_semaphore(%29 : memref<!tpu.dma_semaphore, #tpu.memory_space<semaphore_mem>>)
      %c2_i32 = arith.constant 2 : i32
      %30 = tpu.memref_slice %arg14[%c2_i32] : memref<4x!tpu.dma_semaphore, #tpu.memory_space<semaphore_mem>> -> memref<1x!tpu.dma_semaphore, #tpu.memory_space<semaphore_mem>>
      %31 = tpu.memref_squeeze %30 : memref<1x!tpu.dma_semaphore, #tpu.memory_space<semaphore_mem>> -> memref<!tpu.dma_semaphore, #tpu.memory_space<semaphore_mem>>
      tpu.enqueue_dma source(%arg6 : memref<2x1x128xf32, #tpu.memory_space<any>>) target(%arg12 : memref<2x1x128xf32, #tpu.memory_space<vmem>>) target_semaphore(%31 : memref<!tpu.dma_semaphore, #tpu.memory_space<semaphore_mem>>)
      %c3_i32 = arith.constant 3 : i32
      %32 = tpu.memref_slice %arg14[%c3_i32] : memref<4x!tpu.dma_semaphore, #tpu.memory_space<semaphore_mem>> -> memref<1x!tpu.dma_semaphore, #tpu.memory_space<semaphore_mem>>
      %33 = tpu.memref_squeeze %32 : memref<1x!tpu.dma_semaphore, #tpu.memory_space<semaphore_mem>> -> memref<!tpu.dma_semaphore, #tpu.memory_space<semaphore_mem>>
      tpu.enqueue_dma source(%arg7 : memref<128x128xf32, #tpu.memory_space<any>>) target(%arg13 : memref<128x128xf32, #tpu.memory_space<vmem>>) target_semaphore(%33 : memref<!tpu.dma_semaphore, #tpu.memory_space<semaphore_mem>>)
      %c0_i32_19 = arith.constant 0 : i32
      %34 = tpu.memref_slice %arg14[%c0_i32_19] : memref<4x!tpu.dma_semaphore, #tpu.memory_space<semaphore_mem>> -> memref<1x!tpu.dma_semaphore, #tpu.memory_space<semaphore_mem>>
      %35 = tpu.memref_squeeze %34 : memref<1x!tpu.dma_semaphore, #tpu.memory_space<semaphore_mem>> -> memref<!tpu.dma_semaphore, #tpu.memory_space<semaphore_mem>>
      tpu.wait_dma2 semaphore(%35 : memref<!tpu.dma_semaphore, #tpu.memory_space<semaphore_mem>>) src(%arg4 : memref<8x128xf32, #tpu.memory_space<any>>) dst(%arg10 : memref<8x128xf32, #tpu.memory_space<vmem>>)
      %c1_i32_20 = arith.constant 1 : i32
      %36 = tpu.memref_slice %arg14[%c1_i32_20] : memref<4x!tpu.dma_semaphore, #tpu.memory_space<semaphore_mem>> -> memref<1x!tpu.dma_semaphore, #tpu.memory_space<semaphore_mem>>
      %37 = tpu.memref_squeeze %36 : memref<1x!tpu.dma_semaphore, #tpu.memory_space<semaphore_mem>> -> memref<!tpu.dma_semaphore, #tpu.memory_space<semaphore_mem>>
      tpu.wait_dma2 semaphore(%37 : memref<!tpu.dma_semaphore, #tpu.memory_space<semaphore_mem>>) src(%arg5 : memref<2x128x128xf32, #tpu.memory_space<any>>) dst(%arg11 : memref<2x128x128xf32, #tpu.memory_space<vmem>>)
      %c2_i32_21 = arith.constant 2 : i32
      %38 = tpu.memref_slice %arg14[%c2_i32_21] : memref<4x!tpu.dma_semaphore, #tpu.memory_space<semaphore_mem>> -> memref<1x!tpu.dma_semaphore, #tpu.memory_space<semaphore_mem>>
      %39 = tpu.memref_squeeze %38 : memref<1x!tpu.dma_semaphore, #tpu.memory_space<semaphore_mem>> -> memref<!tpu.dma_semaphore, #tpu.memory_space<semaphore_mem>>
      tpu.wait_dma2 semaphore(%39 : memref<!tpu.dma_semaphore, #tpu.memory_space<semaphore_mem>>) src(%arg6 : memref<2x1x128xf32, #tpu.memory_space<any>>) dst(%arg12 : memref<2x1x128xf32, #tpu.memory_space<vmem>>)
      %c3_i32_22 = arith.constant 3 : i32
      %40 = tpu.memref_slice %arg14[%c3_i32_22] : memref<4x!tpu.dma_semaphore, #tpu.memory_space<semaphore_mem>> -> memref<1x!tpu.dma_semaphore, #tpu.memory_space<semaphore_mem>>
      %41 = tpu.memref_squeeze %40 : memref<1x!tpu.dma_semaphore, #tpu.memory_space<semaphore_mem>> -> memref<!tpu.dma_semaphore, #tpu.memory_space<semaphore_mem>>
      tpu.wait_dma2 semaphore(%41 : memref<!tpu.dma_semaphore, #tpu.memory_space<semaphore_mem>>) src(%arg7 : memref<128x128xf32, #tpu.memory_space<any>>) dst(%arg13 : memref<128x128xf32, #tpu.memory_space<vmem>>)
    } else {
    }
    %c0 = arith.constant 0 : index
    %c0_1 = arith.constant 0 : index
    %3 = vector.load %arg3[%c0, %c0_1] : memref<8x1024xf32, #tpu.memory_space<vmem>>, vector<8x1024xf32>
    %c0_2 = arith.constant 0 : index
    %c0_3 = arith.constant 0 : index
    %4 = vector.load %arg10[%c0_2, %c0_3] : memref<8x128xf32, #tpu.memory_space<vmem>>, vector<8x128xf32>
    %cst = arith.constant dense<0.000000e+00> : vector<1024x128xf32>
    %5 = tpu.matmul %3, %4, %cst {dimension_numbers = #tpu.dot_dimension_numbers<[0], [0], [1], [1], [0, 1, 1, 1], [], []>} : vector<8x1024xf32>, vector<8x128xf32>, vector<1024x128xf32> -> vector<1024x128xf32>
    %c0_4 = arith.constant 0 : index
    %c0_5 = arith.constant 0 : index
    %6 = vector.load %arg2[%c0_4, %c0_5] : memref<1024x128xbf16, #tpu.memory_space<vmem>>, vector<1024x128xbf16>
    %7 = arith.extf %6 : vector<1024x128xbf16> to vector<1024x128xf32>
    %8 = arith.mulf %5, %7 : vector<1024x128xf32>
    %9 = arith.truncf %8 : vector<1024x128xf32> to vector<1024x128xbf16>
    %c0_6 = arith.constant 0 : index
    %c0_7 = arith.constant 0 : index
    %10 = vector.load %arg1[%c0_6, %c0_7] : memref<1x1024xi32, #tpu.memory_space<vmem>>, vector<1x1024xi32>
    %11 = tpu.iota {dimensions = array<i32: 0>} : vector<128x1024xi32>
    %12 = vector.broadcast %10 : vector<1x1024xi32> to vector<128x1024xi32>
    %13 = arith.cmpi eq, %12, %11 : vector<128x1024xi32>
    %14 = arith.extui %13 : vector<128x1024xi1> to vector<128x1024xi32>
    %15 = arith.sitofp %14 : vector<128x1024xi32> to vector<128x1024xf32>
    %16 = arith.truncf %15 : vector<128x1024xf32> to vector<128x1024xbf16>
    %c0_8 = arith.constant 0 : index
    %c0_9 = arith.constant 0 : index
    %17 = vector.load %arg9[%c0_8, %c0_9] : memref<128x128xf32, #tpu.memory_space<vmem>>, vector<128x128xf32>
    %cst_10 = arith.constant dense<0.000000e+00> : vector<128x128xf32>
    %18 = tpu.matmul %16, %9, %cst_10 {dimension_numbers = #tpu.dot_dimension_numbers<[1], [0], [0], [1], [0, 0, 1, 1], [], []>} : vector<128x1024xbf16>, vector<1024x128xbf16>, vector<128x128xf32> -> vector<128x128xf32>
    %19 = arith.addf %17, %18 : vector<128x128xf32>
    %c0_11 = arith.constant 0 : index
    %c0_12 = arith.constant 0 : index
    %20 = vector.load %arg9[%c0_11, %c0_12] : memref<128x128xf32, #tpu.memory_space<vmem>>, vector<128x128xf32>
    tpu.vector_store %arg9[%c0_11, %c0_12], %19 {strides = array<i32>} : memref<128x128xf32, #tpu.memory_space<vmem>>, vector<128x128xf32>,
    %c1_i32 = arith.constant 1 : i32
    %21 = arith.cmpi eq, %arg0, %c1_i32 : i32
    %22 = arith.extui %21 : i1 to i32
    %c0_i32_13 = arith.constant 0 : i32
    %23 = arith.cmpi ne, %22, %c0_i32_13 : i32
    scf.if %23 {
      %c0_14 = arith.constant 0 : index
      %c0_15 = arith.constant 0 : index
      %24 = vector.load %arg9[%c0_14, %c0_15] : memref<128x128xf32, #tpu.memory_space<vmem>>, vector<128x128xf32>
      %c0_16 = arith.constant 0 : index
      %c0_17 = arith.constant 0 : index
      %c0_18 = arith.constant 0 : index
      %25 = vector.load %arg11[%c0_16, %c0_17, %c0_18] : memref<2x128x128xf32, #tpu.memory_space<vmem>>, vector<1x128x128xf32>
      %26 = vector.shape_cast %25 : vector<1x128x128xf32> to vector<128x128xf32>
      %cst_19 = arith.constant dense<0.000000e+00> : vector<128x128xf32>
      %27 = tpu.matmul %24, %26, %cst_19 {dimension_numbers = #tpu.dot_dimension_numbers<[1], [0], [0], [1], [0, 0, 1, 1], [], []>} : vector<128x128xf32>, vector<128x128xf32>, vector<128x128xf32> -> vector<128x128xf32>
      %c0_20 = arith.constant 0 : index
      %c0_21 = arith.constant 0 : index
      %c0_22 = arith.constant 0 : index
      %28 = vector.load %arg12[%c0_20, %c0_21, %c0_22] : memref<2x1x128xf32, #tpu.memory_space<vmem>>, vector<1x1x128xf32>
      %29 = vector.shape_cast %28 : vector<1x1x128xf32> to vector<1x128xf32>
      %30 = vector.broadcast %29 : vector<1x128xf32> to vector<128x128xf32>
      %31 = arith.addf %27, %30 : vector<128x128xf32>
      %32 = arith.negf %31 : vector<128x128xf32>
      %33 = math.exp %32 : vector<128x128xf32>
      %cst_23 = arith.constant 1.000000e+00 : f32
      %34 = vector.broadcast %cst_23 : f32 to vector<128x128xf32>
      %35 = arith.addf %34, %33 : vector<128x128xf32>
      %36 = arith.divf %34, %35 : vector<128x128xf32>
      %37 = arith.mulf %31, %36 : vector<128x128xf32>
      %c1 = arith.constant 1 : index
      %c0_24 = arith.constant 0 : index
      %c0_25 = arith.constant 0 : index
      %38 = vector.load %arg11[%c1, %c0_24, %c0_25] : memref<2x128x128xf32, #tpu.memory_space<vmem>>, vector<1x128x128xf32>
      %39 = vector.shape_cast %38 : vector<1x128x128xf32> to vector<128x128xf32>
      %cst_26 = arith.constant dense<0.000000e+00> : vector<128x128xf32>
      %40 = tpu.matmul %37, %39, %cst_26 {dimension_numbers = #tpu.dot_dimension_numbers<[1], [0], [0], [1], [0, 0, 1, 1], [], []>} : vector<128x128xf32>, vector<128x128xf32>, vector<128x128xf32> -> vector<128x128xf32>
      %c1_27 = arith.constant 1 : index
      %c0_28 = arith.constant 0 : index
      %c0_29 = arith.constant 0 : index
      %41 = vector.load %arg12[%c1_27, %c0_28, %c0_29] : memref<2x1x128xf32, #tpu.memory_space<vmem>>, vector<1x1x128xf32>
      %42 = vector.shape_cast %41 : vector<1x1x128xf32> to vector<1x128xf32>
      %43 = vector.broadcast %42 : vector<1x128xf32> to vector<128x128xf32>
      %44 = arith.addf %40, %43 : vector<128x128xf32>
      %45 = arith.negf %44 : vector<128x128xf32>
      %46 = math.exp %45 : vector<128x128xf32>
      %cst_30 = arith.constant 1.000000e+00 : f32
      %47 = vector.broadcast %cst_30 : f32 to vector<128x128xf32>
      %48 = arith.addf %47, %46 : vector<128x128xf32>
      %49 = arith.divf %47, %48 : vector<128x128xf32>
      %50 = arith.mulf %44, %49 : vector<128x128xf32>
      %c0_31 = arith.constant 0 : index
      %c0_32 = arith.constant 0 : index
      %51 = vector.load %arg13[%c0_31, %c0_32] : memref<128x128xf32, #tpu.memory_space<vmem>>, vector<128x128xf32>
      %cst_33 = arith.constant dense<0.000000e+00> : vector<128x128xf32>
      %52 = tpu.matmul %50, %51, %cst_33 {dimension_numbers = #tpu.dot_dimension_numbers<[1], [0], [0], [1], [0, 0, 1, 1], [], []>} : vector<128x128xf32>, vector<128x128xf32>, vector<128x128xf32> -> vector<128x128xf32>
      %c0_34 = arith.constant 0 : index
      %c0_35 = arith.constant 0 : index
      %53 = vector.load %arg8[%c0_34, %c0_35] : memref<128x128xf32, #tpu.memory_space<vmem>>, vector<128x128xf32>
      tpu.vector_store %arg8[%c0_34, %c0_35], %52 {strides = array<i32>} : memref<128x128xf32, #tpu.memory_space<vmem>>, vector<128x128xf32>,
    } else {
    }
    return
  }
  func.func @transform_0(%arg0: i32) -> (i32, i32) {
    %c0_i32 = arith.constant 0 : i32
    %c0_i32_0 = arith.constant 0 : i32
    return %c0_i32, %arg0 : i32, i32
  }
  func.func @transform_1(%arg0: i32) -> (i32, i32) {
    %c0_i32 = arith.constant 0 : i32
    %c0_i32_0 = arith.constant 0 : i32
    return %arg0, %c0_i32 : i32, i32
  }
  func.func @transform_2(%arg0: i32) -> (i32, i32) {
    %c0_i32 = arith.constant 0 : i32
    %c0_i32_0 = arith.constant 0 : i32
    return %c0_i32, %arg0 : i32, i32
  }
  func.func @transform_7(%arg0: i32) -> (i32, i32) {
    %c0_i32 = arith.constant 0 : i32
    %c0_i32_0 = arith.constant 0 : i32
    %c0_i32_1 = arith.constant 0 : i32
    return %c0_i32, %c0_i32_0 : i32, i32
  }
}

</mosaic_0001>

<llo_original>
// kernel: tpu_custom_call.1
$region0: #{tpu_custom_call.1}
  #allocation0 [shape = 'u32[]', space=smem, size = 0x4, offset = 0x4, fixed_abs, tag = 'smem constant byte address 0x4 - core index']
  #allocation1 [shape = 'u32[72,128]{1,0:T(1,128)}', space=vmem, size = 0x9000, scoped, tag = 'internal scratch']
  #allocation2 [shape = 'f32[128,128]{1,0:T(8,128)}', space=vmem, size = 0x10000, scoped, tag = 'scratch operand']
  #allocation3 [shape = 'f32[8,128]{1,0:T(8,128)}', space=vmem, size = 0x1000, scoped, tag = 'scratch operand']
  #allocation4 [shape = 'f32[2,128,128]{2,1,0:T(8,128)}', space=vmem, size = 0x20000, scoped, tag = 'scratch operand']
  #allocation5 [shape = 'f32[2,1,128]{2,1,0:T(1,128)}', space=vmem, size = 0x400, scoped, tag = 'scratch operand']
  #allocation6 [shape = 'f32[128,128]{1,0:T(8,128)}', space=vmem, size = 0x10000, scoped, tag = 'scratch operand']
  #allocation7 [shape = 's32[4]{0}', space=sflag, size = 0x10, scoped, tag = 'scratch operand']
  #allocation15 [shape = 's32[]', space=sflag, size = 0x4, offset = 0, fixed_abs, tag = 'sflag constant byte address 0x0 - dummy sync flag']
  #allocation16 [shape = 's32[]', space=sflag, size = 0x4, offset = 0, fixed_abs, tag = 'sflag constant byte address 0x0 - dummy sync flag']
  #allocation17 [shape = 'u32[]', space=smem, size = 0x4, offset = 0x44, fixed_abs, tag = 'smem constant byte address 0x44 - assertion arg 0']
  #allocation18 [shape = 'u32[]', space=smem, size = 0x4, offset = 0x48, fixed_abs, tag = 'smem constant byte address 0x48 - assertion arg 1']
  #allocation19 [shape = 's32[]', space=sflag, size = 0x4, offset = 0, fixed_abs, tag = 'sflag constant byte address 0x0 - dummy sync flag']
  #allocation20 [shape = 's32[]', space=sflag, size = 0x4, offset = 0, fixed_abs, tag = 'sflag constant byte address 0x0 - dummy sync flag']
  #allocation21 [shape = 's32[]', space=sflag, size = 0x4, offset = 0, fixed_abs, tag = 'sflag constant byte address 0x0 - dummy sync flag']
  #allocation22 [shape = 's32[]', space=sflag, size = 0x4, offset = 0, fixed_abs, tag = 'sflag constant byte address 0x0 - dummy sync flag']
  #allocation23 [shape = 's32[]', space=sflag, size = 0x4, offset = 0, fixed_abs, tag = 'sflag constant byte address 0x0 - dummy sync flag']
  %s0 = inlined_call_operand.hbm [shape: s32[1,2048], index: 0, kind: input, shape index: {}]
  %s1 = inlined_call_operand.hbm [shape: bf16[2048,128], index: 1, kind: input, shape index: {}]
  %s2 = inlined_call_operand.hbm [shape: f32[8,2048], index: 2, kind: input, shape index: {}]
  %s3 = inlined_call_operand.hbm [shape: f32[8,128], index: 3, kind: input, shape index: {}]
  %s4 = inlined_call_operand.hbm [shape: f32[2,128,128], index: 4, kind: input, shape index: {}]
  %s5 = inlined_call_operand.vmem [shape: f32[2,1,128], index: 5, kind: input, shape index: {}]
  %s6 = inlined_call_operand.hbm [shape: f32[128,128], index: 6, kind: input, shape index: {}]
  %s7 = inlined_call_operand.hbm [shape: f32[128,128], index: 7, kind: output, shape index: {}]
  %s8 = sld [smem:[#allocation0]]
  $region107: #{tpu_custom_call.1} parent=0
    _
  %s10 = ssub.s32 1, %s8
  %s11 = scalar_select 0, %s10, %s8
  $region1: #{tpu_custom_call.1} parent=0
    #allocation8 [shape = 'u8[8192]{0}', space=vmem, size = 0x2000, scoped, tag = 'input window, operand 0']
    #allocation9 [shape = 's32[2]{0}', space=sflag, size = 0x8, scoped, tag = 'scoped memory for tpu_custom_call.1']
    #allocation10 [shape = 's32[2]{0}', space=sflag, size = 0x8, scoped, tag = 'scoped memory for tpu_custom_call.1']
    #allocation11 [shape = 'u8[524288]{0}', space=vmem, size = 0x80000, scoped, tag = 'input window, operand 1']
    #allocation12 [shape = 's32[2]{0}', space=sflag, size = 0x8, scoped, tag = 'scoped memory for tpu_custom_call.1']
    #allocation13 [shape = 'u8[65536]{0}', space=vmem, size = 0x10000, scoped, tag = 'input window, operand 2']
    #allocation14 [shape = 'u8[65536]{0}', space=vmem, size = 0x10000, scoped, tag = 'output window, operand 0, single buffered']
    %12 = vsyncpa [#allocation9], 0
    %s13 = scalar_lea.sflag [#allocation9], 1
    %14 = vsyncpa %s13, 0
    %15 = vsyncpa [#allocation12], 0
    %s16 = scalar_lea.sflag [#allocation12], 1
    %17 = vsyncpa %s16, 0
    %18 = vsyncpa [#allocation10], 0
    loop: start=0, step=1, limit=4
    $region2: #{tpu_custom_call.1} parent=1 // loop_pre_header
      _
    $region3: #{tpu_custom_call.1} parent=1 // loop_header
      %s20 = sphi 0, %s24
      %p21 = scmp.ge.s32.totalorder %s20, 4
      %s30 = sphi 0, %s32
      %s33 = sphi 0, %s30
      %s34 = sphi 0, %s33
      %s50 = sphi 0, %s34
      %s56 = sphi 0, %s58
      %s59 = sphi 0, %s56
      %s60 = sphi 0, %s59
      %s76 = sphi 0, %s60
      %s82 = sphi 0, %s84
      %s85 = sphi 0, %s82
      %s86 = sphi 0, %s85
      %s102 = sphi 0, %s86
      %s106 = sphi 0, %s106
      %s108 = sphi 0, %s106
      %s109 = sphi 0, %s108
      %s123 = sphi 0, %s109
    $region4: #{tpu_custom_call.1} parent=1 // loop_header_branch
      %23 = sbr.rel (%p21) target = $region8
    $region5: #{tpu_custom_call.1} parent=1 // loop_body
      %s25 = ssub.s32 %s20, 1
      %s26 = ssub.s32 %s20, 2
      %s27 = sadd.s32 %s20, 1
      %s28 = ssub.s32 %s20, %s27
      %p29 = scmp.eq.s32.totalorder %s28, 0
      %s31 = sadd.s32 %s30, 1
      %s32 = scalar_select %p29, %s30, %s31
      %p35 = pneg %p29
      %p36 = scmp.eq.s32.totalorder %s20, 1
      %p37 = por %p35, %p36
      %p38 = scmp.ne.s32.totalorder %s30, %s33
      %p39 = scmp.eq.s32.totalorder %s20, 0
      %p40 = por %p38, %p39
      %p41 = scmp.ne.s32.totalorder %s30, %s33
      %p42 = scmp.eq.s32.totalorder %s25, 1
      %p43 = por %p41, %p42
      %p44 = scmp.ne.s32.totalorder %s33, %s34
      %p45 = scmp.eq.s32.totalorder %s25, 0
      %p46 = por %p44, %p45
      %p47 = scmp.ne.s32.totalorder %s33, %s34
      %p48 = scmp.eq.s32.totalorder %s26, 1
      %p49 = por %p47, %p48
      %p51 = scmp.ne.s32.totalorder %s34, %s50
      %p52 = scmp.eq.s32.totalorder %s26, 0
      %p53 = por %p51, %p52
      %s54 = ssub.s32 %s20, %s27
      %p55 = scmp.eq.s32.totalorder %s54, 0
      %s57 = sadd.s32 %s56, 1
      %s58 = scalar_select %p55, %s56, %s57
      %p61 = pneg %p55
      %p62 = scmp.eq.s32.totalorder %s20, 1
      %p63 = por %p61, %p62
      %p64 = scmp.ne.s32.totalorder %s56, %s59
      %p65 = scmp.eq.s32.totalorder %s20, 0
      %p66 = por %p64, %p65
      %p67 = scmp.ne.s32.totalorder %s56, %s59
      %p68 = scmp.eq.s32.totalorder %s25, 1
      %p69 = por %p67, %p68
      %p70 = scmp.ne.s32.totalorder %s59, %s60
      %p71 = scmp.eq.s32.totalorder %s25, 0
      %p72 = por %p70, %p71
      %p73 = scmp.ne.s32.totalorder %s59, %s60
      %p74 = scmp.eq.s32.totalorder %s26, 1
      %p75 = por %p73, %p74
      %p77 = scmp.ne.s32.totalorder %s60, %s76
      %p78 = scmp.eq.s32.totalorder %s26, 0
      %p79 = por %p77, %p78
      %s80 = ssub.s32 %s20, %s27
      %p81 = scmp.eq.s32.totalorder %s80, 0
      %s83 = sadd.s32 %s82, 1
      %s84 = scalar_select %p81, %s82, %s83
      %p87 = pneg %p81
      %p88 = scmp.eq.s32.totalorder %s20, 1
      %p89 = por %p87, %p88
      %p90 = scmp.ne.s32.totalorder %s82, %s85
      %p91 = scmp.eq.s32.totalorder %s20, 0
      %p92 = por %p90, %p91
      %p93 = scmp.ne.s32.totalorder %s82, %s85
      %p94 = scmp.eq.s32.totalorder %s25, 1
      %p95 = por %p93, %p94
      %p96 = scmp.ne.s32.totalorder %s85, %s86
      %p97 = scmp.eq.s32.totalorder %s25, 0
      %p98 = por %p96, %p97
      %p99 = scmp.ne.s32.totalorder %s85, %s86
      %p100 = scmp.eq.s32.totalorder %s26, 1
      %p101 = por %p99, %p100
      %p103 = scmp.ne.s32.totalorder %s86, %s102
      %p104 = scmp.eq.s32.totalorder %s26, 0
      %p105 = por %p103, %p104
      %s107 = sadd.s32 %s106, 1
      %p110 = scmp.eq.s32.totalorder %s20, 1
      %p111 = scmp.ne.s32.totalorder %s106, %s108
      %p112 = scmp.eq.s32.totalorder %s20, 0
      %p113 = por %p111, %p112
      %p114 = scmp.ne.s32.totalorder %s106, %s108
      %p115 = scmp.eq.s32.totalorder %s25, 1
      %p116 = por %p114, %p115
      %p117 = scmp.ne.s32.totalorder %s108, %s109
      %p118 = scmp.eq.s32.totalorder %s25, 0
      %p119 = por %p117, %p118
      %p120 = scmp.ne.s32.totalorder %s108, %s109
      %p121 = scmp.eq.s32.totalorder %s26, 1
      %p122 = por %p120, %p121
      %p124 = scmp.ne.s32.totalorder %s109, %s123
      %p125 = scmp.eq.s32.totalorder %s26, 0
      %p126 = por %p124, %p125
      %p127 = scmp.le.s32.totalorder 1, %s20
      %p128 = scmp.lt.s32.totalorder %s20, 3
      %p129 = pnand %p127, %p128
      %p130 = pneg %p129
      // Predicated region
      $region9: #{tpu_custom_call.1} parent=5 // pred_check
        _
      $region10: #{tpu_custom_call.1} parent=5 // pred_check_branch
        %132 = sbr.rel (%p129) target = $region12
      $region11: #{tpu_custom_call.1} parent=5 // pred_region
        %s133 = ssub.s32 %s20, 1
      $region12: #{tpu_custom_call.1} parent=5 // pred_fallthru
        _
      %p134 = scmp.lt.s32.totalorder %s20, 2
      // Predicated region
      $region13: #{tpu_custom_call.1} parent=5 // pred_check
        %p135 = pneg %p134
      $region14: #{tpu_custom_call.1} parent=5 // pred_check_branch
        %137 = sbr.rel (%p135) target = $region16
      $region15: #{tpu_custom_call.1} parent=5 // pred_region
        // Predicated region
        $region17: #{tpu_custom_call.1} parent=15 // pred_check
          %p138 = pneg %p40
        $region18: #{tpu_custom_call.1} parent=15 // pred_check_branch
          %140 = sbr.rel (%p138) target = $region20
        $region19: #{tpu_custom_call.1} parent=15 // pred_region
          %s141 = sand.u32 %s30, 1
          %s142 = scalar_lea.sflag [#allocation9], %s141
          %s143 = sand.u32 %s30, 1
          %s144 = smul.addr %s143, 8
          %s145 = scalar_lea.vmem [#allocation8], %s144
          %s146 = smul.u32 8, %s20
          %148 = vsyncadd %s142, 0
          %s149 = scalar_lea.hbm %s0, %s146
          %s151 = sshll.u32 %s149, 4
          %s152 = int_to_ptr.hbm [resolvable:$true] %s151
          %s153 = sshll.u32 %s145, 4
          %s154 = int_to_ptr.vmem [resolvable:$true] %s153
          %156 = dma.hbm_to_vmem [thread:$0]  %s152, 128, %s154, %s142
        $region20: #{tpu_custom_call.1} parent=15 // pred_fallthru
          _
        // Predicated region
        $region21: #{tpu_custom_call.1} parent=15 // pred_check
          %p157 = pneg %p66
        $region22: #{tpu_custom_call.1} parent=15 // pred_check_branch
          %159 = sbr.rel (%p157) target = $region24
        $region23: #{tpu_custom_call.1} parent=15 // pred_region
          %s160 = sand.u32 %s20, 1
          %s161 = scalar_lea.sflag [#allocation12], %s160
          %s162 = sand.u32 %s56, 1
          %s163 = smul.addr %s162, 512
          %s164 = scalar_lea.vmem [#allocation11], %s163
          %s165 = smul.u32 128, %s20
          %167 = vsyncadd %s161, 0
          %s168 = smul.addr %s165, 4
          %s169 = scalar_lea.hbm %s1, %s168
          %s170 = sshll.u32 %s169, 4
          %s171 = int_to_ptr.hbm [resolvable:$true] %s170
          %s172 = sshll.u32 %s164, 4
          %s173 = int_to_ptr.vmem [resolvable:$true] %s172
          %178 = dma.hbm_to_vmem [thread:$0]  %s171, 8192, %s173, %s161, 64, 64, 4
        $region24: #{tpu_custom_call.1} parent=15 // pred_fallthru
          _
        // Predicated region
        $region25: #{tpu_custom_call.1} parent=15 // pred_check
          %p179 = pneg %p92
        $region26: #{tpu_custom_call.1} parent=15 // pred_check_branch
          %181 = sbr.rel (%p179) target = $region28
        $region27: #{tpu_custom_call.1} parent=15 // pred_region
          %s182 = sand.u32 %s20, 1
          %s183 = scalar_lea.sflag [#allocation12], %s182
          %s184 = sand.u32 %s82, 1
          %s185 = smul.addr %s184, 64
          %s186 = scalar_lea.vmem [#allocation13], %s185
          %s187 = smul.u32 8, %s20
          %189 = vsyncadd %s183, 0
          %s190 = smul.addr %s187, 8
          %s191 = scalar_lea.hbm %s2, %s190
          %s193 = sshll.u32 %s191, 4
          %s194 = int_to_ptr.hbm [resolvable:$true] %s193
          %s195 = sshll.u32 %s186, 4
          %s196 = int_to_ptr.vmem [resolvable:$true] %s195
          %198 = dma.hbm_to_vmem [thread:$0]  %s194, 1024, %s196, %s183
        $region28: #{tpu_custom_call.1} parent=15 // pred_fallthru
          _
      $region16: #{tpu_custom_call.1} parent=5 // pred_fallthru
        _
      %p199 = scmp.le.s32.totalorder 1, %s20
      %p200 = scmp.lt.s32.totalorder %s20, 3
      %p201 = pnand %p199, %p200
      %p202 = pneg %p201
      // Predicated region
      $region29: #{tpu_custom_call.1} parent=5 // pred_check
        _
      $region30: #{tpu_custom_call.1} parent=5 // pred_check_branch
        %204 = sbr.rel (%p201) target = $region32
      $region31: #{tpu_custom_call.1} parent=5 // pred_region
        %s205 = ssub.s32 %s20, 1
        %s206 = sand.u32 %s33, 1
        %s207 = scalar_lea.sflag [#allocation9], %s206
        %s208 = sand.u32 %s33, 1
        %s209 = smul.addr %s208, 8
        %s210 = scalar_lea.vmem [#allocation8], %s209
        // Predicated region
        $region33: #{tpu_custom_call.1} parent=31 // pred_check
          %p211 = pneg %p46
        $region34: #{tpu_custom_call.1} parent=31 // pred_check_branch
          %213 = sbr.rel (%p211) target = $region36
        $region35: #{tpu_custom_call.1} parent=31 // pred_region
          %215 = dma.done %s207, 128
        $region36: #{tpu_custom_call.1} parent=31 // pred_fallthru
          _
        %s216 = sand.u32 %s25, 1
        %s217 = scalar_lea.sflag [#allocation12], %s216
        %s218 = sand.u32 %s59, 1
        %s219 = smul.addr %s218, 512
        %s220 = scalar_lea.vmem [#allocation11], %s219
        // Predicated region
        $region37: #{tpu_custom_call.1} parent=31 // pred_check
          %p221 = pneg %p72
        $region38: #{tpu_custom_call.1} parent=31 // pred_check_branch
          %223 = sbr.rel (%p221) target = $region40
        $region39: #{tpu_custom_call.1} parent=31 // pred_region
          %225 = dma.done %s217, 8192
        $region40: #{tpu_custom_call.1} parent=31 // pred_fallthru
          _
        %s226 = sand.u32 %s25, 1
        %s227 = scalar_lea.sflag [#allocation12], %s226
        %s228 = sand.u32 %s85, 1
        %s229 = smul.addr %s228, 64
        %s230 = scalar_lea.vmem [#allocation13], %s229
        // Predicated region
        $region41: #{tpu_custom_call.1} parent=31 // pred_check
          %p231 = pneg %p98
        $region42: #{tpu_custom_call.1} parent=31 // pred_check_branch
          %233 = sbr.rel (%p231) target = $region44
        $region43: #{tpu_custom_call.1} parent=31 // pred_region
          %235 = dma.done %s227, 1024
        $region44: #{tpu_custom_call.1} parent=31 // pred_fallthru
          _
        %s236 = sand.u32 %s33, 1
        %s237 = scalar_lea.sflag [#allocation9], %s236
        %s238 = sand.u32 %s33, 1
        %s239 = smul.addr %s238, 8
        %s240 = scalar_lea.vmem [#allocation8], %s239
        %p241 = pneg %p46
        %p242 = pneg %p43
        %s243 = sand.u32 %s25, 1
        %s244 = scalar_lea.sflag [#allocation12], %s243
        %s245 = sand.u32 %s59, 1
        %s246 = smul.addr %s245, 512
        %s247 = scalar_lea.vmem [#allocation11], %s246
        %p248 = pneg %p72
        %p249 = pneg %p69
        %s250 = sand.u32 %s25, 1
        %s251 = scalar_lea.sflag [#allocation12], %s250
        %s252 = sand.u32 %s85, 1
        %s253 = smul.addr %s252, 64
        %s254 = scalar_lea.vmem [#allocation13], %s253
        %p255 = pneg %p98
        %p256 = pneg %p95
        %p257 = pneg %p119
        %p258 = pneg %p116
        %s259 = smul.u32 8, %s25
        %s260 = smul.u32 128, %s25
        %s261 = smul.u32 8, %s25
        %p262 = scmp.eq.s32.totalorder %s25, 0
        // Predicated region
        $region45: #{tpu_custom_call.1} parent=31 // pred_check
          %p263 = pneg %p262
        $region46: #{tpu_custom_call.1} parent=31 // pred_check_branch
          %265 = sbr.rel (%p263) target = $region48
        $region47: #{tpu_custom_call.1} parent=31 // pred_region
          %266 = vst [vmem:[#allocation2] sm:$0xff] 0.0
          %267 = vst [vmem:[#allocation2 + $0x8] sm:$0xff] 0.0
          %268 = vst [vmem:[#allocation2 + $0x10] sm:$0xff] 0.0
          %269 = vst [vmem:[#allocation2 + $0x18] sm:$0xff] 0.0
          %270 = vst [vmem:[#allocation2 + $0x20] sm:$0xff] 0.0
          %271 = vst [vmem:[#allocation2 + $0x28] sm:$0xff] 0.0
          %272 = vst [vmem:[#allocation2 + $0x30] sm:$0xff] 0.0
          %273 = vst [vmem:[#allocation2 + $0x38] sm:$0xff] 0.0
          %274 = vst [vmem:[#allocation2 + $0x40] sm:$0xff] 0.0
          %275 = vst [vmem:[#allocation2 + $0x48] sm:$0xff] 0.0
          %276 = vst [vmem:[#allocation2 + $0x50] sm:$0xff] 0.0
          %277 = vst [vmem:[#allocation2 + $0x58] sm:$0xff] 0.0
          %278 = vst [vmem:[#allocation2 + $0x60] sm:$0xff] 0.0
          %279 = vst [vmem:[#allocation2 + $0x68] sm:$0xff] 0.0
          %280 = vst [vmem:[#allocation2 + $0x70] sm:$0xff] 0.0
          %281 = vst [vmem:[#allocation2 + $0x78] sm:$0xff] 0.0
          // Predicated region
          $region49: #{tpu_custom_call.1} parent=47 // pred_check
            _
          $region50: #{tpu_custom_call.1} parent=47 // pred_check_branch
            %283 = sbr.rel target = $region52
          $region51: #{tpu_custom_call.1} parent=47 // pred_region
            %284 = sst [smem:[#allocation17]] [#allocation16]
            %285 = sst [smem:[#allocation18]] [#allocation15]
          $region52: #{tpu_custom_call.1} parent=47 // pred_fallthru
            _
          %287 = shalt.err (0)
          %s289 = sshll.u32 %s3, 4
          %s290 = int_to_ptr.hbm [resolvable:$true] %s289
          %s291 = sshll.u32 [#allocation3], 4
          %s292 = int_to_ptr.vmem [resolvable:$true] %s291
          %294 = dma.hbm_to_vmem [thread:$0]  %s290, 128, %s292, [#allocation7]
          %s295 = scalar_lea.sflag [#allocation7], 1
          // Predicated region
          $region53: #{tpu_custom_call.1} parent=47 // pred_check
            _
          $region54: #{tpu_custom_call.1} parent=47 // pred_check_branch
            %297 = sbr.rel target = $region56
          $region55: #{tpu_custom_call.1} parent=47 // pred_region
            %298 = sst [smem:[#allocation17]] [#allocation20]
            %299 = sst [smem:[#allocation18]] [#allocation19]
          $region56: #{tpu_custom_call.1} parent=47 // pred_fallthru
            _
          %301 = shalt.err (0)
          %s303 = sshll.u32 %s4, 4
          %s304 = int_to_ptr.hbm [resolvable:$true] %s303
          %s305 = sshll.u32 [#allocation4], 4
          %s306 = int_to_ptr.vmem [resolvable:$true] %s305
          %308 = dma.hbm_to_vmem [thread:$0]  %s304, 4096, %s306, %s295
          %s309 = scalar_lea.sflag [#allocation7], 2
          // Predicated region
          $region57: #{tpu_custom_call.1} parent=47 // pred_check
            _
          $region58: #{tpu_custom_call.1} parent=47 // pred_check_branch
            %311 = sbr.rel target = $region60
          $region59: #{tpu_custom_call.1} parent=47 // pred_region
            // Predicated region
            $region72: #{tpu_custom_call.1} parent=59 // pred_check
              _
            $region73: #{tpu_custom_call.1} parent=59 // pred_check_branch
              %327 = sbr.rel (0) target = $region75
            $region74: #{tpu_custom_call.1} parent=59 // pred_region
              %s329 = ssub.s32 4, 1
              loop: start=0, step=1, limit=1
              $region76: #{tpu_custom_call.1} parent=74 // loop_pre_header
                _
              $region77: #{tpu_custom_call.1} parent=74 // loop_header
                %s331 = sphi 0, %s335
                %p332 = scmp.ge.s32.totalorder %s331, 1
                %s336 = sphi %s5, %s5
                %s337 = sphi [#allocation5], [#allocation5]
              $region78: #{tpu_custom_call.1} parent=74 // loop_header_branch
                %334 = sbr.rel (%p332) target = $region82
              $region79: #{tpu_custom_call.1} parent=74 // loop_body
                %v338 = vld [vmem:[%s336] sm:%s329]
                %339 = vst [vmem:[%s337] sm:%s329] %v338
              $region80: #{tpu_custom_call.1} parent=74 // loop_footer
                %s335 = sadd.s32 1, %s331
              $region81: #{tpu_custom_call.1} parent=74 // loop_footer_branch
                %330 = sbr.rel target = $region77
              $region82: #{tpu_custom_call.1} parent=74 // loop_exit
                _
            $region75: #{tpu_custom_call.1} parent=59 // pred_fallthru
              _
          $region60: #{tpu_custom_call.1} parent=47 // pred_fallthru
            _
          // Predicated region
          $region61: #{tpu_custom_call.1} parent=47 // pred_check
            _
          $region62: #{tpu_custom_call.1} parent=47 // pred_check_branch
            %313 = sbr.rel (0) target = $region64
          $region63: #{tpu_custom_call.1} parent=47 // pred_region
            %s315 = ssub.s32 4, 1
            loop: start=0, step=1, limit=1
            $region65: #{tpu_custom_call.1} parent=63 // loop_pre_header
              _
            $region66: #{tpu_custom_call.1} parent=63 // loop_header
              %s317 = sphi 0, %s321
              %p318 = scmp.ge.s32.totalorder %s317, 1
              %s322 = sphi %s5, %s5
              %s323 = sphi [#allocation5], [#allocation5]
            $region67: #{tpu_custom_call.1} parent=63 // loop_header_branch
              %320 = sbr.rel (%p318) target = $region71
            $region68: #{tpu_custom_call.1} parent=63 // loop_body
              %v324 = vld [vmem:[%s322] sm:%s315]
              %325 = vst [vmem:[%s323] sm:%s315] %v324
            $region69: #{tpu_custom_call.1} parent=63 // loop_footer
              %s321 = sadd.s32 1, %s317
            $region70: #{tpu_custom_call.1} parent=63 // loop_footer_branch
              %316 = sbr.rel target = $region66
            $region71: #{tpu_custom_call.1} parent=63 // loop_exit
              _
          $region64: #{tpu_custom_call.1} parent=47 // pred_fallthru
            _
          // Predicated region
          $region83: #{tpu_custom_call.1} parent=47 // pred_check
            _
          $region84: #{tpu_custom_call.1} parent=47 // pred_check_branch
            %342 = sbr.rel (0) target = $region86
          $region85: #{tpu_custom_call.1} parent=47 // pred_region
            %343 = vsyncadd %s309, 32
          $region86: #{tpu_custom_call.1} parent=47 // pred_fallthru
            _
          %s344 = scalar_lea.sflag [#allocation7], 3
          // Predicated region
          $region87: #{tpu_custom_call.1} parent=47 // pred_check
            _
          $region88: #{tpu_custom_call.1} parent=47 // pred_check_branch
            %346 = sbr.rel target = $region90
          $region89: #{tpu_custom_call.1} parent=47 // pred_region
            %347 = sst [smem:[#allocation17]] [#allocation23]
            %348 = sst [smem:[#allocation18]] [#allocation22]
          $region90: #{tpu_custom_call.1} parent=47 // pred_fallthru
            _
          %350 = shalt.err (0)
          %s352 = sshll.u32 %s6, 4
          %s353 = int_to_ptr.hbm [resolvable:$true] %s352
          %s354 = sshll.u32 [#allocation6], 4
          %s355 = int_to_ptr.vmem [resolvable:$true] %s354
          %357 = dma.hbm_to_vmem [thread:$0]  %s353, 2048, %s355, %s344
          %s358 = smul.u32 8, 1
          %s359 = sshll.u32 %s358, 4
          %360 = dma.done [#allocation7], %s359
          %s361 = smul.u32 2, 128
          %s362 = smul.u32 %s361, 1
          %s363 = sshll.u32 %s362, 4
          %364 = dma.done %s295, %s363
          %s365 = smul.u32 2, 1
          %s366 = smul.u32 %s365, 1
          %s367 = sshll.u32 %s366, 4
          %368 = dma.done %s309, %s367
          %s369 = smul.u32 128, 1
          %s370 = sshll.u32 %s369, 4
          %371 = dma.done %s344, %s370
        $region48: #{tpu_custom_call.1} parent=31 // pred_fallthru
          _
        %v372 = vld [vmem:[%s230] sm:$0xff]
        %v373 = vld [vmem:[%s230 + $0x8] sm:$0xff]
        %v374 = vld [vmem:[%s230 + $0x10] sm:$0xff]
        %v375 = vld [vmem:[%s230 + $0x18] sm:$0xff]
        %v376 = vld [vmem:[%s230 + $0x20] sm:$0xff]
        %v377 = vld [vmem:[%s230 + $0x28] sm:$0xff]
        %v378 = vld [vmem:[%s230 + $0x30] sm:$0xff]
        %v379 = vld [vmem:[%s230 + $0x38] sm:$0xff]
        %v380 = vld [vmem:[#allocation3] sm:$0xff]
        %381 = vxpose.xlu0.b32.start [1/16] %v372, 128
        %382 = vxpose.xlu0.b32.cont [2/16] 0.0, 128
        %383 = vxpose.xlu0.b32.cont [3/16] 0.0, 128
        %384 = vxpose.xlu0.b32.cont [4/16] 0.0, 128
        %385 = vxpose.xlu0.b32.cont [5/16] 0.0, 128
        %386 = vxpose.xlu0.b32.cont [6/16] 0.0, 128
        %387 = vxpose.xlu0.b32.cont [7/16] 0.0, 128
        %388 = vxpose.xlu0.b32.cont [8/16] 0.0, 128
        %389 = vxpose.xlu0.b32.cont [9/16] 0.0, 128
        %390 = vxpose.xlu0.b32.cont [10/16] 0.0, 128
        %391 = vxpose.xlu0.b32.cont [11/16] 0.0, 128
        %392 = vxpose.xlu0.b32.cont [12/16] 0.0, 128
        %393 = vxpose.xlu0.b32.cont [13/16] 0.0, 128
        %394 = vxpose.xlu0.b32.cont [14/16] 0.0, 128
        %395 = vxpose.xlu0.b32.cont [15/16] 0.0, 128
        %396 = vxpose.xlu0.b32.end [16/16] 0.0, 128
        %v397 = vpop.trf.xlu0
        %v398 = vpop.trf.xlu0
        %v399 = vpop.trf.xlu0
        %v400 = vpop.trf.xlu0
        %v401 = vpop.trf.xlu0
        %v402 = vpop.trf.xlu0
        %v403 = vpop.trf.xlu0
        %v404 = vpop.trf.xlu0
        %v405 = vpop.trf.xlu0
        %v406 = vpop.trf.xlu0
        %v407 = vpop.trf.xlu0
        %v408 = vpop.trf.xlu0
        %v409 = vpop.trf.xlu0
        %v410 = vpop.trf.xlu0
        %v411 = vpop.trf.xlu0
        %v412 = vpop.trf.xlu0
        %413 = vxpose.xlu0.b32.start [1/16] %v373, 128
        %414 = vxpose.xlu0.b32.cont [2/16] 0.0, 128
        %415 = vxpose.xlu0.b32.cont [3/16] 0.0, 128
        %416 = vxpose.xlu0.b32.cont [4/16] 0.0, 128
        %417 = vxpose.xlu0.b32.cont [5/16] 0.0, 128
        %418 = vxpose.xlu0.b32.cont [6/16] 0.0, 128
        %419 = vxpose.xlu0.b32.cont [7/16] 0.0, 128
        %420 = vxpose.xlu0.b32.cont [8/16] 0.0, 128
        %421 = vxpose.xlu0.b32.cont [9/16] 0.0, 128
        %422 = vxpose.xlu0.b32.cont [10/16] 0.0, 128
        %423 = vxpose.xlu0.b32.cont [11/16] 0.0, 128
        %424 = vxpose.xlu0.b32.cont [12/16] 0.0, 128
        %425 = vxpose.xlu0.b32.cont [13/16] 0.0, 128
        %426 = vxpose.xlu0.b32.cont [14/16] 0.0, 128
        %427 = vxpose.xlu0.b32.cont [15/16] 0.0, 128
        %428 = vxpose.xlu0.b32.end [16/16] 0.0, 128
        %v429 = vpop.trf.xlu0
        %v430 = vpop.trf.xlu0
        %v431 = vpop.trf.xlu0
        %v432 = vpop.trf.xlu0
        %v433 = vpop.trf.xlu0
        %v434 = vpop.trf.xlu0
        %v435 = vpop.trf.xlu0
        %v436 = vpop.trf.xlu0
        %v437 = vpop.trf.xlu0
        %v438 = vpop.trf.xlu0
        %v439 = vpop.trf.xlu0
        %v440 = vpop.trf.xlu0
        %v441 = vpop.trf.xlu0
        %v442 = vpop.trf.xlu0
        %v443 = vpop.trf.xlu0
        %v444 = vpop.trf.xlu0
        %445 = vxpose.xlu0.b32.start [1/16] %v374, 128
        %446 = vxpose.xlu0.b32.cont [2/16] 0.0, 128
        %447 = vxpose.xlu0.b32.cont [3/16] 0.0, 128
        %448 = vxpose.xlu0.b32.cont [4/16] 0.0, 128
        %449 = vxpose.xlu0.b32.cont [5/16] 0.0, 128
        %450 = vxpose.xlu0.b32.cont [6/16] 0.0, 128
        %451 = vxpose.xlu0.b32.cont [7/16] 0.0, 128
        %452 = vxpose.xlu0.b32.cont [8/16] 0.0, 128
        %453 = vxpose.xlu0.b32.cont [9/16] 0.0, 128
        %454 = vxpose.xlu0.b32.cont [10/16] 0.0, 128
        %455 = vxpose.xlu0.b32.cont [11/16] 0.0, 128
        %456 = vxpose.xlu0.b32.cont [12/16] 0.0, 128
        %457 = vxpose.xlu0.b32.cont [13/16] 0.0, 128
        %458 = vxpose.xlu0.b32.cont [14/16] 0.0, 128
        %459 = vxpose.xlu0.b32.cont [15/16] 0.0, 128
        %460 = vxpose.xlu0.b32.end [16/16] 0.0, 128
        %v461 = vpop.trf.xlu0
        %v462 = vpop.trf.xlu0
        %v463 = vpop.trf.xlu0
        %v464 = vpop.trf.xlu0
        %v465 = vpop.trf.xlu0
        %v466 = vpop.trf.xlu0
        %v467 = vpop.trf.xlu0
        %v468 = vpop.trf.xlu0
        %v469 = vpop.trf.xlu0
        %v470 = vpop.trf.xlu0
        %v471 = vpop.trf.xlu0
        %v472 = vpop.trf.xlu0
        %v473 = vpop.trf.xlu0
        %v474 = vpop.trf.xlu0
        %v475 = vpop.trf.xlu0
        %v476 = vpop.trf.xlu0
        %477 = vxpose.xlu0.b32.start [1/16] %v375, 128
        %478 = vxpose.xlu0.b32.cont [2/16] 0.0, 128
        %479 = vxpose.xlu0.b32.cont [3/16] 0.0, 128
        %480 = vxpose.xlu0.b32.cont [4/16] 0.0, 128
        %481 = vxpose.xlu0.b32.cont [5/16] 0.0, 128
        %482 = vxpose.xlu0.b32.cont [6/16] 0.0, 128
        %483 = vxpose.xlu0.b32.cont [7/16] 0.0, 128
        %484 = vxpose.xlu0.b32.cont [8/16] 0.0, 128
        %485 = vxpose.xlu0.b32.cont [9/16] 0.0, 128
        %486 = vxpose.xlu0.b32.cont [10/16] 0.0, 128
        %487 = vxpose.xlu0.b32.cont [11/16] 0.0, 128
        %488 = vxpose.xlu0.b32.cont [12/16] 0.0, 128
        %489 = vxpose.xlu0.b32.cont [13/16] 0.0, 128
        %490 = vxpose.xlu0.b32.cont [14/16] 0.0, 128
        %491 = vxpose.xlu0.b32.cont [15/16] 0.0, 128
        %492 = vxpose.xlu0.b32.end [16/16] 0.0, 128
        %v493 = vpop.trf.xlu0
        %v494 = vpop.trf.xlu0
        %v495 = vpop.trf.xlu0
        %v496 = vpop.trf.xlu0
        %v497 = vpop.trf.xlu0
        %v498 = vpop.trf.xlu0
        %v499 = vpop.trf.xlu0
        %v500 = vpop.trf.xlu0
        %v501 = vpop.trf.xlu0
        %v502 = vpop.trf.xlu0
        %v503 = vpop.trf.xlu0
        %v504 = vpop.trf.xlu0
        %v505 = vpop.trf.xlu0
        %v506 = vpop.trf.xlu0
        %v507 = vpop.trf.xlu0
        %v508 = vpop.trf.xlu0
        %509 = vxpose.xlu0.b32.start [1/16] %v376, 128
        %510 = vxpose.xlu0.b32.cont [2/16] 0.0, 128
        %511 = vxpose.xlu0.b32.cont [3/16] 0.0, 128
        %512 = vxpose.xlu0.b32.cont [4/16] 0.0, 128
        %513 = vxpose.xlu0.b32.cont [5/16] 0.0, 128
        %514 = vxpose.xlu0.b32.cont [6/16] 0.0, 128
        %515 = vxpose.xlu0.b32.cont [7/16] 0.0, 128
        %516 = vxpose.xlu0.b32.cont [8/16] 0.0, 128
        %517 = vxpose.xlu0.b32.cont [9/16] 0.0, 128
        %518 = vxpose.xlu0.b32.cont [10/16] 0.0, 128
        %519 = vxpose.xlu0.b32.cont [11/16] 0.0, 128
        %520 = vxpose.xlu0.b32.cont [12/16] 0.0, 128
        %521 = vxpose.xlu0.b32.cont [13/16] 0.0, 128
        %522 = vxpose.xlu0.b32.cont [14/16] 0.0, 128
        %523 = vxpose.xlu0.b32.cont [15/16] 0.0, 128
        %524 = vxpose.xlu0.b32.end [16/16] 0.0, 128
        %v525 = vpop.trf.xlu0
        %v526 = vpop.trf.xlu0
        %v527 = vpop.trf.xlu0
        %v528 = vpop.trf.xlu0
        %v529 = vpop.trf.xlu0
        %v530 = vpop.trf.xlu0
        %v531 = vpop.trf.xlu0
        %v532 = vpop.trf.xlu0
        %v533 = vpop.trf.xlu0
        %v534 = vpop.trf.xlu0
        %v535 = vpop.trf.xlu0
        %v536 = vpop.trf.xlu0
        %v537 = vpop.trf.xlu0
        %v538 = vpop.trf.xlu0
        %v539 = vpop.trf.xlu0
        %v540 = vpop.trf.xlu0
        %541 = vxpose.xlu0.b32.start [1/16] %v377, 128
        %542 = vxpose.xlu0.b32.cont [2/16] 0.0, 128
        %543 = vxpose.xlu0.b32.cont [3/16] 0.0, 128
        %544 = vxpose.xlu0.b32.cont [4/16] 0.0, 128
        %545 = vxpose.xlu0.b32.cont [5/16] 0.0, 128
        %546 = vxpose.xlu0.b32.cont [6/16] 0.0, 128
        %547 = vxpose.xlu0.b32.cont [7/16] 0.0, 128
        %548 = vxpose.xlu0.b32.cont [8/16] 0.0, 128
        %549 = vxpose.xlu0.b32.cont [9/16] 0.0, 128
        %550 = vxpose.xlu0.b32.cont [10/16] 0.0, 128
        %551 = vxpose.xlu0.b32.cont [11/16] 0.0, 128
        %552 = vxpose.xlu0.b32.cont [12/16] 0.0, 128
        %553 = vxpose.xlu0.b32.cont [13/16] 0.0, 128
        %554 = vxpose.xlu0.b32.cont [14/16] 0.0, 128
        %555 = vxpose.xlu0.b32.cont [15/16] 0.0, 128
        %556 = vxpose.xlu0.b32.end [16/16] 0.0, 128
        %v557 = vpop.trf.xlu0
        %v558 = vpop.trf.xlu0
        %v559 = vpop.trf.xlu0
        %v560 = vpop.trf.xlu0
        %v561 = vpop.trf.xlu0
        %v562 = vpop.trf.xlu0
        %v563 = vpop.trf.xlu0
        %v564 = vpop.trf.xlu0
        %v565 = vpop.trf.xlu0
        %v566 = vpop.trf.xlu0
        %v567 = vpop.trf.xlu0
        %v568 = vpop.trf.xlu0
        %v569 = vpop.trf.xlu0
        %v570 = vpop.trf.xlu0
        %v571 = vpop.trf.xlu0
        %v572 = vpop.trf.xlu0
        %573 = vxpose.xlu0.b32.start [1/16] %v378, 128
        %574 = vxpose.xlu0.b32.cont [2/16] 0.0, 128
        %575 = vxpose.xlu0.b32.cont [3/16] 0.0, 128
        %576 = vxpose.xlu0.b32.cont [4/16] 0.0, 128
        %577 = vxpose.xlu0.b32.cont [5/16] 0.0, 128
        %578 = vxpose.xlu0.b32.cont [6/16] 0.0, 128
        %579 = vxpose.xlu0.b32.cont [7/16] 0.0, 128
        %580 = vxpose.xlu0.b32.cont [8/16] 0.0, 128
        %581 = vxpose.xlu0.b32.cont [9/16] 0.0, 128
        %582 = vxpose.xlu0.b32.cont [10/16] 0.0, 128
        %583 = vxpose.xlu0.b32.cont [11/16] 0.0, 128
        %584 = vxpose.xlu0.b32.cont [12/16] 0.0, 128
        %585 = vxpose.xlu0.b32.cont [13/16] 0.0, 128
        %586 = vxpose.xlu0.b32.cont [14/16] 0.0, 128
        %587 = vxpose.xlu0.b32.cont [15/16] 0.0, 128
        %588 = vxpose.xlu0.b32.end [16/16] 0.0, 128
        %v589 = vpop.trf.xlu0
        %v590 = vpop.trf.xlu0
        %v591 = vpop.trf.xlu0
        %v592 = vpop.trf.xlu0
        %v593 = vpop.trf.xlu0
        %v594 = vpop.trf.xlu0
        %v595 = vpop.trf.xlu0
        %v596 = vpop.trf.xlu0
        %v597 = vpop.trf.xlu0
        %v598 = vpop.trf.xlu0
        %v599 = vpop.trf.xlu0
        %v600 = vpop.trf.xlu0
        %v601 = vpop.trf.xlu0
        %v602 = vpop.trf.xlu0
        %v603 = vpop.trf.xlu0
        %v604 = vpop.trf.xlu0
        %605 = vxpose.xlu0.b32.start [1/16] %v379, 128
        %606 = vxpose.xlu0.b32.cont [2/16] 0.0, 128
        %607 = vxpose.xlu0.b32.cont [3/16] 0.0, 128
        %608 = vxpose.xlu0.b32.cont [4/16] 0.0, 128
        %609 = vxpose.xlu0.b32.cont [5/16] 0.0, 128
        %610 = vxpose.xlu0.b32.cont [6/16] 0.0, 128
        %611 = vxpose.xlu0.b32.cont [7/16] 0.0, 128
        %612 = vxpose.xlu0.b32.cont [8/16] 0.0, 128
        %613 = vxpose.xlu0.b32.cont [9/16] 0.0, 128
        %614 = vxpose.xlu0.b32.cont [10/16] 0.0, 128
        %615 = vxpose.xlu0.b32.cont [11/16] 0.0, 128
        %616 = vxpose.xlu0.b32.cont [12/16] 0.0, 128
        %617 = vxpose.xlu0.b32.cont [13/16] 0.0, 128
        %618 = vxpose.xlu0.b32.cont [14/16] 0.0, 128
        %619 = vxpose.xlu0.b32.cont [15/16] 0.0, 128
        %620 = vxpose.xlu0.b32.end [16/16] 0.0, 128
        %v621 = vpop.trf.xlu0
        %v622 = vpop.trf.xlu0
        %v623 = vpop.trf.xlu0
        %v624 = vpop.trf.xlu0
        %v625 = vpop.trf.xlu0
        %v626 = vpop.trf.xlu0
        %v627 = vpop.trf.xlu0
        %v628 = vpop.trf.xlu0
        %v629 = vpop.trf.xlu0
        %v630 = vpop.trf.xlu0
        %v631 = vpop.trf.xlu0
        %v632 = vpop.trf.xlu0
        %v633 = vpop.trf.xlu0
        %v634 = vpop.trf.xlu0
        %v635 = vpop.trf.xlu0
        %v636 = vpop.trf.xlu0
        %vm637 = vcmask 64512
        %v639 = vsel %vm637, %v397, 0
        %v642 = vsel %vm637, %v398, 0
        %v645 = vsel %vm637, %v399, 0
        %v648 = vsel %vm637, %v400, 0
        %v651 = vsel %vm637, %v401, 0
        %v654 = vsel %vm637, %v402, 0
        %v657 = vsel %vm637, %v403, 0
        %v660 = vsel %vm637, %v404, 0
        %v663 = vsel %vm637, %v405, 0
        %v666 = vsel %vm637, %v406, 0
        %v669 = vsel %vm637, %v407, 0
        %v672 = vsel %vm637, %v408, 0
        %v675 = vsel %vm637, %v409, 0
        %v678 = vsel %vm637, %v410, 0
        %v681 = vsel %vm637, %v411, 0
        %v684 = vsel %vm637, %v412, 0
        %v687 = vsel %vm637, %v429, 0
        %v690 = vsel %vm637, %v430, 0
        %v693 = vsel %vm637, %v431, 0
        %v696 = vsel %vm637, %v432, 0
        %v699 = vsel %vm637, %v433, 0
        %v702 = vsel %vm637, %v434, 0
        %v705 = vsel %vm637, %v435, 0
        %v708 = vsel %vm637, %v436, 0
        %v711 = vsel %vm637, %v437, 0
        %v714 = vsel %vm637, %v438, 0
        %v717 = vsel %vm637, %v439, 0
        %v720 = vsel %vm637, %v440, 0
        %v723 = vsel %vm637, %v441, 0
        %v726 = vsel %vm637, %v442, 0
        %v729 = vsel %vm637, %v443, 0
        %v732 = vsel %vm637, %v444, 0
        %v735 = vsel %vm637, %v461, 0
        %v738 = vsel %vm637, %v462, 0
        %v741 = vsel %vm637, %v463, 0
        %v744 = vsel %vm637, %v464, 0
        %v747 = vsel %vm637, %v465, 0
        %v750 = vsel %vm637, %v466, 0
        %v753 = vsel %vm637, %v467, 0
        %v756 = vsel %vm637, %v468, 0
        %v759 = vsel %vm637, %v469, 0
        %v762 = vsel %vm637, %v470, 0
        %v765 = vsel %vm637, %v471, 0
        %v768 = vsel %vm637, %v472, 0
        %v771 = vsel %vm637, %v473, 0
        %v774 = vsel %vm637, %v474, 0
        %v777 = vsel %vm637, %v475, 0
        %v780 = vsel %vm637, %v476, 0
        %v783 = vsel %vm637, %v493, 0
        %v786 = vsel %vm637, %v494, 0
        %v789 = vsel %vm637, %v495, 0
        %v792 = vsel %vm637, %v496, 0
        %v795 = vsel %vm637, %v497, 0
        %v798 = vsel %vm637, %v498, 0
        %v801 = vsel %vm637, %v499, 0
        %v804 = vsel %vm637, %v500, 0
        %v807 = vsel %vm637, %v501, 0
        %v810 = vsel %vm637, %v502, 0
        %v813 = vsel %vm637, %v503, 0
        %v816 = vsel %vm637, %v504, 0
        %v819 = vsel %vm637, %v505, 0
        %v822 = vsel %vm637, %v506, 0
        %v825 = vsel %vm637, %v507, 0
        %v828 = vsel %vm637, %v508, 0
        %v831 = vsel %vm637, %v525, 0
        %v834 = vsel %vm637, %v526, 0
        %v837 = vsel %vm637, %v527, 0
        %v840 = vsel %vm637, %v528, 0
        %v843 = vsel %vm637, %v529, 0
        %v846 = vsel %vm637, %v530, 0
        %v849 = vsel %vm637, %v531, 0
        %v852 = vsel %vm637, %v532, 0
        %v855 = vsel %vm637, %v533, 0
        %v858 = vsel %vm637, %v534, 0
        %v861 = vsel %vm637, %v535, 0
        %v864 = vsel %vm637, %v536, 0
        %v867 = vsel %vm637, %v537, 0
        %v870 = vsel %vm637, %v538, 0
        %v873 = vsel %vm637, %v539, 0
        %v876 = vsel %vm637, %v540, 0
        %v879 = vsel %vm637, %v557, 0
        %v882 = vsel %vm637, %v558, 0
        %v885 = vsel %vm637, %v559, 0
        %v888 = vsel %vm637, %v560, 0
        %v891 = vsel %vm637, %v561, 0
        %v894 = vsel %vm637, %v562, 0
        %v897 = vsel %vm637, %v563, 0
        %v900 = vsel %vm637, %v564, 0
        %v903 = vsel %vm637, %v565, 0
        %v906 = vsel %vm637, %v566, 0
        %v909 = vsel %vm637, %v567, 0
        %v912 = vsel %vm637, %v568, 0
        %v915 = vsel %vm637, %v569, 0
        %v918 = vsel %vm637, %v570, 0
        %v921 = vsel %vm637, %v571, 0
        %v924 = vsel %vm637, %v572, 0
        %v927 = vsel %vm637, %v589, 0
        %v930 = vsel %vm637, %v590, 0
        %v933 = vsel %vm637, %v591, 0
        %v936 = vsel %vm637, %v592, 0
        %v939 = vsel %vm637, %v593, 0
        %v942 = vsel %vm637, %v594, 0
        %v945 = vsel %vm637, %v595, 0
        %v948 = vsel %vm637, %v596, 0
        %v951 = vsel %vm637, %v597, 0
        %v954 = vsel %vm637, %v598, 0
        %v957 = vsel %vm637, %v599, 0
        %v960 = vsel %vm637, %v600, 0
        %v963 = vsel %vm637, %v601, 0
        %v966 = vsel %vm637, %v602, 0
        %v969 = vsel %vm637, %v603, 0
        %v972 = vsel %vm637, %v604, 0
        %v975 = vsel %vm637, %v621, 0
        %v978 = vsel %vm637, %v622, 0
        %v981 = vsel %vm637, %v623, 0
        %v984 = vsel %vm637, %v624, 0
        %v987 = vsel %vm637, %v625, 0
        %v990 = vsel %vm637, %v626, 0
        %v993 = vsel %vm637, %v627, 0
        %v996 = vsel %vm637, %v628, 0
        %v999 = vsel %vm637, %v629, 0
        %v1002 = vsel %vm637, %v630, 0
        %v1005 = vsel %vm637, %v631, 0
        %v1008 = vsel %vm637, %v632, 0
        %v1011 = vsel %vm637, %v633, 0
        %v1014 = vsel %vm637, %v634, 0
        %v1017 = vsel %vm637, %v635, 0
        %v1020 = vsel %vm637, %v636, 0
        %1022 = vmatpush.msra.mxu0 0.0
        %1023 = vmatpush.msra.mxu0 0.0
        %1024 = vmatpush.msra.mxu0 0.0
        %1025 = vmatpush.msra.mxu0 0.0
        %1026 = vmatpush.msra.mxu0 0.0
        %1027 = vmatpush.msra.mxu0 0.0
        %1028 = vmatpush.msra.mxu0 0.0
        %1029 = vmatpush.msra.mxu0 0.0
        %1030 = vmatpush.msra.mxu0 0.0
        %1031 = vmatpush.msra.mxu0 0.0
        %1032 = vmatpush.msra.mxu0 0.0
        %1033 = vmatpush.msra.mxu0 0.0
        %1034 = vmatpush.msra.mxu0 0.0
        %1035 = vmatpush.msra.mxu0 0.0
        %1036 = vmatpush.msra.mxu0 0.0
        %1037 = vmatpush.msra.mxu0 %v380
        %1038 = vmatmul.f32.gmra.mxu0 %v639
        %v1039 = vpop.f32.mrf.mxu0
        %v1040 = vadd.f32 0.0, %v1039
        %1041 = vmatmul.f32.gmra.mxu0 %v642
        %v1042 = vpop.f32.mrf.mxu0
        %v1043 = vadd.f32 0.0, %v1042
        %1044 = vmatmul.f32.gmra.mxu0 %v645
        %v1045 = vpop.f32.mrf.mxu0
        %v1046 = vadd.f32 0.0, %v1045
        %1047 = vmatmul.f32.gmra.mxu0 %v648
        %v1048 = vpop.f32.mrf.mxu0
        %v1049 = vadd.f32 0.0, %v1048
        %1050 = vmatmul.f32.gmra.mxu0 %v651
        %v1051 = vpop.f32.mrf.mxu0
        %v1052 = vadd.f32 0.0, %v1051
        %1053 = vmatmul.f32.gmra.mxu0 %v654
        %v1054 = vpop.f32.mrf.mxu0
        %v1055 = vadd.f32 0.0, %v1054
        %1056 = vmatmul.f32.gmra.mxu0 %v657
        %v1057 = vpop.f32.mrf.mxu0
        %v1058 = vadd.f32 0.0, %v1057
        %1059 = vmatmul.f32.gmra.mxu0 %v660
        %v1060 = vpop.f32.mrf.mxu0
        %v1061 = vadd.f32 0.0, %v1060
        %1062 = vmatmul.f32.gmra.mxu0 %v663
        %v1063 = vpop.f32.mrf.mxu0
        %v1064 = vadd.f32 0.0, %v1063
        %1065 = vmatmul.f32.gmra.mxu0 %v666
        %v1066 = vpop.f32.mrf.mxu0
        %v1067 = vadd.f32 0.0, %v1066
        %1068 = vmatmul.f32.gmra.mxu0 %v669
        %v1069 = vpop.f32.mrf.mxu0
        %v1070 = vadd.f32 0.0, %v1069
        %1071 = vmatmul.f32.gmra.mxu0 %v672
        %v1072 = vpop.f32.mrf.mxu0
        %v1073 = vadd.f32 0.0, %v1072
        %1074 = vmatmul.f32.gmra.mxu0 %v675
        %v1075 = vpop.f32.mrf.mxu0
        %v1076 = vadd.f32 0.0, %v1075
        %1077 = vmatmul.f32.gmra.mxu0 %v678
        %v1078 = vpop.f32.mrf.mxu0
        %v1079 = vadd.f32 0.0, %v1078
        %1080 = vmatmul.f32.gmra.mxu0 %v681
        %v1081 = vpop.f32.mrf.mxu0
        %v1082 = vadd.f32 0.0, %v1081
        %1083 = vmatmul.f32.gmra.mxu0 %v684
        %v1084 = vpop.f32.mrf.mxu0
        %v1085 = vadd.f32 0.0, %v1084
        %1086 = vmatmul.f32.gmra.mxu0 %v687
        %v1087 = vpop.f32.mrf.mxu0
        %v1088 = vadd.f32 0.0, %v1087
        %1089 = vmatmul.f32.gmra.mxu0 %v690
        %v1090 = vpop.f32.mrf.mxu0
        %v1091 = vadd.f32 0.0, %v1090
        %1092 = vmatmul.f32.gmra.mxu0 %v693
        %v1093 = vpop.f32.mrf.mxu0
        %v1094 = vadd.f32 0.0, %v1093
        %1095 = vmatmul.f32.gmra.mxu0 %v696
        %v1096 = vpop.f32.mrf.mxu0
        %v1097 = vadd.f32 0.0, %v1096
        %1098 = vmatmul.f32.gmra.mxu0 %v699
        %v1099 = vpop.f32.mrf.mxu0
        %v1100 = vadd.f32 0.0, %v1099
        %1101 = vmatmul.f32.gmra.mxu0 %v702
        %v1102 = vpop.f32.mrf.mxu0
        %v1103 = vadd.f32 0.0, %v1102
        %1104 = vmatmul.f32.gmra.mxu0 %v705
        %v1105 = vpop.f32.mrf.mxu0
        %v1106 = vadd.f32 0.0, %v1105
        %1107 = vmatmul.f32.gmra.mxu0 %v708
        %v1108 = vpop.f32.mrf.mxu0
        %v1109 = vadd.f32 0.0, %v1108
        %1110 = vmatmul.f32.gmra.mxu0 %v711
        %v1111 = vpop.f32.mrf.mxu0
        %v1112 = vadd.f32 0.0, %v1111
        %1113 = vmatmul.f32.gmra.mxu0 %v714
        %v1114 = vpop.f32.mrf.mxu0
        %v1115 = vadd.f32 0.0, %v1114
        %1116 = vmatmul.f32.gmra.mxu0 %v717
        %v1117 = vpop.f32.mrf.mxu0
        %v1118 = vadd.f32 0.0, %v1117
        %1119 = vmatmul.f32.gmra.mxu0 %v720
        %v1120 = vpop.f32.mrf.mxu0
        %v1121 = vadd.f32 0.0, %v1120
        %1122 = vmatmul.f32.gmra.mxu0 %v723
        %v1123 = vpop.f32.mrf.mxu0
        %v1124 = vadd.f32 0.0, %v1123
        %1125 = vmatmul.f32.gmra.mxu0 %v726
        %v1126 = vpop.f32.mrf.mxu0
        %v1127 = vadd.f32 0.0, %v1126
        %1128 = vmatmul.f32.gmra.mxu0 %v729
        %v1129 = vpop.f32.mrf.mxu0
        %v1130 = vadd.f32 0.0, %v1129
        %1131 = vmatmul.f32.gmra.mxu0 %v732
        %v1132 = vpop.f32.mrf.mxu0
        %v1133 = vadd.f32 0.0, %v1132
        %1134 = vmatmul.f32.gmra.mxu0 %v735
        %v1135 = vpop.f32.mrf.mxu0
        %v1136 = vadd.f32 0.0, %v1135
        %1137 = vmatmul.f32.gmra.mxu0 %v738
        %v1138 = vpop.f32.mrf.mxu0
        %v1139 = vadd.f32 0.0, %v1138
        %1140 = vmatmul.f32.gmra.mxu0 %v741
        %v1141 = vpop.f32.mrf.mxu0
        %v1142 = vadd.f32 0.0, %v1141
        %1143 = vmatmul.f32.gmra.mxu0 %v744
        %v1144 = vpop.f32.mrf.mxu0
        %v1145 = vadd.f32 0.0, %v1144
        %1146 = vmatmul.f32.gmra.mxu0 %v747
        %v1147 = vpop.f32.mrf.mxu0
        %v1148 = vadd.f32 0.0, %v1147
        %1149 = vmatmul.f32.gmra.mxu0 %v750
        %v1150 = vpop.f32.mrf.mxu0
        %v1151 = vadd.f32 0.0, %v1150
        %1152 = vmatmul.f32.gmra.mxu0 %v753
        %v1153 = vpop.f32.mrf.mxu0
        %v1154 = vadd.f32 0.0, %v1153
        %1155 = vmatmul.f32.gmra.mxu0 %v756
        %v1156 = vpop.f32.mrf.mxu0
        %v1157 = vadd.f32 0.0, %v1156
        %1158 = vmatmul.f32.gmra.mxu0 %v759
        %v1159 = vpop.f32.mrf.mxu0
        %v1160 = vadd.f32 0.0, %v1159
        %1161 = vmatmul.f32.gmra.mxu0 %v762
        %v1162 = vpop.f32.mrf.mxu0
        %v1163 = vadd.f32 0.0, %v1162
        %1164 = vmatmul.f32.gmra.mxu0 %v765
        %v1165 = vpop.f32.mrf.mxu0
        %v1166 = vadd.f32 0.0, %v1165
        %1167 = vmatmul.f32.gmra.mxu0 %v768
        %v1168 = vpop.f32.mrf.mxu0
        %v1169 = vadd.f32 0.0, %v1168
        %1170 = vmatmul.f32.gmra.mxu0 %v771
        %v1171 = vpop.f32.mrf.mxu0
        %v1172 = vadd.f32 0.0, %v1171
        %1173 = vmatmul.f32.gmra.mxu0 %v774
        %v1174 = vpop.f32.mrf.mxu0
        %v1175 = vadd.f32 0.0, %v1174
        %1176 = vmatmul.f32.gmra.mxu0 %v777
        %v1177 = vpop.f32.mrf.mxu0
        %v1178 = vadd.f32 0.0, %v1177
        %1179 = vmatmul.f32.gmra.mxu0 %v780
        %v1180 = vpop.f32.mrf.mxu0
        %v1181 = vadd.f32 0.0, %v1180
        %1182 = vmatmul.f32.gmra.mxu0 %v783
        %v1183 = vpop.f32.mrf.mxu0
        %v1184 = vadd.f32 0.0, %v1183
        %1185 = vmatmul.f32.gmra.mxu0 %v786
        %v1186 = vpop.f32.mrf.mxu0
        %v1187 = vadd.f32 0.0, %v1186
        %1188 = vmatmul.f32.gmra.mxu0 %v789
        %v1189 = vpop.f32.mrf.mxu0
        %v1190 = vadd.f32 0.0, %v1189
        %1191 = vmatmul.f32.gmra.mxu0 %v792
        %v1192 = vpop.f32.mrf.mxu0
        %v1193 = vadd.f32 0.0, %v1192
        %1194 = vmatmul.f32.gmra.mxu0 %v795
        %v1195 = vpop.f32.mrf.mxu0
        %v1196 = vadd.f32 0.0, %v1195
        %1197 = vmatmul.f32.gmra.mxu0 %v798
        %v1198 = vpop.f32.mrf.mxu0
        %v1199 = vadd.f32 0.0, %v1198
        %1200 = vmatmul.f32.gmra.mxu0 %v801
        %v1201 = vpop.f32.mrf.mxu0
        %v1202 = vadd.f32 0.0, %v1201
        %1203 = vmatmul.f32.gmra.mxu0 %v804
        %v1204 = vpop.f32.mrf.mxu0
        %v1205 = vadd.f32 0.0, %v1204
        %1206 = vmatmul.f32.gmra.mxu0 %v807
        %v1207 = vpop.f32.mrf.mxu0
        %v1208 = vadd.f32 0.0, %v1207
        %1209 = vmatmul.f32.gmra.mxu0 %v810
        %v1210 = vpop.f32.mrf.mxu0
        %v1211 = vadd.f32 0.0, %v1210
        %1212 = vmatmul.f32.gmra.mxu0 %v813
        %v1213 = vpop.f32.mrf.mxu0
        %v1214 = vadd.f32 0.0, %v1213
        %1215 = vmatmul.f32.gmra.mxu0 %v816
        %v1216 = vpop.f32.mrf.mxu0
        %v1217 = vadd.f32 0.0, %v1216
        %1218 = vmatmul.f32.gmra.mxu0 %v819
        %v1219 = vpop.f32.mrf.mxu0
        %v1220 = vadd.f32 0.0, %v1219
        %1221 = vmatmul.f32.gmra.mxu0 %v822
        %v1222 = vpop.f32.mrf.mxu0
        %v1223 = vadd.f32 0.0, %v1222
        %1224 = vmatmul.f32.gmra.mxu0 %v825
        %v1225 = vpop.f32.mrf.mxu0
        %v1226 = vadd.f32 0.0, %v1225
        %1227 = vmatmul.f32.gmra.mxu0 %v828
        %v1228 = vpop.f32.mrf.mxu0
        %v1229 = vadd.f32 0.0, %v1228
        %1230 = vmatmul.f32.gmra.mxu0 %v831
        %v1231 = vpop.f32.mrf.mxu0
        %v1232 = vadd.f32 0.0, %v1231
        %1233 = vmatmul.f32.gmra.mxu0 %v834
        %v1234 = vpop.f32.mrf.mxu0
        %v1235 = vadd.f32 0.0, %v1234
        %1236 = vmatmul.f32.gmra.mxu0 %v837
        %v1237 = vpop.f32.mrf.mxu0
        %v1238 = vadd.f32 0.0, %v1237
        %1239 = vmatmul.f32.gmra.mxu0 %v840
        %v1240 = vpop.f32.mrf.mxu0
        %v1241 = vadd.f32 0.0, %v1240
        %1242 = vmatmul.f32.gmra.mxu0 %v843
        %v1243 = vpop.f32.mrf.mxu0
        %v1244 = vadd.f32 0.0, %v1243
        %1245 = vmatmul.f32.gmra.mxu0 %v846
        %v1246 = vpop.f32.mrf.mxu0
        %v1247 = vadd.f32 0.0, %v1246
        %1248 = vmatmul.f32.gmra.mxu0 %v849
        %v1249 = vpop.f32.mrf.mxu0
        %v1250 = vadd.f32 0.0, %v1249
        %1251 = vmatmul.f32.gmra.mxu0 %v852
        %v1252 = vpop.f32.mrf.mxu0
        %v1253 = vadd.f32 0.0, %v1252
        %1254 = vmatmul.f32.gmra.mxu0 %v855
        %v1255 = vpop.f32.mrf.mxu0
        %v1256 = vadd.f32 0.0, %v1255
        %1257 = vmatmul.f32.gmra.mxu0 %v858
        %v1258 = vpop.f32.mrf.mxu0
        %v1259 = vadd.f32 0.0, %v1258
        %1260 = vmatmul.f32.gmra.mxu0 %v861
        %v1261 = vpop.f32.mrf.mxu0
        %v1262 = vadd.f32 0.0, %v1261
        %1263 = vmatmul.f32.gmra.mxu0 %v864
        %v1264 = vpop.f32.mrf.mxu0
        %v1265 = vadd.f32 0.0, %v1264
        %1266 = vmatmul.f32.gmra.mxu0 %v867
        %v1267 = vpop.f32.mrf.mxu0
        %v1268 = vadd.f32 0.0, %v1267
        %1269 = vmatmul.f32.gmra.mxu0 %v870
        %v1270 = vpop.f32.mrf.mxu0
        %v1271 = vadd.f32 0.0, %v1270
        %1272 = vmatmul.f32.gmra.mxu0 %v873
        %v1273 = vpop.f32.mrf.mxu0
        %v1274 = vadd.f32 0.0, %v1273
        %1275 = vmatmul.f32.gmra.mxu0 %v876
        %v1276 = vpop.f32.mrf.mxu0
        %v1277 = vadd.f32 0.0, %v1276
        %1278 = vmatmul.f32.gmra.mxu0 %v879
        %v1279 = vpop.f32.mrf.mxu0
        %v1280 = vadd.f32 0.0, %v1279
        %1281 = vmatmul.f32.gmra.mxu0 %v882
        %v1282 = vpop.f32.mrf.mxu0
        %v1283 = vadd.f32 0.0, %v1282
        %1284 = vmatmul.f32.gmra.mxu0 %v885
        %v1285 = vpop.f32.mrf.mxu0
        %v1286 = vadd.f32 0.0, %v1285
        %1287 = vmatmul.f32.gmra.mxu0 %v888
        %v1288 = vpop.f32.mrf.mxu0
        %v1289 = vadd.f32 0.0, %v1288
        %1290 = vmatmul.f32.gmra.mxu0 %v891
        %v1291 = vpop.f32.mrf.mxu0
        %v1292 = vadd.f32 0.0, %v1291
        %1293 = vmatmul.f32.gmra.mxu0 %v894
        %v1294 = vpop.f32.mrf.mxu0
        %v1295 = vadd.f32 0.0, %v1294
        %1296 = vmatmul.f32.gmra.mxu0 %v897
        %v1297 = vpop.f32.mrf.mxu0
        %v1298 = vadd.f32 0.0, %v1297
        %1299 = vmatmul.f32.gmra.mxu0 %v900
        %v1300 = vpop.f32.mrf.mxu0
        %v1301 = vadd.f32 0.0, %v1300
        %1302 = vmatmul.f32.gmra.mxu0 %v903
        %v1303 = vpop.f32.mrf.mxu0
        %v1304 = vadd.f32 0.0, %v1303
        %1305 = vmatmul.f32.gmra.mxu0 %v906
        %v1306 = vpop.f32.mrf.mxu0
        %v1307 = vadd.f32 0.0, %v1306
        %1308 = vmatmul.f32.gmra.mxu0 %v909
        %v1309 = vpop.f32.mrf.mxu0
        %v1310 = vadd.f32 0.0, %v1309
        %1311 = vmatmul.f32.gmra.mxu0 %v912
        %v1312 = vpop.f32.mrf.mxu0
        %v1313 = vadd.f32 0.0, %v1312
        %1314 = vmatmul.f32.gmra.mxu0 %v915
        %v1315 = vpop.f32.mrf.mxu0
        %v1316 = vadd.f32 0.0, %v1315
        %1317 = vmatmul.f32.gmra.mxu0 %v918
        %v1318 = vpop.f32.mrf.mxu0
        %v1319 = vadd.f32 0.0, %v1318
        %1320 = vmatmul.f32.gmra.mxu0 %v921
        %v1321 = vpop.f32.mrf.mxu0
        %v1322 = vadd.f32 0.0, %v1321
        %1323 = vmatmul.f32.gmra.mxu0 %v924
        %v1324 = vpop.f32.mrf.mxu0
        %v1325 = vadd.f32 0.0, %v1324
        %1326 = vmatmul.f32.gmra.mxu0 %v927
        %v1327 = vpop.f32.mrf.mxu0
        %v1328 = vadd.f32 0.0, %v1327
        %1329 = vmatmul.f32.gmra.mxu0 %v930
        %v1330 = vpop.f32.mrf.mxu0
        %v1331 = vadd.f32 0.0, %v1330
        %1332 = vmatmul.f32.gmra.mxu0 %v933
        %v1333 = vpop.f32.mrf.mxu0
        %v1334 = vadd.f32 0.0, %v1333
        %1335 = vmatmul.f32.gmra.mxu0 %v936
        %v1336 = vpop.f32.mrf.mxu0
        %v1337 = vadd.f32 0.0, %v1336
        %1338 = vmatmul.f32.gmra.mxu0 %v939
        %v1339 = vpop.f32.mrf.mxu0
        %v1340 = vadd.f32 0.0, %v1339
        %1341 = vmatmul.f32.gmra.mxu0 %v942
        %v1342 = vpop.f32.mrf.mxu0
        %v1343 = vadd.f32 0.0, %v1342
        %1344 = vmatmul.f32.gmra.mxu0 %v945
        %v1345 = vpop.f32.mrf.mxu0
        %v1346 = vadd.f32 0.0, %v1345
        %1347 = vmatmul.f32.gmra.mxu0 %v948
        %v1348 = vpop.f32.mrf.mxu0
        %v1349 = vadd.f32 0.0, %v1348
        %1350 = vmatmul.f32.gmra.mxu0 %v951
        %v1351 = vpop.f32.mrf.mxu0
        %v1352 = vadd.f32 0.0, %v1351
        %1353 = vmatmul.f32.gmra.mxu0 %v954
        %v1354 = vpop.f32.mrf.mxu0
        %v1355 = vadd.f32 0.0, %v1354
        %1356 = vmatmul.f32.gmra.mxu0 %v957
        %v1357 = vpop.f32.mrf.mxu0
        %v1358 = vadd.f32 0.0, %v1357
        %1359 = vmatmul.f32.gmra.mxu0 %v960
        %v1360 = vpop.f32.mrf.mxu0
        %v1361 = vadd.f32 0.0, %v1360
        %1362 = vmatmul.f32.gmra.mxu0 %v963
        %v1363 = vpop.f32.mrf.mxu0
        %v1364 = vadd.f32 0.0, %v1363
        %1365 = vmatmul.f32.gmra.mxu0 %v966
        %v1366 = vpop.f32.mrf.mxu0
        %v1367 = vadd.f32 0.0, %v1366
        %1368 = vmatmul.f32.gmra.mxu0 %v969
        %v1369 = vpop.f32.mrf.mxu0
        %v1370 = vadd.f32 0.0, %v1369
        %1371 = vmatmul.f32.gmra.mxu0 %v972
        %v1372 = vpop.f32.mrf.mxu0
        %v1373 = vadd.f32 0.0, %v1372
        %1374 = vmatmul.f32.gmra.mxu0 %v975
        %v1375 = vpop.f32.mrf.mxu0
        %v1376 = vadd.f32 0.0, %v1375
        %1377 = vmatmul.f32.gmra.mxu0 %v978
        %v1378 = vpop.f32.mrf.mxu0
        %v1379 = vadd.f32 0.0, %v1378
        %1380 = vmatmul.f32.gmra.mxu0 %v981
        %v1381 = vpop.f32.mrf.mxu0
        %v1382 = vadd.f32 0.0, %v1381
        %1383 = vmatmul.f32.gmra.mxu0 %v984
        %v1384 = vpop.f32.mrf.mxu0
        %v1385 = vadd.f32 0.0, %v1384
        %1386 = vmatmul.f32.gmra.mxu0 %v987
        %v1387 = vpop.f32.mrf.mxu0
        %v1388 = vadd.f32 0.0, %v1387
        %1389 = vmatmul.f32.gmra.mxu0 %v990
        %v1390 = vpop.f32.mrf.mxu0
        %v1391 = vadd.f32 0.0, %v1390
        %1392 = vmatmul.f32.gmra.mxu0 %v993
        %v1393 = vpop.f32.mrf.mxu0
        %v1394 = vadd.f32 0.0, %v1393
        %1395 = vmatmul.f32.gmra.mxu0 %v996
        %v1396 = vpop.f32.mrf.mxu0
        %v1397 = vadd.f32 0.0, %v1396
        %1398 = vmatmul.f32.gmra.mxu0 %v999
        %v1399 = vpop.f32.mrf.mxu0
        %v1400 = vadd.f32 0.0, %v1399
        %1401 = vmatmul.f32.gmra.mxu0 %v1002
        %v1402 = vpop.f32.mrf.mxu0
        %v1403 = vadd.f32 0.0, %v1402
        %1404 = vmatmul.f32.gmra.mxu0 %v1005
        %v1405 = vpop.f32.mrf.mxu0
        %v1406 = vadd.f32 0.0, %v1405
        %1407 = vmatmul.f32.gmra.mxu0 %v1008
        %v1408 = vpop.f32.mrf.mxu0
        %v1409 = vadd.f32 0.0, %v1408
        %1410 = vmatmul.f32.gmra.mxu0 %v1011
        %v1411 = vpop.f32.mrf.mxu0
        %v1412 = vadd.f32 0.0, %v1411
        %1413 = vmatmul.f32.gmra.mxu0 %v1014
        %v1414 = vpop.f32.mrf.mxu0
        %v1415 = vadd.f32 0.0, %v1414
        %1416 = vmatmul.f32.gmra.mxu0 %v1017
        %v1417 = vpop.f32.mrf.mxu0
        %v1418 = vadd.f32 0.0, %v1417
        %1419 = vmatmul.f32.gmra.mxu0 %v1020
        %v1420 = vpop.f32.mrf.mxu0
        %v1421 = vadd.f32 0.0, %v1420
        %1422 = vdwg.mxu0
        %v1423 = vld [vmem:[%s220] sm:$0xf]
        %v1424 = vld [vmem:[%s220 + $0x4] sm:$0xf]
        %v1425 = vld [vmem:[%s220 + $0x8] sm:$0xf]
        %v1426 = vld [vmem:[%s220 + $0xc] sm:$0xf]
        %v1427 = vld [vmem:[%s220 + $0x10] sm:$0xf]
        %v1428 = vld [vmem:[%s220 + $0x14] sm:$0xf]
        %v1429 = vld [vmem:[%s220 + $0x18] sm:$0xf]
        %v1430 = vld [vmem:[%s220 + $0x1c] sm:$0xf]
        %v1431 = vld [vmem:[%s220 + $0x20] sm:$0xf]
        %v1432 = vld [vmem:[%s220 + $0x24] sm:$0xf]
        %v1433 = vld [vmem:[%s220 + $0x28] sm:$0xf]
        %v1434 = vld [vmem:[%s220 + $0x2c] sm:$0xf]
        %v1435 = vld [vmem:[%s220 + $0x30] sm:$0xf]
        %v1436 = vld [vmem:[%s220 + $0x34] sm:$0xf]
        %v1437 = vld [vmem:[%s220 + $0x38] sm:$0xf]
        %v1438 = vld [vmem:[%s220 + $0x3c] sm:$0xf]
        %v1439 = vld [vmem:[%s220 + $0x40] sm:$0xf]
        %v1440 = vld [vmem:[%s220 + $0x44] sm:$0xf]
        %v1441 = vld [vmem:[%s220 + $0x48] sm:$0xf]
        %v1442 = vld [vmem:[%s220 + $0x4c] sm:$0xf]
        %v1443 = vld [vmem:[%s220 + $0x50] sm:$0xf]
        %v1444 = vld [vmem:[%s220 + $0x54] sm:$0xf]
        %v1445 = vld [vmem:[%s220 + $0x58] sm:$0xf]
        %v1446 = vld [vmem:[%s220 + $0x5c] sm:$0xf]
        %v1447 = vld [vmem:[%s220 + $0x60] sm:$0xf]
        %v1448 = vld [vmem:[%s220 + $0x64] sm:$0xf]
        %v1449 = vld [vmem:[%s220 + $0x68] sm:$0xf]
        %v1450 = vld [vmem:[%s220 + $0x6c] sm:$0xf]
        %v1451 = vld [vmem:[%s220 + $0x70] sm:$0xf]
        %v1452 = vld [vmem:[%s220 + $0x74] sm:$0xf]
        %v1453 = vld [vmem:[%s220 + $0x78] sm:$0xf]
        %v1454 = vld [vmem:[%s220 + $0x7c] sm:$0xf]
        %v1455 = vld [vmem:[%s220 + $0x80] sm:$0xf]
        %v1456 = vld [vmem:[%s220 + $0x84] sm:$0xf]
        %v1457 = vld [vmem:[%s220 + $0x88] sm:$0xf]
        %v1458 = vld [vmem:[%s220 + $0x8c] sm:$0xf]
        %v1459 = vld [vmem:[%s220 + $0x90] sm:$0xf]
        %v1460 = vld [vmem:[%s220 + $0x94] sm:$0xf]
        %v1461 = vld [vmem:[%s220 + $0x98] sm:$0xf]
        %v1462 = vld [vmem:[%s220 + $0x9c] sm:$0xf]
        %v1463 = vld [vmem:[%s220 + $0xa0] sm:$0xf]
        %v1464 = vld [vmem:[%s220 + $0xa4] sm:$0xf]
        %v1465 = vld [vmem:[%s220 + $0xa8] sm:$0xf]
        %v1466 = vld [vmem:[%s220 + $0xac] sm:$0xf]
        %v1467 = vld [vmem:[%s220 + $0xb0] sm:$0xf]
        %v1468 = vld [vmem:[%s220 + $0xb4] sm:$0xf]
        %v1469 = vld [vmem:[%s220 + $0xb8] sm:$0xf]
        %v1470 = vld [vmem:[%s220 + $0xbc] sm:$0xf]
        %v1471 = vld [vmem:[%s220 + $0xc0] sm:$0xf]
        %v1472 = vld [vmem:[%s220 + $0xc4] sm:$0xf]
        %v1473 = vld [vmem:[%s220 + $0xc8] sm:$0xf]
        %v1474 = vld [vmem:[%s220 + $0xcc] sm:$0xf]
        %v1475 = vld [vmem:[%s220 + $0xd0] sm:$0xf]
        %v1476 = vld [vmem:[%s220 + $0xd4] sm:$0xf]
        %v1477 = vld [vmem:[%s220 + $0xd8] sm:$0xf]
        %v1478 = vld [vmem:[%s220 + $0xdc] sm:$0xf]
        %v1479 = vld [vmem:[%s220 + $0xe0] sm:$0xf]
        %v1480 = vld [vmem:[%s220 + $0xe4] sm:$0xf]
        %v1481 = vld [vmem:[%s220 + $0xe8] sm:$0xf]
        %v1482 = vld [vmem:[%s220 + $0xec] sm:$0xf]
        %v1483 = vld [vmem:[%s220 + $0xf0] sm:$0xf]
        %v1484 = vld [vmem:[%s220 + $0xf4] sm:$0xf]
        %v1485 = vld [vmem:[%s220 + $0xf8] sm:$0xf]
        %v1486 = vld [vmem:[%s220 + $0xfc] sm:$0xf]
        %v1487 = vld [vmem:[%s220 + $0x100] sm:$0xf]
        %v1488 = vld [vmem:[%s220 + $0x104] sm:$0xf]
        %v1489 = vld [vmem:[%s220 + $0x108] sm:$0xf]
        %v1490 = vld [vmem:[%s220 + $0x10c] sm:$0xf]
        %v1491 = vld [vmem:[%s220 + $0x110] sm:$0xf]
        %v1492 = vld [vmem:[%s220 + $0x114] sm:$0xf]
        %v1493 = vld [vmem:[%s220 + $0x118] sm:$0xf]
        %v1494 = vld [vmem:[%s220 + $0x11c] sm:$0xf]
        %v1495 = vld [vmem:[%s220 + $0x120] sm:$0xf]
        %v1496 = vld [vmem:[%s220 + $0x124] sm:$0xf]
        %v1497 = vld [vmem:[%s220 + $0x128] sm:$0xf]
        %v1498 = vld [vmem:[%s220 + $0x12c] sm:$0xf]
        %v1499 = vld [vmem:[%s220 + $0x130] sm:$0xf]
        %v1500 = vld [vmem:[%s220 + $0x134] sm:$0xf]
        %v1501 = vld [vmem:[%s220 + $0x138] sm:$0xf]
        %v1502 = vld [vmem:[%s220 + $0x13c] sm:$0xf]
        %v1503 = vld [vmem:[%s220 + $0x140] sm:$0xf]
        %v1504 = vld [vmem:[%s220 + $0x144] sm:$0xf]
        %v1505 = vld [vmem:[%s220 + $0x148] sm:$0xf]
        %v1506 = vld [vmem:[%s220 + $0x14c] sm:$0xf]
        %v1507 = vld [vmem:[%s220 + $0x150] sm:$0xf]
        %v1508 = vld [vmem:[%s220 + $0x154] sm:$0xf]
        %v1509 = vld [vmem:[%s220 + $0x158] sm:$0xf]
        %v1510 = vld [vmem:[%s220 + $0x15c] sm:$0xf]
        %v1511 = vld [vmem:[%s220 + $0x160] sm:$0xf]
        %v1512 = vld [vmem:[%s220 + $0x164] sm:$0xf]
        %v1513 = vld [vmem:[%s220 + $0x168] sm:$0xf]
        %v1514 = vld [vmem:[%s220 + $0x16c] sm:$0xf]
        %v1515 = vld [vmem:[%s220 + $0x170] sm:$0xf]
        %v1516 = vld [vmem:[%s220 + $0x174] sm:$0xf]
        %v1517 = vld [vmem:[%s220 + $0x178] sm:$0xf]
        %v1518 = vld [vmem:[%s220 + $0x17c] sm:$0xf]
        %v1519 = vld [vmem:[%s220 + $0x180] sm:$0xf]
        %v1520 = vld [vmem:[%s220 + $0x184] sm:$0xf]
        %v1521 = vld [vmem:[%s220 + $0x188] sm:$0xf]
        %v1522 = vld [vmem:[%s220 + $0x18c] sm:$0xf]
        %v1523 = vld [vmem:[%s220 + $0x190] sm:$0xf]
        %v1524 = vld [vmem:[%s220 + $0x194] sm:$0xf]
        %v1525 = vld [vmem:[%s220 + $0x198] sm:$0xf]
        %v1526 = vld [vmem:[%s220 + $0x19c] sm:$0xf]
        %v1527 = vld [vmem:[%s220 + $0x1a0] sm:$0xf]
        %v1528 = vld [vmem:[%s220 + $0x1a4] sm:$0xf]
        %v1529 = vld [vmem:[%s220 + $0x1a8] sm:$0xf]
        %v1530 = vld [vmem:[%s220 + $0x1ac] sm:$0xf]
        %v1531 = vld [vmem:[%s220 + $0x1b0] sm:$0xf]
        %v1532 = vld [vmem:[%s220 + $0x1b4] sm:$0xf]
        %v1533 = vld [vmem:[%s220 + $0x1b8] sm:$0xf]
        %v1534 = vld [vmem:[%s220 + $0x1bc] sm:$0xf]
        %v1535 = vld [vmem:[%s220 + $0x1c0] sm:$0xf]
        %v1536 = vld [vmem:[%s220 + $0x1c4] sm:$0xf]
        %v1537 = vld [vmem:[%s220 + $0x1c8] sm:$0xf]
        %v1538 = vld [vmem:[%s220 + $0x1cc] sm:$0xf]
        %v1539 = vld [vmem:[%s220 + $0x1d0] sm:$0xf]
        %v1540 = vld [vmem:[%s220 + $0x1d4] sm:$0xf]
        %v1541 = vld [vmem:[%s220 + $0x1d8] sm:$0xf]
        %v1542 = vld [vmem:[%s220 + $0x1dc] sm:$0xf]
        %v1543 = vld [vmem:[%s220 + $0x1e0] sm:$0xf]
        %v1544 = vld [vmem:[%s220 + $0x1e4] sm:$0xf]
        %v1545 = vld [vmem:[%s220 + $0x1e8] sm:$0xf]
        %v1546 = vld [vmem:[%s220 + $0x1ec] sm:$0xf]
        %v1547 = vld [vmem:[%s220 + $0x1f0] sm:$0xf]
        %v1548 = vld [vmem:[%s220 + $0x1f4] sm:$0xf]
        %v1549 = vld [vmem:[%s220 + $0x1f8] sm:$0xf]
        %v1550 = vld [vmem:[%s220 + $0x1fc] sm:$0xf]
        %v1551 = vunpack.c.l.bf16 %v1423
        %v1552 = vunpack.c.l.bf16 %v1424
        %v1553 = vunpack.c.l.bf16 %v1425
        %v1554 = vunpack.c.l.bf16 %v1426
        %v1555 = vunpack.c.l.bf16 %v1427
        %v1556 = vunpack.c.l.bf16 %v1428
        %v1557 = vunpack.c.l.bf16 %v1429
        %v1558 = vunpack.c.l.bf16 %v1430
        %v1559 = vunpack.c.l.bf16 %v1431
        %v1560 = vunpack.c.l.bf16 %v1432
        %v1561 = vunpack.c.l.bf16 %v1433
        %v1562 = vunpack.c.l.bf16 %v1434
        %v1563 = vunpack.c.l.bf16 %v1435
        %v1564 = vunpack.c.l.bf16 %v1436
        %v1565 = vunpack.c.l.bf16 %v1437
        %v1566 = vunpack.c.l.bf16 %v1438
        %v1567 = vunpack.c.l.bf16 %v1439
        %v1568 = vunpack.c.l.bf16 %v1440
        %v1569 = vunpack.c.l.bf16 %v1441
        %v1570 = vunpack.c.l.bf16 %v1442
        %v1571 = vunpack.c.l.bf16 %v1443
        %v1572 = vunpack.c.l.bf16 %v1444
        %v1573 = vunpack.c.l.bf16 %v1445
        %v1574 = vunpack.c.l.bf16 %v1446
        %v1575 = vunpack.c.l.bf16 %v1447
        %v1576 = vunpack.c.l.bf16 %v1448
        %v1577 = vunpack.c.l.bf16 %v1449
        %v1578 = vunpack.c.l.bf16 %v1450
        %v1579 = vunpack.c.l.bf16 %v1451
        %v1580 = vunpack.c.l.bf16 %v1452
        %v1581 = vunpack.c.l.bf16 %v1453
        %v1582 = vunpack.c.l.bf16 %v1454
        %v1583 = vunpack.c.l.bf16 %v1455
        %v1584 = vunpack.c.l.bf16 %v1456
        %v1585 = vunpack.c.l.bf16 %v1457
        %v1586 = vunpack.c.l.bf16 %v1458
        %v1587 = vunpack.c.l.bf16 %v1459
        %v1588 = vunpack.c.l.bf16 %v1460
        %v1589 = vunpack.c.l.bf16 %v1461
        %v1590 = vunpack.c.l.bf16 %v1462
        %v1591 = vunpack.c.l.bf16 %v1463
        %v1592 = vunpack.c.l.bf16 %v1464
        %v1593 = vunpack.c.l.bf16 %v1465
        %v1594 = vunpack.c.l.bf16 %v1466
        %v1595 = vunpack.c.l.bf16 %v1467
        %v1596 = vunpack.c.l.bf16 %v1468
        %v1597 = vunpack.c.l.bf16 %v1469
        %v1598 = vunpack.c.l.bf16 %v1470
        %v1599 = vunpack.c.l.bf16 %v1471
        %v1600 = vunpack.c.l.bf16 %v1472
        %v1601 = vunpack.c.l.bf16 %v1473
        %v1602 = vunpack.c.l.bf16 %v1474
        %v1603 = vunpack.c.l.bf16 %v1475
        %v1604 = vunpack.c.l.bf16 %v1476
        %v1605 = vunpack.c.l.bf16 %v1477
        %v1606 = vunpack.c.l.bf16 %v1478
        %v1607 = vunpack.c.l.bf16 %v1479
        %v1608 = vunpack.c.l.bf16 %v1480
        %v1609 = vunpack.c.l.bf16 %v1481
        %v1610 = vunpack.c.l.bf16 %v1482
        %v1611 = vunpack.c.l.bf16 %v1483
        %v1612 = vunpack.c.l.bf16 %v1484
        %v1613 = vunpack.c.l.bf16 %v1485
        %v1614 = vunpack.c.l.bf16 %v1486
        %v1615 = vunpack.c.l.bf16 %v1487
        %v1616 = vunpack.c.l.bf16 %v1488
        %v1617 = vunpack.c.l.bf16 %v1489
        %v1618 = vunpack.c.l.bf16 %v1490
        %v1619 = vunpack.c.l.bf16 %v1491
        %v1620 = vunpack.c.l.bf16 %v1492
        %v1621 = vunpack.c.l.bf16 %v1493
        %v1622 = vunpack.c.l.bf16 %v1494
        %v1623 = vunpack.c.l.bf16 %v1495
        %v1624 = vunpack.c.l.bf16 %v1496
        %v1625 = vunpack.c.l.bf16 %v1497
        %v1626 = vunpack.c.l.bf16 %v1498
        %v1627 = vunpack.c.l.bf16 %v1499
        %v1628 = vunpack.c.l.bf16 %v1500
        %v1629 = vunpack.c.l.bf16 %v1501
        %v1630 = vunpack.c.l.bf16 %v1502
        %v1631 = vunpack.c.l.bf16 %v1503
        %v1632 = vunpack.c.l.bf16 %v1504
        %v1633 = vunpack.c.l.bf16 %v1505
        %v1634 = vunpack.c.l.bf16 %v1506
        %v1635 = vunpack.c.l.bf16 %v1507
        %v1636 = vunpack.c.l.bf16 %v1508
        %v1637 = vunpack.c.l.bf16 %v1509
        %v1638 = vunpack.c.l.bf16 %v1510
        %v1639 = vunpack.c.l.bf16 %v1511
        %v1640 = vunpack.c.l.bf16 %v1512
        %v1641 = vunpack.c.l.bf16 %v1513
        %v1642 = vunpack.c.l.bf16 %v1514
        %v1643 = vunpack.c.l.bf16 %v1515
        %v1644 = vunpack.c.l.bf16 %v1516
        %v1645 = vunpack.c.l.bf16 %v1517
        %v1646 = vunpack.c.l.bf16 %v1518
        %v1647 = vunpack.c.l.bf16 %v1519
        %v1648 = vunpack.c.l.bf16 %v1520
        %v1649 = vunpack.c.l.bf16 %v1521
        %v1650 = vunpack.c.l.bf16 %v1522
        %v1651 = vunpack.c.l.bf16 %v1523
        %v1652 = vunpack.c.l.bf16 %v1524
        %v1653 = vunpack.c.l.bf16 %v1525
        %v1654 = vunpack.c.l.bf16 %v1526
        %v1655 = vunpack.c.l.bf16 %v1527
        %v1656 = vunpack.c.l.bf16 %v1528
        %v1657 = vunpack.c.l.bf16 %v1529
        %v1658 = vunpack.c.l.bf16 %v1530
        %v1659 = vunpack.c.l.bf16 %v1531
        %v1660 = vunpack.c.l.bf16 %v1532
        %v1661 = vunpack.c.l.bf16 %v1533
        %v1662 = vunpack.c.l.bf16 %v1534
        %v1663 = vunpack.c.l.bf16 %v1535
        %v1664 = vunpack.c.l.bf16 %v1536
        %v1665 = vunpack.c.l.bf16 %v1537
        %v1666 = vunpack.c.l.bf16 %v1538
        %v1667 = vunpack.c.l.bf16 %v1539
        %v1668 = vunpack.c.l.bf16 %v1540
        %v1669 = vunpack.c.l.bf16 %v1541
        %v1670 = vunpack.c.l.bf16 %v1542
        %v1671 = vunpack.c.l.bf16 %v1543
        %v1672 = vunpack.c.l.bf16 %v1544
        %v1673 = vunpack.c.l.bf16 %v1545
        %v1674 = vunpack.c.l.bf16 %v1546
        %v1675 = vunpack.c.l.bf16 %v1547
        %v1676 = vunpack.c.l.bf16 %v1548
        %v1677 = vunpack.c.l.bf16 %v1549
        %v1678 = vunpack.c.l.bf16 %v1550
        %v1679 = vmul.f32 %v1040, %v1551
        %v1680 = vmul.f32 %v1043, %v1552
        %v1681 = vmul.f32 %v1046, %v1553
        %v1682 = vmul.f32 %v1049, %v1554
        %v1683 = vmul.f32 %v1052, %v1555
        %v1684 = vmul.f32 %v1055, %v1556
        %v1685 = vmul.f32 %v1058, %v1557
        %v1686 = vmul.f32 %v1061, %v1558
        %v1687 = vmul.f32 %v1064, %v1559
        %v1688 = vmul.f32 %v1067, %v1560
        %v1689 = vmul.f32 %v1070, %v1561
        %v1690 = vmul.f32 %v1073, %v1562
        %v1691 = vmul.f32 %v1076, %v1563
        %v1692 = vmul.f32 %v1079, %v1564
        %v1693 = vmul.f32 %v1082, %v1565
        %v1694 = vmul.f32 %v1085, %v1566
        %v1695 = vmul.f32 %v1088, %v1567
        %v1696 = vmul.f32 %v1091, %v1568
        %v1697 = vmul.f32 %v1094, %v1569
        %v1698 = vmul.f32 %v1097, %v1570
        %v1699 = vmul.f32 %v1100, %v1571
        %v1700 = vmul.f32 %v1103, %v1572
        %v1701 = vmul.f32 %v1106, %v1573
        %v1702 = vmul.f32 %v1109, %v1574
        %v1703 = vmul.f32 %v1112, %v1575
        %v1704 = vmul.f32 %v1115, %v1576
        %v1705 = vmul.f32 %v1118, %v1577
        %v1706 = vmul.f32 %v1121, %v1578
        %v1707 = vmul.f32 %v1124, %v1579
        %v1708 = vmul.f32 %v1127, %v1580
        %v1709 = vmul.f32 %v1130, %v1581
        %v1710 = vmul.f32 %v1133, %v1582
        %v1711 = vmul.f32 %v1136, %v1583
        %v1712 = vmul.f32 %v1139, %v1584
        %v1713 = vmul.f32 %v1142, %v1585
        %v1714 = vmul.f32 %v1145, %v1586
        %v1715 = vmul.f32 %v1148, %v1587
        %v1716 = vmul.f32 %v1151, %v1588
        %v1717 = vmul.f32 %v1154, %v1589
        %v1718 = vmul.f32 %v1157, %v1590
        %v1719 = vmul.f32 %v1160, %v1591
        %v1720 = vmul.f32 %v1163, %v1592
        %v1721 = vmul.f32 %v1166, %v1593
        %v1722 = vmul.f32 %v1169, %v1594
        %v1723 = vmul.f32 %v1172, %v1595
        %v1724 = vmul.f32 %v1175, %v1596
        %v1725 = vmul.f32 %v1178, %v1597
        %v1726 = vmul.f32 %v1181, %v1598
        %v1727 = vmul.f32 %v1184, %v1599
        %v1728 = vmul.f32 %v1187, %v1600
        %v1729 = vmul.f32 %v1190, %v1601
        %v1730 = vmul.f32 %v1193, %v1602
        %v1731 = vmul.f32 %v1196, %v1603
        %v1732 = vmul.f32 %v1199, %v1604
        %v1733 = vmul.f32 %v1202, %v1605
        %v1734 = vmul.f32 %v1205, %v1606
        %v1735 = vmul.f32 %v1208, %v1607
        %v1736 = vmul.f32 %v1211, %v1608
        %v1737 = vmul.f32 %v1214, %v1609
        %v1738 = vmul.f32 %v1217, %v1610
        %v1739 = vmul.f32 %v1220, %v1611
        %v1740 = vmul.f32 %v1223, %v1612
        %v1741 = vmul.f32 %v1226, %v1613
        %v1742 = vmul.f32 %v1229, %v1614
        %v1743 = vmul.f32 %v1232, %v1615
        %v1744 = vmul.f32 %v1235, %v1616
        %v1745 = vmul.f32 %v1238, %v1617
        %v1746 = vmul.f32 %v1241, %v1618
        %v1747 = vmul.f32 %v1244, %v1619
        %v1748 = vmul.f32 %v1247, %v1620
        %v1749 = vmul.f32 %v1250, %v1621
        %v1750 = vmul.f32 %v1253, %v1622
        %v1751 = vmul.f32 %v1256, %v1623
        %v1752 = vmul.f32 %v1259, %v1624
        %v1753 = vmul.f32 %v1262, %v1625
        %v1754 = vmul.f32 %v1265, %v1626
        %v1755 = vmul.f32 %v1268, %v1627
        %v1756 = vmul.f32 %v1271, %v1628
        %v1757 = vmul.f32 %v1274, %v1629
        %v1758 = vmul.f32 %v1277, %v1630
        %v1759 = vmul.f32 %v1280, %v1631
        %v1760 = vmul.f32 %v1283, %v1632
        %v1761 = vmul.f32 %v1286, %v1633
        %v1762 = vmul.f32 %v1289, %v1634
        %v1763 = vmul.f32 %v1292, %v1635
        %v1764 = vmul.f32 %v1295, %v1636
        %v1765 = vmul.f32 %v1298, %v1637
        %v1766 = vmul.f32 %v1301, %v1638
        %v1767 = vmul.f32 %v1304, %v1639
        %v1768 = vmul.f32 %v1307, %v1640
        %v1769 = vmul.f32 %v1310, %v1641
        %v1770 = vmul.f32 %v1313, %v1642
        %v1771 = vmul.f32 %v1316, %v1643
        %v1772 = vmul.f32 %v1319, %v1644
        %v1773 = vmul.f32 %v1322, %v1645
        %v1774 = vmul.f32 %v1325, %v1646
        %v1775 = vmul.f32 %v1328, %v1647
        %v1776 = vmul.f32 %v1331, %v1648
        %v1777 = vmul.f32 %v1334, %v1649
        %v1778 = vmul.f32 %v1337, %v1650
        %v1779 = vmul.f32 %v1340, %v1651
        %v1780 = vmul.f32 %v1343, %v1652
        %v1781 = vmul.f32 %v1346, %v1653
        %v1782 = vmul.f32 %v1349, %v1654
        %v1783 = vmul.f32 %v1352, %v1655
        %v1784 = vmul.f32 %v1355, %v1656
        %v1785 = vmul.f32 %v1358, %v1657
        %v1786 = vmul.f32 %v1361, %v1658
        %v1787 = vmul.f32 %v1364, %v1659
        %v1788 = vmul.f32 %v1367, %v1660
        %v1789 = vmul.f32 %v1370, %v1661
        %v1790 = vmul.f32 %v1373, %v1662
        %v1791 = vmul.f32 %v1376, %v1663
        %v1792 = vmul.f32 %v1379, %v1664
        %v1793 = vmul.f32 %v1382, %v1665
        %v1794 = vmul.f32 %v1385, %v1666
        %v1795 = vmul.f32 %v1388, %v1667
        %v1796 = vmul.f32 %v1391, %v1668
        %v1797 = vmul.f32 %v1394, %v1669
        %v1798 = vmul.f32 %v1397, %v1670
        %v1799 = vmul.f32 %v1400, %v1671
        %v1800 = vmul.f32 %v1403, %v1672
        %v1801 = vmul.f32 %v1406, %v1673
        %v1802 = vmul.f32 %v1409, %v1674
        %v1803 = vmul.f32 %v1412, %v1675
        %v1804 = vmul.f32 %v1415, %v1676
        %v1805 = vmul.f32 %v1418, %v1677
        %v1806 = vmul.f32 %v1421, %v1678
        %v1807 = vpack.c.bf16 %v1680, %v1679
        %v1808 = vpack.c.bf16 %v1682, %v1681
        %v1809 = vpack.c.bf16 %v1684, %v1683
        %v1810 = vpack.c.bf16 %v1686, %v1685
        %v1811 = vpack.c.bf16 %v1688, %v1687
        %v1812 = vpack.c.bf16 %v1690, %v1689
        %v1813 = vpack.c.bf16 %v1692, %v1691
        %v1814 = vpack.c.bf16 %v1694, %v1693
        %v1815 = vpack.c.bf16 %v1696, %v1695
        %v1816 = vpack.c.bf16 %v1698, %v1697
        %v1817 = vpack.c.bf16 %v1700, %v1699
        %v1818 = vpack.c.bf16 %v1702, %v1701
        %v1819 = vpack.c.bf16 %v1704, %v1703
        %v1820 = vpack.c.bf16 %v1706, %v1705
        %v1821 = vpack.c.bf16 %v1708, %v1707
        %v1822 = vpack.c.bf16 %v1710, %v1709
        %v1823 = vpack.c.bf16 %v1712, %v1711
        %v1824 = vpack.c.bf16 %v1714, %v1713
        %v1825 = vpack.c.bf16 %v1716, %v1715
        %v1826 = vpack.c.bf16 %v1718, %v1717
        %v1827 = vpack.c.bf16 %v1720, %v1719
        %v1828 = vpack.c.bf16 %v1722, %v1721
        %v1829 = vpack.c.bf16 %v1724, %v1723
        %v1830 = vpack.c.bf16 %v1726, %v1725
        %v1831 = vpack.c.bf16 %v1728, %v1727
        %v1832 = vpack.c.bf16 %v1730, %v1729
        %v1833 = vpack.c.bf16 %v1732, %v1731
        %v1834 = vpack.c.bf16 %v1734, %v1733
        %v1835 = vpack.c.bf16 %v1736, %v1735
        %v1836 = vpack.c.bf16 %v1738, %v1737
        %v1837 = vpack.c.bf16 %v1740, %v1739
        %v1838 = vpack.c.bf16 %v1742, %v1741
        %v1839 = vpack.c.bf16 %v1744, %v1743
        %v1840 = vpack.c.bf16 %v1746, %v1745
        %v1841 = vpack.c.bf16 %v1748, %v1747
        %v1842 = vpack.c.bf16 %v1750, %v1749
        %v1843 = vpack.c.bf16 %v1752, %v1751
        %v1844 = vpack.c.bf16 %v1754, %v1753
        %v1845 = vpack.c.bf16 %v1756, %v1755
        %v1846 = vpack.c.bf16 %v1758, %v1757
        %v1847 = vpack.c.bf16 %v1760, %v1759
        %v1848 = vpack.c.bf16 %v1762, %v1761
        %v1849 = vpack.c.bf16 %v1764, %v1763
        %v1850 = vpack.c.bf16 %v1766, %v1765
        %v1851 = vpack.c.bf16 %v1768, %v1767
        %v1852 = vpack.c.bf16 %v1770, %v1769
        %v1853 = vpack.c.bf16 %v1772, %v1771
        %v1854 = vpack.c.bf16 %v1774, %v1773
        %v1855 = vpack.c.bf16 %v1776, %v1775
        %v1856 = vpack.c.bf16 %v1778, %v1777
        %v1857 = vpack.c.bf16 %v1780, %v1779
        %v1858 = vpack.c.bf16 %v1782, %v1781
        %v1859 = vpack.c.bf16 %v1784, %v1783
        %v1860 = vpack.c.bf16 %v1786, %v1785
        %v1861 = vpack.c.bf16 %v1788, %v1787
        %v1862 = vpack.c.bf16 %v1790, %v1789
        %v1863 = vpack.c.bf16 %v1792, %v1791
        %v1864 = vpack.c.bf16 %v1794, %v1793
        %v1865 = vpack.c.bf16 %v1796, %v1795
        %v1866 = vpack.c.bf16 %v1798, %v1797
        %v1867 = vpack.c.bf16 %v1800, %v1799
        %v1868 = vpack.c.bf16 %v1802, %v1801
        %v1869 = vpack.c.bf16 %v1804, %v1803
        %v1870 = vpack.c.bf16 %v1806, %v1805
        %v1871 = vld [vmem:[%s210] sm:$0xff]
        %v1872 = vlaneseq
        %v1873 = vshrl.u32 %v1872, 7
        %v1874 = vadd.s32 %v1873, 8
        %v1875 = vadd.s32 %v1873, 16
        %v1876 = vadd.s32 %v1873, 24
        %v1877 = vadd.s32 %v1873, 32
        %v1878 = vadd.s32 %v1873, 40
        %v1879 = vadd.s32 %v1873, 48
        %v1880 = vadd.s32 %v1873, 56
        %v1881 = vadd.s32 %v1873, 64
        %v1882 = vadd.s32 %v1873, 72
        %v1883 = vadd.s32 %v1873, 80
        %v1884 = vadd.s32 %v1873, 88
        %v1885 = vadd.s32 %v1873, 96
        %v1886 = vadd.s32 %v1873, 104
        %v1887 = vadd.s32 %v1873, 112
        %v1888 = vadd.s32 %v1873, 120
        %v1889 = vperm.slane %v1871, 0
        %v1890 = vperm.slane %v1871, 1
        %v1891 = vperm.slane %v1871, 2
        %v1892 = vperm.slane %v1871, 3
        %v1893 = vperm.slane %v1871, 4
        %v1894 = vperm.slane %v1871, 5
        %v1895 = vperm.slane %v1871, 6
        %v1896 = vperm.slane %v1871, 7
        %vm1897 = vcmp.eq.s32.totalorder %v1889, %v1873
        %vm1898 = vcmp.eq.s32.totalorder %v1890, %v1873
        %vm1899 = vcmp.eq.s32.totalorder %v1891, %v1873
        %vm1900 = vcmp.eq.s32.totalorder %v1892, %v1873
        %vm1901 = vcmp.eq.s32.totalorder %v1893, %v1873
        %vm1902 = vcmp.eq.s32.totalorder %v1894, %v1873
        %vm1903 = vcmp.eq.s32.totalorder %v1895, %v1873
        %vm1904 = vcmp.eq.s32.totalorder %v1896, %v1873
        %vm1905 = vcmp.eq.s32.totalorder %v1889, %v1874
        %vm1906 = vcmp.eq.s32.totalorder %v1890, %v1874
        %vm1907 = vcmp.eq.s32.totalorder %v1891, %v1874
        %vm1908 = vcmp.eq.s32.totalorder %v1892, %v1874
        %vm1909 = vcmp.eq.s32.totalorder %v1893, %v1874
        %vm1910 = vcmp.eq.s32.totalorder %v1894, %v1874
        %vm1911 = vcmp.eq.s32.totalorder %v1895, %v1874
        %vm1912 = vcmp.eq.s32.totalorder %v1896, %v1874
        %vm1913 = vcmp.eq.s32.totalorder %v1889, %v1875
        %vm1914 = vcmp.eq.s32.totalorder %v1890, %v1875
        %vm1915 = vcmp.eq.s32.totalorder %v1891, %v1875
        %vm1916 = vcmp.eq.s32.totalorder %v1892, %v1875
        %vm1917 = vcmp.eq.s32.totalorder %v1893, %v1875
        %vm1918 = vcmp.eq.s32.totalorder %v1894, %v1875
        %vm1919 = vcmp.eq.s32.totalorder %v1895, %v1875
        %vm1920 = vcmp.eq.s32.totalorder %v1896, %v1875
        %vm1921 = vcmp.eq.s32.totalorder %v1889, %v1876
        %vm1922 = vcmp.eq.s32.totalorder %v1890, %v1876
        %vm1923 = vcmp.eq.s32.totalorder %v1891, %v1876
        %vm1924 = vcmp.eq.s32.totalorder %v1892, %v1876
        %vm1925 = vcmp.eq.s32.totalorder %v1893, %v1876
        %vm1926 = vcmp.eq.s32.totalorder %v1894, %v1876
        %vm1927 = vcmp.eq.s32.totalorder %v1895, %v1876
        %vm1928 = vcmp.eq.s32.totalorder %v1896, %v1876
        %vm1929 = vcmp.eq.s32.totalorder %v1889, %v1877
        %vm1930 = vcmp.eq.s32.totalorder %v1890, %v1877
        %vm1931 = vcmp.eq.s32.totalorder %v1891, %v1877
        %vm1932 = vcmp.eq.s32.totalorder %v1892, %v1877
        %vm1933 = vcmp.eq.s32.totalorder %v1893, %v1877
        %vm1934 = vcmp.eq.s32.totalorder %v1894, %v1877
        %vm1935 = vcmp.eq.s32.totalorder %v1895, %v1877
        %vm1936 = vcmp.eq.s32.totalorder %v1896, %v1877
        %vm1937 = vcmp.eq.s32.totalorder %v1889, %v1878
        %vm1938 = vcmp.eq.s32.totalorder %v1890, %v1878
        %vm1939 = vcmp.eq.s32.totalorder %v1891, %v1878
        %vm1940 = vcmp.eq.s32.totalorder %v1892, %v1878
        %vm1941 = vcmp.eq.s32.totalorder %v1893, %v1878
        %vm1942 = vcmp.eq.s32.totalorder %v1894, %v1878
        %vm1943 = vcmp.eq.s32.totalorder %v1895, %v1878
        %vm1944 = vcmp.eq.s32.totalorder %v1896, %v1878
        %vm1945 = vcmp.eq.s32.totalorder %v1889, %v1879
        %vm1946 = vcmp.eq.s32.totalorder %v1890, %v1879
        %vm1947 = vcmp.eq.s32.totalorder %v1891, %v1879
        %vm1948 = vcmp.eq.s32.totalorder %v1892, %v1879
        %vm1949 = vcmp.eq.s32.totalorder %v1893, %v1879
        %vm1950 = vcmp.eq.s32.totalorder %v1894, %v1879
        %vm1951 = vcmp.eq.s32.totalorder %v1895, %v1879
        %vm1952 = vcmp.eq.s32.totalorder %v1896, %v1879
        %vm1953 = vcmp.eq.s32.totalorder %v1889, %v1880
        %vm1954 = vcmp.eq.s32.totalorder %v1890, %v1880
        %vm1955 = vcmp.eq.s32.totalorder %v1891, %v1880
        %vm1956 = vcmp.eq.s32.totalorder %v1892, %v1880
        %vm1957 = vcmp.eq.s32.totalorder %v1893, %v1880
        %vm1958 = vcmp.eq.s32.totalorder %v1894, %v1880
        %vm1959 = vcmp.eq.s32.totalorder %v1895, %v1880
        %vm1960 = vcmp.eq.s32.totalorder %v1896, %v1880
        %vm1961 = vcmp.eq.s32.totalorder %v1889, %v1881
        %vm1962 = vcmp.eq.s32.totalorder %v1890, %v1881
        %vm1963 = vcmp.eq.s32.totalorder %v1891, %v1881
        %vm1964 = vcmp.eq.s32.totalorder %v1892, %v1881
        %vm1965 = vcmp.eq.s32.totalorder %v1893, %v1881
        %vm1966 = vcmp.eq.s32.totalorder %v1894, %v1881
        %vm1967 = vcmp.eq.s32.totalorder %v1895, %v1881
        %vm1968 = vcmp.eq.s32.totalorder %v1896, %v1881
        %vm1969 = vcmp.eq.s32.totalorder %v1889, %v1882
        %vm1970 = vcmp.eq.s32.totalorder %v1890, %v1882
        %vm1971 = vcmp.eq.s32.totalorder %v1891, %v1882
        %vm1972 = vcmp.eq.s32.totalorder %v1892, %v1882
        %vm1973 = vcmp.eq.s32.totalorder %v1893, %v1882
        %vm1974 = vcmp.eq.s32.totalorder %v1894, %v1882
        %vm1975 = vcmp.eq.s32.totalorder %v1895, %v1882
        %vm1976 = vcmp.eq.s32.totalorder %v1896, %v1882
        %vm1977 = vcmp.eq.s32.totalorder %v1889, %v1883
        %vm1978 = vcmp.eq.s32.totalorder %v1890, %v1883
        %vm1979 = vcmp.eq.s32.totalorder %v1891, %v1883
        %vm1980 = vcmp.eq.s32.totalorder %v1892, %v1883
        %vm1981 = vcmp.eq.s32.totalorder %v1893, %v1883
        %vm1982 = vcmp.eq.s32.totalorder %v1894, %v1883
        %vm1983 = vcmp.eq.s32.totalorder %v1895, %v1883
        %vm1984 = vcmp.eq.s32.totalorder %v1896, %v1883
        %vm1985 = vcmp.eq.s32.totalorder %v1889, %v1884
        %vm1986 = vcmp.eq.s32.totalorder %v1890, %v1884
        %vm1987 = vcmp.eq.s32.totalorder %v1891, %v1884
        %vm1988 = vcmp.eq.s32.totalorder %v1892, %v1884
        %vm1989 = vcmp.eq.s32.totalorder %v1893, %v1884
        %vm1990 = vcmp.eq.s32.totalorder %v1894, %v1884
        %vm1991 = vcmp.eq.s32.totalorder %v1895, %v1884
        %vm1992 = vcmp.eq.s32.totalorder %v1896, %v1884
        %vm1993 = vcmp.eq.s32.totalorder %v1889, %v1885
        %vm1994 = vcmp.eq.s32.totalorder %v1890, %v1885
        %vm1995 = vcmp.eq.s32.totalorder %v1891, %v1885
        %vm1996 = vcmp.eq.s32.totalorder %v1892, %v1885
        %vm1997 = vcmp.eq.s32.totalorder %v1893, %v1885
        %vm1998 = vcmp.eq.s32.totalorder %v1894, %v1885
        %vm1999 = vcmp.eq.s32.totalorder %v1895, %v1885
        %vm2000 = vcmp.eq.s32.totalorder %v1896, %v1885
        %vm2001 = vcmp.eq.s32.totalorder %v1889, %v1886
        %vm2002 = vcmp.eq.s32.totalorder %v1890, %v1886
        %vm2003 = vcmp.eq.s32.totalorder %v1891, %v1886
        %vm2004 = vcmp.eq.s32.totalorder %v1892, %v1886
        %vm2005 = vcmp.eq.s32.totalorder %v1893, %v1886
        %vm2006 = vcmp.eq.s32.totalorder %v1894, %v1886
        %vm2007 = vcmp.eq.s32.totalorder %v1895, %v1886
        %vm2008 = vcmp.eq.s32.totalorder %v1896, %v1886
        %vm2009 = vcmp.eq.s32.totalorder %v1889, %v1887
        %vm2010 = vcmp.eq.s32.totalorder %v1890, %v1887
        %vm2011 = vcmp.eq.s32.totalorder %v1891, %v1887
        %vm2012 = vcmp.eq.s32.totalorder %v1892, %v1887
        %vm2013 = vcmp.eq.s32.totalorder %v1893, %v1887
        %vm2014 = vcmp.eq.s32.totalorder %v1894, %v1887
        %vm2015 = vcmp.eq.s32.totalorder %v1895, %v1887
        %vm2016 = vcmp.eq.s32.totalorder %v1896, %v1887
        %vm2017 = vcmp.eq.s32.totalorder %v1889, %v1888
        %vm2018 = vcmp.eq.s32.totalorder %v1890, %v1888
        %vm2019 = vcmp.eq.s32.totalorder %v1891, %v1888
        %vm2020 = vcmp.eq.s32.totalorder %v1892, %v1888
        %vm2021 = vcmp.eq.s32.totalorder %v1893, %v1888
        %vm2022 = vcmp.eq.s32.totalorder %v1894, %v1888
        %vm2023 = vcmp.eq.s32.totalorder %v1895, %v1888
        %vm2024 = vcmp.eq.s32.totalorder %v1896, %v1888
        %v2025 = vsel %vm1897, 1, 0
        %v2026 = vsel %vm1898, 1, 0
        %v2027 = vsel %vm1899, 1, 0
        %v2028 = vsel %vm1900, 1, 0
        %v2029 = vsel %vm1901, 1, 0
        %v2030 = vsel %vm1902, 1, 0
        %v2031 = vsel %vm1903, 1, 0
        %v2032 = vsel %vm1904, 1, 0
        %v2033 = vsel %vm1905, 1, 0
        %v2034 = vsel %vm1906, 1, 0
        %v2035 = vsel %vm1907, 1, 0
        %v2036 = vsel %vm1908, 1, 0
        %v2037 = vsel %vm1909, 1, 0
        %v2038 = vsel %vm1910, 1, 0
        %v2039 = vsel %vm1911, 1, 0
        %v2040 = vsel %vm1912, 1, 0
        %v2041 = vsel %vm1913, 1, 0
        %v2042 = vsel %vm1914, 1, 0
        %v2043 = vsel %vm1915, 1, 0
        %v2044 = vsel %vm1916, 1, 0
        %v2045 = vsel %vm1917, 1, 0
        %v2046 = vsel %vm1918, 1, 0
        %v2047 = vsel %vm1919, 1, 0
        %v2048 = vsel %vm1920, 1, 0
        %v2049 = vsel %vm1921, 1, 0
        %v2050 = vsel %vm1922, 1, 0
        %v2051 = vsel %vm1923, 1, 0
        %v2052 = vsel %vm1924, 1, 0
        %v2053 = vsel %vm1925, 1, 0
        %v2054 = vsel %vm1926, 1, 0
        %v2055 = vsel %vm1927, 1, 0
        %v2056 = vsel %vm1928, 1, 0
        %v2057 = vsel %vm1929, 1, 0
        %v2058 = vsel %vm1930, 1, 0
        %v2059 = vsel %vm1931, 1, 0
        %v2060 = vsel %vm1932, 1, 0
        %v2061 = vsel %vm1933, 1, 0
        %v2062 = vsel %vm1934, 1, 0
        %v2063 = vsel %vm1935, 1, 0
        %v2064 = vsel %vm1936, 1, 0
        %v2065 = vsel %vm1937, 1, 0
        %v2066 = vsel %vm1938, 1, 0
        %v2067 = vsel %vm1939, 1, 0
        %v2068 = vsel %vm1940, 1, 0
        %v2069 = vsel %vm1941, 1, 0
        %v2070 = vsel %vm1942, 1, 0
        %v2071 = vsel %vm1943, 1, 0
        %v2072 = vsel %vm1944, 1, 0
        %v2073 = vsel %vm1945, 1, 0
        %v2074 = vsel %vm1946, 1, 0
        %v2075 = vsel %vm1947, 1, 0
        %v2076 = vsel %vm1948, 1, 0
        %v2077 = vsel %vm1949, 1, 0
        %v2078 = vsel %vm1950, 1, 0
        %v2079 = vsel %vm1951, 1, 0
        %v2080 = vsel %vm1952, 1, 0
        %v2081 = vsel %vm1953, 1, 0
        %v2082 = vsel %vm1954, 1, 0
        %v2083 = vsel %vm1955, 1, 0
        %v2084 = vsel %vm1956, 1, 0
        %v2085 = vsel %vm1957, 1, 0
        %v2086 = vsel %vm1958, 1, 0
        %v2087 = vsel %vm1959, 1, 0
        %v2088 = vsel %vm1960, 1, 0
        %v2089 = vsel %vm1961, 1, 0
        %v2090 = vsel %vm1962, 1, 0
        %v2091 = vsel %vm1963, 1, 0
        %v2092 = vsel %vm1964, 1, 0
        %v2093 = vsel %vm1965, 1, 0
        %v2094 = vsel %vm1966, 1, 0
        %v2095 = vsel %vm1967, 1, 0
        %v2096 = vsel %vm1968, 1, 0
        %v2097 = vsel %vm1969, 1, 0
        %v2098 = vsel %vm1970, 1, 0
        %v2099 = vsel %vm1971, 1, 0
        %v2100 = vsel %vm1972, 1, 0
        %v2101 = vsel %vm1973, 1, 0
        %v2102 = vsel %vm1974, 1, 0
        %v2103 = vsel %vm1975, 1, 0
        %v2104 = vsel %vm1976, 1, 0
        %v2105 = vsel %vm1977, 1, 0
        %v2106 = vsel %vm1978, 1, 0
        %v2107 = vsel %vm1979, 1, 0
        %v2108 = vsel %vm1980, 1, 0
        %v2109 = vsel %vm1981, 1, 0
        %v2110 = vsel %vm1982, 1, 0
        %v2111 = vsel %vm1983, 1, 0
        %v2112 = vsel %vm1984, 1, 0
        %v2113 = vsel %vm1985, 1, 0
        %v2114 = vsel %vm1986, 1, 0
        %v2115 = vsel %vm1987, 1, 0
        %v2116 = vsel %vm1988, 1, 0
        %v2117 = vsel %vm1989, 1, 0
        %v2118 = vsel %vm1990, 1, 0
        %v2119 = vsel %vm1991, 1, 0
        %v2120 = vsel %vm1992, 1, 0
        %v2121 = vsel %vm1993, 1, 0
        %v2122 = vsel %vm1994, 1, 0
        %v2123 = vsel %vm1995, 1, 0
        %v2124 = vsel %vm1996, 1, 0
        %v2125 = vsel %vm1997, 1, 0
        %v2126 = vsel %vm1998, 1, 0
        %v2127 = vsel %vm1999, 1, 0
        %v2128 = vsel %vm2000, 1, 0
        %v2129 = vsel %vm2001, 1, 0
        %v2130 = vsel %vm2002, 1, 0
        %v2131 = vsel %vm2003, 1, 0
        %v2132 = vsel %vm2004, 1, 0
        %v2133 = vsel %vm2005, 1, 0
        %v2134 = vsel %vm2006, 1, 0
        %v2135 = vsel %vm2007, 1, 0
        %v2136 = vsel %vm2008, 1, 0
        %v2137 = vsel %vm2009, 1, 0
        %v2138 = vsel %vm2010, 1, 0
        %v2139 = vsel %vm2011, 1, 0
        %v2140 = vsel %vm2012, 1, 0
        %v2141 = vsel %vm2013, 1, 0
        %v2142 = vsel %vm2014, 1, 0
        %v2143 = vsel %vm2015, 1, 0
        %v2144 = vsel %vm2016, 1, 0
        %v2145 = vsel %vm2017, 1, 0
        %v2146 = vsel %vm2018, 1, 0
        %v2147 = vsel %vm2019, 1, 0
        %v2148 = vsel %vm2020, 1, 0
        %v2149 = vsel %vm2021, 1, 0
        %v2150 = vsel %vm2022, 1, 0
        %v2151 = vsel %vm2023, 1, 0
        %v2152 = vsel %vm2024, 1, 0
        %v2153 = vcvt.s32.f32 %v2025
        %v2154 = vcvt.s32.f32 %v2026
        %v2155 = vcvt.s32.f32 %v2027
        %v2156 = vcvt.s32.f32 %v2028
        %v2157 = vcvt.s32.f32 %v2029
        %v2158 = vcvt.s32.f32 %v2030
        %v2159 = vcvt.s32.f32 %v2031
        %v2160 = vcvt.s32.f32 %v2032
        %v2161 = vcvt.s32.f32 %v2033
        %v2162 = vcvt.s32.f32 %v2034
        %v2163 = vcvt.s32.f32 %v2035
        %v2164 = vcvt.s32.f32 %v2036
        %v2165 = vcvt.s32.f32 %v2037
        %v2166 = vcvt.s32.f32 %v2038
        %v2167 = vcvt.s32.f32 %v2039
        %v2168 = vcvt.s32.f32 %v2040
        %v2169 = vcvt.s32.f32 %v2041
        %v2170 = vcvt.s32.f32 %v2042
        %v2171 = vcvt.s32.f32 %v2043
        %v2172 = vcvt.s32.f32 %v2044
        %v2173 = vcvt.s32.f32 %v2045
        %v2174 = vcvt.s32.f32 %v2046
        %v2175 = vcvt.s32.f32 %v2047
        %v2176 = vcvt.s32.f32 %v2048
        %v2177 = vcvt.s32.f32 %v2049
        %v2178 = vcvt.s32.f32 %v2050
        %v2179 = vcvt.s32.f32 %v2051
        %v2180 = vcvt.s32.f32 %v2052
        %v2181 = vcvt.s32.f32 %v2053
        %v2182 = vcvt.s32.f32 %v2054
        %v2183 = vcvt.s32.f32 %v2055
        %v2184 = vcvt.s32.f32 %v2056
        %v2185 = vcvt.s32.f32 %v2057
        %v2186 = vcvt.s32.f32 %v2058
        %v2187 = vcvt.s32.f32 %v2059
        %v2188 = vcvt.s32.f32 %v2060
        %v2189 = vcvt.s32.f32 %v2061
        %v2190 = vcvt.s32.f32 %v2062
        %v2191 = vcvt.s32.f32 %v2063
        %v2192 = vcvt.s32.f32 %v2064
        %v2193 = vcvt.s32.f32 %v2065
        %v2194 = vcvt.s32.f32 %v2066
        %v2195 = vcvt.s32.f32 %v2067
        %v2196 = vcvt.s32.f32 %v2068
        %v2197 = vcvt.s32.f32 %v2069
        %v2198 = vcvt.s32.f32 %v2070
        %v2199 = vcvt.s32.f32 %v2071
        %v2200 = vcvt.s32.f32 %v2072
        %v2201 = vcvt.s32.f32 %v2073
        %v2202 = vcvt.s32.f32 %v2074
        %v2203 = vcvt.s32.f32 %v2075
        %v2204 = vcvt.s32.f32 %v2076
        %v2205 = vcvt.s32.f32 %v2077
        %v2206 = vcvt.s32.f32 %v2078
        %v2207 = vcvt.s32.f32 %v2079
        %v2208 = vcvt.s32.f32 %v2080
        %v2209 = vcvt.s32.f32 %v2081
        %v2210 = vcvt.s32.f32 %v2082
        %v2211 = vcvt.s32.f32 %v2083
        %v2212 = vcvt.s32.f32 %v2084
        %v2213 = vcvt.s32.f32 %v2085
        %v2214 = vcvt.s32.f32 %v2086
        %v2215 = vcvt.s32.f32 %v2087
        %v2216 = vcvt.s32.f32 %v2088
        %v2217 = vcvt.s32.f32 %v2089
        %v2218 = vcvt.s32.f32 %v2090
        %v2219 = vcvt.s32.f32 %v2091
        %v2220 = vcvt.s32.f32 %v2092
        %v2221 = vcvt.s32.f32 %v2093
        %v2222 = vcvt.s32.f32 %v2094
        %v2223 = vcvt.s32.f32 %v2095
        %v2224 = vcvt.s32.f32 %v2096
        %v2225 = vcvt.s32.f32 %v2097
        %v2226 = vcvt.s32.f32 %v2098
        %v2227 = vcvt.s32.f32 %v2099
        %v2228 = vcvt.s32.f32 %v2100
        %v2229 = vcvt.s32.f32 %v2101
        %v2230 = vcvt.s32.f32 %v2102
        %v2231 = vcvt.s32.f32 %v2103
        %v2232 = vcvt.s32.f32 %v2104
        %v2233 = vcvt.s32.f32 %v2105
        %v2234 = vcvt.s32.f32 %v2106
        %v2235 = vcvt.s32.f32 %v2107
        %v2236 = vcvt.s32.f32 %v2108
        %v2237 = vcvt.s32.f32 %v2109
        %v2238 = vcvt.s32.f32 %v2110
        %v2239 = vcvt.s32.f32 %v2111
        %v2240 = vcvt.s32.f32 %v2112
        %v2241 = vcvt.s32.f32 %v2113
        %v2242 = vcvt.s32.f32 %v2114
        %v2243 = vcvt.s32.f32 %v2115
        %v2244 = vcvt.s32.f32 %v2116
        %v2245 = vcvt.s32.f32 %v2117
        %v2246 = vcvt.s32.f32 %v2118
        %v2247 = vcvt.s32.f32 %v2119
        %v2248 = vcvt.s32.f32 %v2120
        %v2249 = vcvt.s32.f32 %v2121
        %v2250 = vcvt.s32.f32 %v2122
        %v2251 = vcvt.s32.f32 %v2123
        %v2252 = vcvt.s32.f32 %v2124
        %v2253 = vcvt.s32.f32 %v2125
        %v2254 = vcvt.s32.f32 %v2126
        %v2255 = vcvt.s32.f32 %v2127
        %v2256 = vcvt.s32.f32 %v2128
        %v2257 = vcvt.s32.f32 %v2129
        %v2258 = vcvt.s32.f32 %v2130
        %v2259 = vcvt.s32.f32 %v2131
        %v2260 = vcvt.s32.f32 %v2132
        %v2261 = vcvt.s32.f32 %v2133
        %v2262 = vcvt.s32.f32 %v2134
        %v2263 = vcvt.s32.f32 %v2135
        %v2264 = vcvt.s32.f32 %v2136
        %v2265 = vcvt.s32.f32 %v2137
        %v2266 = vcvt.s32.f32 %v2138
        %v2267 = vcvt.s32.f32 %v2139
        %v2268 = vcvt.s32.f32 %v2140
        %v2269 = vcvt.s32.f32 %v2141
        %v2270 = vcvt.s32.f32 %v2142
        %v2271 = vcvt.s32.f32 %v2143
        %v2272 = vcvt.s32.f32 %v2144
        %v2273 = vcvt.s32.f32 %v2145
        %v2274 = vcvt.s32.f32 %v2146
        %v2275 = vcvt.s32.f32 %v2147
        %v2276 = vcvt.s32.f32 %v2148
        %v2277 = vcvt.s32.f32 %v2149
        %v2278 = vcvt.s32.f32 %v2150
        %v2279 = vcvt.s32.f32 %v2151
        %v2280 = vcvt.s32.f32 %v2152
        %v2281 = vpack.c.bf16 %v2161, %v2153
        %v2282 = vpack.c.bf16 %v2162, %v2154
        %v2283 = vpack.c.bf16 %v2163, %v2155
        %v2284 = vpack.c.bf16 %v2164, %v2156
        %v2285 = vpack.c.bf16 %v2165, %v2157
        %v2286 = vpack.c.bf16 %v2166, %v2158
        %v2287 = vpack.c.bf16 %v2167, %v2159
        %v2288 = vpack.c.bf16 %v2168, %v2160
        %v2289 = vpack.c.bf16 %v2177, %v2169
        %v2290 = vpack.c.bf16 %v2178, %v2170
        %v2291 = vpack.c.bf16 %v2179, %v2171
        %v2292 = vpack.c.bf16 %v2180, %v2172
        %v2293 = vpack.c.bf16 %v2181, %v2173
        %v2294 = vpack.c.bf16 %v2182, %v2174
        %v2295 = vpack.c.bf16 %v2183, %v2175
        %v2296 = vpack.c.bf16 %v2184, %v2176
        %v2297 = vpack.c.bf16 %v2193, %v2185
        %v2298 = vpack.c.bf16 %v2194, %v2186
        %v2299 = vpack.c.bf16 %v2195, %v2187
        %v2300 = vpack.c.bf16 %v2196, %v2188
        %v2301 = vpack.c.bf16 %v2197, %v2189
        %v2302 = vpack.c.bf16 %v2198, %v2190
        %v2303 = vpack.c.bf16 %v2199, %v2191
        %v2304 = vpack.c.bf16 %v2200, %v2192
        %v2305 = vpack.c.bf16 %v2209, %v2201
        %v2306 = vpack.c.bf16 %v2210, %v2202
        %v2307 = vpack.c.bf16 %v2211, %v2203
        %v2308 = vpack.c.bf16 %v2212, %v2204
        %v2309 = vpack.c.bf16 %v2213, %v2205
        %v2310 = vpack.c.bf16 %v2214, %v2206
        %v2311 = vpack.c.bf16 %v2215, %v2207
        %v2312 = vpack.c.bf16 %v2216, %v2208
        %v2313 = vpack.c.bf16 %v2225, %v2217
        %v2314 = vpack.c.bf16 %v2226, %v2218
        %v2315 = vpack.c.bf16 %v2227, %v2219
        %v2316 = vpack.c.bf16 %v2228, %v2220
        %v2317 = vpack.c.bf16 %v2229, %v2221
        %v2318 = vpack.c.bf16 %v2230, %v2222
        %v2319 = vpack.c.bf16 %v2231, %v2223
        %v2320 = vpack.c.bf16 %v2232, %v2224
        %v2321 = vpack.c.bf16 %v2241, %v2233
        %v2322 = vpack.c.bf16 %v2242, %v2234
        %v2323 = vpack.c.bf16 %v2243, %v2235
        %v2324 = vpack.c.bf16 %v2244, %v2236
        %v2325 = vpack.c.bf16 %v2245, %v2237
        %v2326 = vpack.c.bf16 %v2246, %v2238
        %v2327 = vpack.c.bf16 %v2247, %v2239
        %v2328 = vpack.c.bf16 %v2248, %v2240
        %v2329 = vpack.c.bf16 %v2257, %v2249
        %v2330 = vpack.c.bf16 %v2258, %v2250
        %v2331 = vpack.c.bf16 %v2259, %v2251
        %v2332 = vpack.c.bf16 %v2260, %v2252
        %v2333 = vpack.c.bf16 %v2261, %v2253
        %v2334 = vpack.c.bf16 %v2262, %v2254
        %v2335 = vpack.c.bf16 %v2263, %v2255
        %v2336 = vpack.c.bf16 %v2264, %v2256
        %v2337 = vpack.c.bf16 %v2273, %v2265
        %v2338 = vpack.c.bf16 %v2274, %v2266
        %v2339 = vpack.c.bf16 %v2275, %v2267
        %v2340 = vpack.c.bf16 %v2276, %v2268
        %v2341 = vpack.c.bf16 %v2277, %v2269
        %v2342 = vpack.c.bf16 %v2278, %v2270
        %v2343 = vpack.c.bf16 %v2279, %v2271
        %v2344 = vpack.c.bf16 %v2280, %v2272
        %v2345 = vld [vmem:[#allocation2] sm:$0xff]
        %v2346 = vld [vmem:[#allocation2 + $0x8] sm:$0xff]
        %v2347 = vld [vmem:[#allocation2 + $0x10] sm:$0xff]
        %v2348 = vld [vmem:[#allocation2 + $0x18] sm:$0xff]
        %v2349 = vld [vmem:[#allocation2 + $0x20] sm:$0xff]
        %v2350 = vld [vmem:[#allocation2 + $0x28] sm:$0xff]
        %v2351 = vld [vmem:[#allocation2 + $0x30] sm:$0xff]
        %v2352 = vld [vmem:[#allocation2 + $0x38] sm:$0xff]
        %v2353 = vld [vmem:[#allocation2 + $0x40] sm:$0xff]
        %v2354 = vld [vmem:[#allocation2 + $0x48] sm:$0xff]
        %v2355 = vld [vmem:[#allocation2 + $0x50] sm:$0xff]
        %v2356 = vld [vmem:[#allocation2 + $0x58] sm:$0xff]
        %v2357 = vld [vmem:[#allocation2 + $0x60] sm:$0xff]
        %v2358 = vld [vmem:[#allocation2 + $0x68] sm:$0xff]
        %v2359 = vld [vmem:[#allocation2 + $0x70] sm:$0xff]
        %v2360 = vld [vmem:[#allocation2 + $0x78] sm:$0xff]
        %2361 = vmatpush.bf16.msra.mxu0 %v1814
        %2362 = vmatpush.bf16.msra.mxu0 %v1813
        %2363 = vmatpush.bf16.msra.mxu0 %v1812
        %2364 = vmatpush.bf16.msra.mxu0 %v1811
        %2365 = vmatpush.bf16.msra.mxu0 %v1810
        %2366 = vmatpush.bf16.msra.mxu0 %v1809
        %2367 = vmatpush.bf16.msra.mxu0 %v1808
        %2368 = vmatpush.bf16.msra.mxu0 %v1807
        %2369 = vmatmul.bf16.gmra.mxu0 %v2281
        %v2370 = vpop.f32.mrf.mxu0
        %v2371 = vadd.f32 0.0, %v2370
        %v2372 = vpop.f32.mrf.mxu0
        %v2373 = vadd.f32 0.0, %v2372
        %2374 = vmatmul.bf16.gmra.mxu0 %v2289
        %v2375 = vpop.f32.mrf.mxu0
        %v2376 = vadd.f32 0.0, %v2375
        %v2377 = vpop.f32.mrf.mxu0
        %v2378 = vadd.f32 0.0, %v2377
        %2379 = vmatmul.bf16.gmra.mxu0 %v2297
        %v2380 = vpop.f32.mrf.mxu0
        %v2381 = vadd.f32 0.0, %v2380
        %v2382 = vpop.f32.mrf.mxu0
        %v2383 = vadd.f32 0.0, %v2382
        %2384 = vmatmul.bf16.gmra.mxu0 %v2305
        %v2385 = vpop.f32.mrf.mxu0
        %v2386 = vadd.f32 0.0, %v2385
        %v2387 = vpop.f32.mrf.mxu0
        %v2388 = vadd.f32 0.0, %v2387
        %2389 = vmatmul.bf16.gmra.mxu0 %v2313
        %v2390 = vpop.f32.mrf.mxu0
        %v2391 = vadd.f32 0.0, %v2390
        %v2392 = vpop.f32.mrf.mxu0
        %v2393 = vadd.f32 0.0, %v2392
        %2394 = vmatmul.bf16.gmra.mxu0 %v2321
        %v2395 = vpop.f32.mrf.mxu0
        %v2396 = vadd.f32 0.0, %v2395
        %v2397 = vpop.f32.mrf.mxu0
        %v2398 = vadd.f32 0.0, %v2397
        %2399 = vmatmul.bf16.gmra.mxu0 %v2329
        %v2400 = vpop.f32.mrf.mxu0
        %v2401 = vadd.f32 0.0, %v2400
        %v2402 = vpop.f32.mrf.mxu0
        %v2403 = vadd.f32 0.0, %v2402
        %2404 = vmatmul.bf16.gmra.mxu0 %v2337
        %v2405 = vpop.f32.mrf.mxu0
        %v2406 = vadd.f32 0.0, %v2405
        %v2407 = vpop.f32.mrf.mxu0
        %v2408 = vadd.f32 0.0, %v2407
        %2409 = vdwg.mxu0
        %2410 = vmatpush.bf16.msra.mxu0 %v1822
        %2411 = vmatpush.bf16.msra.mxu0 %v1821
        %2412 = vmatpush.bf16.msra.mxu0 %v1820
        %2413 = vmatpush.bf16.msra.mxu0 %v1819
        %2414 = vmatpush.bf16.msra.mxu0 %v1818
        %2415 = vmatpush.bf16.msra.mxu0 %v1817
        %2416 = vmatpush.bf16.msra.mxu0 %v1816
        %2417 = vmatpush.bf16.msra.mxu0 %v1815
        %2418 = vmatmul.bf16.gmra.mxu0 %v2282
        %v2419 = vpop.f32.mrf.mxu0
        %v2420 = vadd.f32 %v2371, %v2419
        %v2421 = vpop.f32.mrf.mxu0
        %v2422 = vadd.f32 %v2373, %v2421
        %2423 = vmatmul.bf16.gmra.mxu0 %v2290
        %v2424 = vpop.f32.mrf.mxu0
        %v2425 = vadd.f32 %v2376, %v2424
        %v2426 = vpop.f32.mrf.mxu0
        %v2427 = vadd.f32 %v2378, %v2426
        %2428 = vmatmul.bf16.gmra.mxu0 %v2298
        %v2429 = vpop.f32.mrf.mxu0
        %v2430 = vadd.f32 %v2381, %v2429
        %v2431 = vpop.f32.mrf.mxu0
        %v2432 = vadd.f32 %v2383, %v2431
        %2433 = vmatmul.bf16.gmra.mxu0 %v2306
        %v2434 = vpop.f32.mrf.mxu0
        %v2435 = vadd.f32 %v2386, %v2434
        %v2436 = vpop.f32.mrf.mxu0
        %v2437 = vadd.f32 %v2388, %v2436
        %2438 = vmatmul.bf16.gmra.mxu0 %v2314
        %v2439 = vpop.f32.mrf.mxu0
        %v2440 = vadd.f32 %v2391, %v2439
        %v2441 = vpop.f32.mrf.mxu0
        %v2442 = vadd.f32 %v2393, %v2441
        %2443 = vmatmul.bf16.gmra.mxu0 %v2322
        %v2444 = vpop.f32.mrf.mxu0
        %v2445 = vadd.f32 %v2396, %v2444
        %v2446 = vpop.f32.mrf.mxu0
        %v2447 = vadd.f32 %v2398, %v2446
        %2448 = vmatmul.bf16.gmra.mxu0 %v2330
        %v2449 = vpop.f32.mrf.mxu0
        %v2450 = vadd.f32 %v2401, %v2449
        %v2451 = vpop.f32.mrf.mxu0
        %v2452 = vadd.f32 %v2403, %v2451
        %2453 = vmatmul.bf16.gmra.mxu0 %v2338
        %v2454 = vpop.f32.mrf.mxu0
        %v2455 = vadd.f32 %v2406, %v2454
        %v2456 = vpop.f32.mrf.mxu0
        %v2457 = vadd.f32 %v2408, %v2456
        %2458 = vdwg.mxu0
        %2459 = vmatpush.bf16.msra.mxu0 %v1830
        %2460 = vmatpush.bf16.msra.mxu0 %v1829
        %2461 = vmatpush.bf16.msra.mxu0 %v1828
        %2462 = vmatpush.bf16.msra.mxu0 %v1827
        %2463 = vmatpush.bf16.msra.mxu0 %v1826
        %2464 = vmatpush.bf16.msra.mxu0 %v1825
        %2465 = vmatpush.bf16.msra.mxu0 %v1824
        %2466 = vmatpush.bf16.msra.mxu0 %v1823
        %2467 = vmatmul.bf16.gmra.mxu0 %v2283
        %v2468 = vpop.f32.mrf.mxu0
        %v2469 = vadd.f32 %v2420, %v2468
        %v2470 = vpop.f32.mrf.mxu0
        %v2471 = vadd.f32 %v2422, %v2470
        %2472 = vmatmul.bf16.gmra.mxu0 %v2291
        %v2473 = vpop.f32.mrf.mxu0
        %v2474 = vadd.f32 %v2425, %v2473
        %v2475 = vpop.f32.mrf.mxu0
        %v2476 = vadd.f32 %v2427, %v2475
        %2477 = vmatmul.bf16.gmra.mxu0 %v2299
        %v2478 = vpop.f32.mrf.mxu0
        %v2479 = vadd.f32 %v2430, %v2478
        %v2480 = vpop.f32.mrf.mxu0
        %v2481 = vadd.f32 %v2432, %v2480
        %2482 = vmatmul.bf16.gmra.mxu0 %v2307
        %v2483 = vpop.f32.mrf.mxu0
        %v2484 = vadd.f32 %v2435, %v2483
        %v2485 = vpop.f32.mrf.mxu0
        %v2486 = vadd.f32 %v2437, %v2485
        %2487 = vmatmul.bf16.gmra.mxu0 %v2315
        %v2488 = vpop.f32.mrf.mxu0
        %v2489 = vadd.f32 %v2440, %v2488
        %v2490 = vpop.f32.mrf.mxu0
        %v2491 = vadd.f32 %v2442, %v2490
        %2492 = vmatmul.bf16.gmra.mxu0 %v2323
        %v2493 = vpop.f32.mrf.mxu0
        %v2494 = vadd.f32 %v2445, %v2493
        %v2495 = vpop.f32.mrf.mxu0
        %v2496 = vadd.f32 %v2447, %v2495
        %2497 = vmatmul.bf16.gmra.mxu0 %v2331
        %v2498 = vpop.f32.mrf.mxu0
        %v2499 = vadd.f32 %v2450, %v2498
        %v2500 = vpop.f32.mrf.mxu0
        %v2501 = vadd.f32 %v2452, %v2500
        %2502 = vmatmul.bf16.gmra.mxu0 %v2339
        %v2503 = vpop.f32.mrf.mxu0
        %v2504 = vadd.f32 %v2455, %v2503
        %v2505 = vpop.f32.mrf.mxu0
        %v2506 = vadd.f32 %v2457, %v2505
        %2507 = vdwg.mxu0
        %2508 = vmatpush.bf16.msra.mxu0 %v1838
        %2509 = vmatpush.bf16.msra.mxu0 %v1837
        %2510 = vmatpush.bf16.msra.mxu0 %v1836
        %2511 = vmatpush.bf16.msra.mxu0 %v1835
        %2512 = vmatpush.bf16.msra.mxu0 %v1834
        %2513 = vmatpush.bf16.msra.mxu0 %v1833
        %2514 = vmatpush.bf16.msra.mxu0 %v1832
        %2515 = vmatpush.bf16.msra.mxu0 %v1831
        %2516 = vmatmul.bf16.gmra.mxu0 %v2284
        %v2517 = vpop.f32.mrf.mxu0
        %v2518 = vadd.f32 %v2469, %v2517
        %v2519 = vpop.f32.mrf.mxu0
        %v2520 = vadd.f32 %v2471, %v2519
        %2521 = vmatmul.bf16.gmra.mxu0 %v2292
        %v2522 = vpop.f32.mrf.mxu0
        %v2523 = vadd.f32 %v2474, %v2522
        %v2524 = vpop.f32.mrf.mxu0
        %v2525 = vadd.f32 %v2476, %v2524
        %2526 = vmatmul.bf16.gmra.mxu0 %v2300
        %v2527 = vpop.f32.mrf.mxu0
        %v2528 = vadd.f32 %v2479, %v2527
        %v2529 = vpop.f32.mrf.mxu0
        %v2530 = vadd.f32 %v2481, %v2529
        %2531 = vmatmul.bf16.gmra.mxu0 %v2308
        %v2532 = vpop.f32.mrf.mxu0
        %v2533 = vadd.f32 %v2484, %v2532
        %v2534 = vpop.f32.mrf.mxu0
        %v2535 = vadd.f32 %v2486, %v2534
        %2536 = vmatmul.bf16.gmra.mxu0 %v2316
        %v2537 = vpop.f32.mrf.mxu0
        %v2538 = vadd.f32 %v2489, %v2537
        %v2539 = vpop.f32.mrf.mxu0
        %v2540 = vadd.f32 %v2491, %v2539
        %2541 = vmatmul.bf16.gmra.mxu0 %v2324
        %v2542 = vpop.f32.mrf.mxu0
        %v2543 = vadd.f32 %v2494, %v2542
        %v2544 = vpop.f32.mrf.mxu0
        %v2545 = vadd.f32 %v2496, %v2544
        %2546 = vmatmul.bf16.gmra.mxu0 %v2332
        %v2547 = vpop.f32.mrf.mxu0
        %v2548 = vadd.f32 %v2499, %v2547
        %v2549 = vpop.f32.mrf.mxu0
        %v2550 = vadd.f32 %v2501, %v2549
        %2551 = vmatmul.bf16.gmra.mxu0 %v2340
        %v2552 = vpop.f32.mrf.mxu0
        %v2553 = vadd.f32 %v2504, %v2552
        %v2554 = vpop.f32.mrf.mxu0
        %v2555 = vadd.f32 %v2506, %v2554
        %2556 = vdwg.mxu0
        %2557 = vmatpush.bf16.msra.mxu0 %v1846
        %2558 = vmatpush.bf16.msra.mxu0 %v1845
        %2559 = vmatpush.bf16.msra.mxu0 %v1844
        %2560 = vmatpush.bf16.msra.mxu0 %v1843
        %2561 = vmatpush.bf16.msra.mxu0 %v1842
        %2562 = vmatpush.bf16.msra.mxu0 %v1841
        %2563 = vmatpush.bf16.msra.mxu0 %v1840
        %2564 = vmatpush.bf16.msra.mxu0 %v1839
        %2565 = vmatmul.bf16.gmra.mxu0 %v2285
        %v2566 = vpop.f32.mrf.mxu0
        %v2567 = vadd.f32 %v2518, %v2566
        %v2568 = vpop.f32.mrf.mxu0
        %v2569 = vadd.f32 %v2520, %v2568
        %2570 = vmatmul.bf16.gmra.mxu0 %v2293
        %v2571 = vpop.f32.mrf.mxu0
        %v2572 = vadd.f32 %v2523, %v2571
        %v2573 = vpop.f32.mrf.mxu0
        %v2574 = vadd.f32 %v2525, %v2573
        %2575 = vmatmul.bf16.gmra.mxu0 %v2301
        %v2576 = vpop.f32.mrf.mxu0
        %v2577 = vadd.f32 %v2528, %v2576
        %v2578 = vpop.f32.mrf.mxu0
        %v2579 = vadd.f32 %v2530, %v2578
        %2580 = vmatmul.bf16.gmra.mxu0 %v2309
        %v2581 = vpop.f32.mrf.mxu0
        %v2582 = vadd.f32 %v2533, %v2581
        %v2583 = vpop.f32.mrf.mxu0
        %v2584 = vadd.f32 %v2535, %v2583
        %2585 = vmatmul.bf16.gmra.mxu0 %v2317
        %v2586 = vpop.f32.mrf.mxu0
        %v2587 = vadd.f32 %v2538, %v2586
        %v2588 = vpop.f32.mrf.mxu0
        %v2589 = vadd.f32 %v2540, %v2588
        %2590 = vmatmul.bf16.gmra.mxu0 %v2325
        %v2591 = vpop.f32.mrf.mxu0
        %v2592 = vadd.f32 %v2543, %v2591
        %v2593 = vpop.f32.mrf.mxu0
        %v2594 = vadd.f32 %v2545, %v2593
        %2595 = vmatmul.bf16.gmra.mxu0 %v2333
        %v2596 = vpop.f32.mrf.mxu0
        %v2597 = vadd.f32 %v2548, %v2596
        %v2598 = vpop.f32.mrf.mxu0
        %v2599 = vadd.f32 %v2550, %v2598
        %2600 = vmatmul.bf16.gmra.mxu0 %v2341
        %v2601 = vpop.f32.mrf.mxu0
        %v2602 = vadd.f32 %v2553, %v2601
        %v2603 = vpop.f32.mrf.mxu0
        %v2604 = vadd.f32 %v2555, %v2603
        %2605 = vdwg.mxu0
        %2606 = vmatpush.bf16.msra.mxu0 %v1854
        %2607 = vmatpush.bf16.msra.mxu0 %v1853
        %2608 = vmatpush.bf16.msra.mxu0 %v1852
        %2609 = vmatpush.bf16.msra.mxu0 %v1851
        %2610 = vmatpush.bf16.msra.mxu0 %v1850
        %2611 = vmatpush.bf16.msra.mxu0 %v1849
        %2612 = vmatpush.bf16.msra.mxu0 %v1848
        %2613 = vmatpush.bf16.msra.mxu0 %v1847
        %2614 = vmatmul.bf16.gmra.mxu0 %v2286
        %v2615 = vpop.f32.mrf.mxu0
        %v2616 = vadd.f32 %v2567, %v2615
        %v2617 = vpop.f32.mrf.mxu0
        %v2618 = vadd.f32 %v2569, %v2617
        %2619 = vmatmul.bf16.gmra.mxu0 %v2294
        %v2620 = vpop.f32.mrf.mxu0
        %v2621 = vadd.f32 %v2572, %v2620
        %v2622 = vpop.f32.mrf.mxu0
        %v2623 = vadd.f32 %v2574, %v2622
        %2624 = vmatmul.bf16.gmra.mxu0 %v2302
        %v2625 = vpop.f32.mrf.mxu0
        %v2626 = vadd.f32 %v2577, %v2625
        %v2627 = vpop.f32.mrf.mxu0
        %v2628 = vadd.f32 %v2579, %v2627
        %2629 = vmatmul.bf16.gmra.mxu0 %v2310
        %v2630 = vpop.f32.mrf.mxu0
        %v2631 = vadd.f32 %v2582, %v2630
        %v2632 = vpop.f32.mrf.mxu0
        %v2633 = vadd.f32 %v2584, %v2632
        %2634 = vmatmul.bf16.gmra.mxu0 %v2318
        %v2635 = vpop.f32.mrf.mxu0
        %v2636 = vadd.f32 %v2587, %v2635
        %v2637 = vpop.f32.mrf.mxu0
        %v2638 = vadd.f32 %v2589, %v2637
        %2639 = vmatmul.bf16.gmra.mxu0 %v2326
        %v2640 = vpop.f32.mrf.mxu0
        %v2641 = vadd.f32 %v2592, %v2640
        %v2642 = vpop.f32.mrf.mxu0
        %v2643 = vadd.f32 %v2594, %v2642
        %2644 = vmatmul.bf16.gmra.mxu0 %v2334
        %v2645 = vpop.f32.mrf.mxu0
        %v2646 = vadd.f32 %v2597, %v2645
        %v2647 = vpop.f32.mrf.mxu0
        %v2648 = vadd.f32 %v2599, %v2647
        %2649 = vmatmul.bf16.gmra.mxu0 %v2342
        %v2650 = vpop.f32.mrf.mxu0
        %v2651 = vadd.f32 %v2602, %v2650
        %v2652 = vpop.f32.mrf.mxu0
        %v2653 = vadd.f32 %v2604, %v2652
        %2654 = vdwg.mxu0
        %2655 = vmatpush.bf16.msra.mxu0 %v1862
        %2656 = vmatpush.bf16.msra.mxu0 %v1861
        %2657 = vmatpush.bf16.msra.mxu0 %v1860
        %2658 = vmatpush.bf16.msra.mxu0 %v1859
        %2659 = vmatpush.bf16.msra.mxu0 %v1858
        %2660 = vmatpush.bf16.msra.mxu0 %v1857
        %2661 = vmatpush.bf16.msra.mxu0 %v1856
        %2662 = vmatpush.bf16.msra.mxu0 %v1855
        %2663 = vmatmul.bf16.gmra.mxu0 %v2287
        %v2664 = vpop.f32.mrf.mxu0
        %v2665 = vadd.f32 %v2616, %v2664
        %v2666 = vpop.f32.mrf.mxu0
        %v2667 = vadd.f32 %v2618, %v2666
        %2668 = vmatmul.bf16.gmra.mxu0 %v2295
        %v2669 = vpop.f32.mrf.mxu0
        %v2670 = vadd.f32 %v2621, %v2669
        %v2671 = vpop.f32.mrf.mxu0
        %v2672 = vadd.f32 %v2623, %v2671
        %2673 = vmatmul.bf16.gmra.mxu0 %v2303
        %v2674 = vpop.f32.mrf.mxu0
        %v2675 = vadd.f32 %v2626, %v2674
        %v2676 = vpop.f32.mrf.mxu0
        %v2677 = vadd.f32 %v2628, %v2676
        %2678 = vmatmul.bf16.gmra.mxu0 %v2311
        %v2679 = vpop.f32.mrf.mxu0
        %v2680 = vadd.f32 %v2631, %v2679
        %v2681 = vpop.f32.mrf.mxu0
        %v2682 = vadd.f32 %v2633, %v2681
        %2683 = vmatmul.bf16.gmra.mxu0 %v2319
        %v2684 = vpop.f32.mrf.mxu0
        %v2685 = vadd.f32 %v2636, %v2684
        %v2686 = vpop.f32.mrf.mxu0
        %v2687 = vadd.f32 %v2638, %v2686
        %2688 = vmatmul.bf16.gmra.mxu0 %v2327
        %v2689 = vpop.f32.mrf.mxu0
        %v2690 = vadd.f32 %v2641, %v2689
        %v2691 = vpop.f32.mrf.mxu0
        %v2692 = vadd.f32 %v2643, %v2691
        %2693 = vmatmul.bf16.gmra.mxu0 %v2335
        %v2694 = vpop.f32.mrf.mxu0
        %v2695 = vadd.f32 %v2646, %v2694
        %v2696 = vpop.f32.mrf.mxu0
        %v2697 = vadd.f32 %v2648, %v2696
        %2698 = vmatmul.bf16.gmra.mxu0 %v2343
        %v2699 = vpop.f32.mrf.mxu0
        %v2700 = vadd.f32 %v2651, %v2699
        %v2701 = vpop.f32.mrf.mxu0
        %v2702 = vadd.f32 %v2653, %v2701
        %2703 = vdwg.mxu0
        %2704 = vmatpush.bf16.msra.mxu0 %v1870
        %2705 = vmatpush.bf16.msra.mxu0 %v1869
        %2706 = vmatpush.bf16.msra.mxu0 %v1868
        %2707 = vmatpush.bf16.msra.mxu0 %v1867
        %2708 = vmatpush.bf16.msra.mxu0 %v1866
        %2709 = vmatpush.bf16.msra.mxu0 %v1865
        %2710 = vmatpush.bf16.msra.mxu0 %v1864
        %2711 = vmatpush.bf16.msra.mxu0 %v1863
        %2712 = vmatmul.bf16.gmra.mxu0 %v2288
        %v2713 = vpop.f32.mrf.mxu0
        %v2714 = vadd.f32 %v2665, %v2713
        %v2715 = vpop.f32.mrf.mxu0
        %v2716 = vadd.f32 %v2667, %v2715
        %2717 = vmatmul.bf16.gmra.mxu0 %v2296
        %v2718 = vpop.f32.mrf.mxu0
        %v2719 = vadd.f32 %v2670, %v2718
        %v2720 = vpop.f32.mrf.mxu0
        %v2721 = vadd.f32 %v2672, %v2720
        %2722 = vmatmul.bf16.gmra.mxu0 %v2304
        %v2723 = vpop.f32.mrf.mxu0
        %v2724 = vadd.f32 %v2675, %v2723
        %v2725 = vpop.f32.mrf.mxu0
        %v2726 = vadd.f32 %v2677, %v2725
        %2727 = vmatmul.bf16.gmra.mxu0 %v2312
        %v2728 = vpop.f32.mrf.mxu0
        %v2729 = vadd.f32 %v2680, %v2728
        %v2730 = vpop.f32.mrf.mxu0
        %v2731 = vadd.f32 %v2682, %v2730
        %2732 = vmatmul.bf16.gmra.mxu0 %v2320
        %v2733 = vpop.f32.mrf.mxu0
        %v2734 = vadd.f32 %v2685, %v2733
        %v2735 = vpop.f32.mrf.mxu0
        %v2736 = vadd.f32 %v2687, %v2735
        %2737 = vmatmul.bf16.gmra.mxu0 %v2328
        %v2738 = vpop.f32.mrf.mxu0
        %v2739 = vadd.f32 %v2690, %v2738
        %v2740 = vpop.f32.mrf.mxu0
        %v2741 = vadd.f32 %v2692, %v2740
        %2742 = vmatmul.bf16.gmra.mxu0 %v2336
        %v2743 = vpop.f32.mrf.mxu0
        %v2744 = vadd.f32 %v2695, %v2743
        %v2745 = vpop.f32.mrf.mxu0
        %v2746 = vadd.f32 %v2697, %v2745
        %2747 = vmatmul.bf16.gmra.mxu0 %v2344
        %v2748 = vpop.f32.mrf.mxu0
        %v2749 = vadd.f32 %v2700, %v2748
        %v2750 = vpop.f32.mrf.mxu0
        %v2751 = vadd.f32 %v2702, %v2750
        %2752 = vdwg.mxu0
        %v2753 = vadd.f32 %v2345, %v2714
        %v2754 = vadd.f32 %v2346, %v2716
        %v2755 = vadd.f32 %v2347, %v2719
        %v2756 = vadd.f32 %v2348, %v2721
        %v2757 = vadd.f32 %v2349, %v2724
        %v2758 = vadd.f32 %v2350, %v2726
        %v2759 = vadd.f32 %v2351, %v2729
        %v2760 = vadd.f32 %v2352, %v2731
        %v2761 = vadd.f32 %v2353, %v2734
        %v2762 = vadd.f32 %v2354, %v2736
        %v2763 = vadd.f32 %v2355, %v2739
        %v2764 = vadd.f32 %v2356, %v2741
        %v2765 = vadd.f32 %v2357, %v2744
        %v2766 = vadd.f32 %v2358, %v2746
        %v2767 = vadd.f32 %v2359, %v2749
        %v2768 = vadd.f32 %v2360, %v2751
        %2769 = vst [vmem:[#allocation2] sm:$0xff] %v2753
        %2770 = vst [vmem:[#allocation2 + $0x8] sm:$0xff] %v2754
        %2771 = vst [vmem:[#allocation2 + $0x10] sm:$0xff] %v2755
        %2772 = vst [vmem:[#allocation2 + $0x18] sm:$0xff] %v2756
        %2773 = vst [vmem:[#allocation2 + $0x20] sm:$0xff] %v2757
        %2774 = vst [vmem:[#allocation2 + $0x28] sm:$0xff] %v2758
        %2775 = vst [vmem:[#allocation2 + $0x30] sm:$0xff] %v2759
        %2776 = vst [vmem:[#allocation2 + $0x38] sm:$0xff] %v2760
        %2777 = vst [vmem:[#allocation2 + $0x40] sm:$0xff] %v2761
        %2778 = vst [vmem:[#allocation2 + $0x48] sm:$0xff] %v2762
        %2779 = vst [vmem:[#allocation2 + $0x50] sm:$0xff] %v2763
        %2780 = vst [vmem:[#allocation2 + $0x58] sm:$0xff] %v2764
        %2781 = vst [vmem:[#allocation2 + $0x60] sm:$0xff] %v2765
        %2782 = vst [vmem:[#allocation2 + $0x68] sm:$0xff] %v2766
        %2783 = vst [vmem:[#allocation2 + $0x70] sm:$0xff] %v2767
        %2784 = vst [vmem:[#allocation2 + $0x78] sm:$0xff] %v2768
        %p2785 = scmp.eq.s32.totalorder %s25, 1
        // Predicated region
        $region91: #{tpu_custom_call.1} parent=31 // pred_check
          %p2786 = pneg %p2785
        $region92: #{tpu_custom_call.1} parent=31 // pred_check_branch
          %2788 = sbr.rel (%p2786) target = $region94
        $region93: #{tpu_custom_call.1} parent=31 // pred_region
          %v2789 = vld [vmem:[#allocation2] sm:$0xff]
          %v2790 = vld [vmem:[#allocation2 + $0x8] sm:$0xff]
          %v2791 = vld [vmem:[#allocation2 + $0x10] sm:$0xff]
          %v2792 = vld [vmem:[#allocation2 + $0x18] sm:$0xff]
          %v2793 = vld [vmem:[#allocation2 + $0x20] sm:$0xff]
          %v2794 = vld [vmem:[#allocation2 + $0x28] sm:$0xff]
          %v2795 = vld [vmem:[#allocation2 + $0x30] sm:$0xff]
          %v2796 = vld [vmem:[#allocation2 + $0x38] sm:$0xff]
          %v2797 = vld [vmem:[#allocation2 + $0x40] sm:$0xff]
          %v2798 = vld [vmem:[#allocation2 + $0x48] sm:$0xff]
          %v2799 = vld [vmem:[#allocation2 + $0x50] sm:$0xff]
          %v2800 = vld [vmem:[#allocation2 + $0x58] sm:$0xff]
          %v2801 = vld [vmem:[#allocation2 + $0x60] sm:$0xff]
          %v2802 = vld [vmem:[#allocation2 + $0x68] sm:$0xff]
          %v2803 = vld [vmem:[#allocation2 + $0x70] sm:$0xff]
          %v2804 = vld [vmem:[#allocation2 + $0x78] sm:$0xff]
          %v2805 = vld [vmem:[#allocation4] sm:$0xff]
          %v2806 = vld [vmem:[#allocation4 + $0x8] sm:$0xff]
          %v2807 = vld [vmem:[#allocation4 + $0x10] sm:$0xff]
          %v2808 = vld [vmem:[#allocation4 + $0x18] sm:$0xff]
          %v2809 = vld [vmem:[#allocation4 + $0x20] sm:$0xff]
          %v2810 = vld [vmem:[#allocation4 + $0x28] sm:$0xff]
          %v2811 = vld [vmem:[#allocation4 + $0x30] sm:$0xff]
          %v2812 = vld [vmem:[#allocation4 + $0x38] sm:$0xff]
          %v2813 = vld [vmem:[#allocation4 + $0x40] sm:$0xff]
          %v2814 = vld [vmem:[#allocation4 + $0x48] sm:$0xff]
          %v2815 = vld [vmem:[#allocation4 + $0x50] sm:$0xff]
          %v2816 = vld [vmem:[#allocation4 + $0x58] sm:$0xff]
          %v2817 = vld [vmem:[#allocation4 + $0x60] sm:$0xff]
          %v2818 = vld [vmem:[#allocation4 + $0x68] sm:$0xff]
          %v2819 = vld [vmem:[#allocation4 + $0x70] sm:$0xff]
          %v2820 = vld [vmem:[#allocation4 + $0x78] sm:$0xff]
          %v2821 = vld [vmem:[#allocation5] sm:$0x1]
          %v2823 = vperm.slane %v2821, 0
          %2825 = vmatpush.msra.mxu0 %v2820
          %2826 = vmatpush.msra.mxu0 %v2819
          %2827 = vmatpush.msra.mxu0 %v2818
          %2828 = vmatpush.msra.mxu0 %v2817
          %2829 = vmatpush.msra.mxu0 %v2816
          %2830 = vmatpush.msra.mxu0 %v2815
          %2831 = vmatpush.msra.mxu0 %v2814
          %2832 = vmatpush.msra.mxu0 %v2813
          %2833 = vmatpush.msra.mxu0 %v2812
          %2834 = vmatpush.msra.mxu0 %v2811
          %2835 = vmatpush.msra.mxu0 %v2810
          %2836 = vmatpush.msra.mxu0 %v2809
          %2837 = vmatpush.msra.mxu0 %v2808
          %2838 = vmatpush.msra.mxu0 %v2807
          %2839 = vmatpush.msra.mxu0 %v2806
          %2840 = vmatpush.msra.mxu0 %v2805
          %2841 = vmatmul.f32.gmra.mxu0 %v2789
          %v2842 = vpop.f32.mrf.mxu0
          %v2843 = vadd.f32 %v2823, %v2842
          %2844 = vmatmul.f32.gmra.mxu0 %v2790
          %v2845 = vpop.f32.mrf.mxu0
          %v2846 = vadd.f32 %v2823, %v2845
          %2847 = vmatmul.f32.gmra.mxu0 %v2791
          %v2848 = vpop.f32.mrf.mxu0
          %v2849 = vadd.f32 %v2823, %v2848
          %2850 = vmatmul.f32.gmra.mxu0 %v2792
          %v2851 = vpop.f32.mrf.mxu0
          %v2852 = vadd.f32 %v2823, %v2851
          %2853 = vmatmul.f32.gmra.mxu0 %v2793
          %v2854 = vpop.f32.mrf.mxu0
          %v2855 = vadd.f32 %v2823, %v2854
          %2856 = vmatmul.f32.gmra.mxu0 %v2794
          %v2857 = vpop.f32.mrf.mxu0
          %v2858 = vadd.f32 %v2823, %v2857
          %2859 = vmatmul.f32.gmra.mxu0 %v2795
          %v2860 = vpop.f32.mrf.mxu0
          %v2861 = vadd.f32 %v2823, %v2860
          %2862 = vmatmul.f32.gmra.mxu0 %v2796
          %v2863 = vpop.f32.mrf.mxu0
          %v2864 = vadd.f32 %v2823, %v2863
          %2865 = vmatmul.f32.gmra.mxu0 %v2797
          %v2866 = vpop.f32.mrf.mxu0
          %v2867 = vadd.f32 %v2823, %v2866
          %2868 = vmatmul.f32.gmra.mxu0 %v2798
          %v2869 = vpop.f32.mrf.mxu0
          %v2870 = vadd.f32 %v2823, %v2869
          %2871 = vmatmul.f32.gmra.mxu0 %v2799
          %v2872 = vpop.f32.mrf.mxu0
          %v2873 = vadd.f32 %v2823, %v2872
          %2874 = vmatmul.f32.gmra.mxu0 %v2800
          %v2875 = vpop.f32.mrf.mxu0
          %v2876 = vadd.f32 %v2823, %v2875
          %2877 = vmatmul.f32.gmra.mxu0 %v2801
          %v2878 = vpop.f32.mrf.mxu0
          %v2879 = vadd.f32 %v2823, %v2878
          %2880 = vmatmul.f32.gmra.mxu0 %v2802
          %v2881 = vpop.f32.mrf.mxu0
          %v2882 = vadd.f32 %v2823, %v2881
          %2883 = vmatmul.f32.gmra.mxu0 %v2803
          %v2884 = vpop.f32.mrf.mxu0
          %v2885 = vadd.f32 %v2823, %v2884
          %2886 = vmatmul.f32.gmra.mxu0 %v2804
          %v2887 = vpop.f32.mrf.mxu0
          %v2888 = vadd.f32 %v2823, %v2887
          %2889 = vdwg.mxu0
          %v2890 = vxor.u32 %v2843, 2147483648
          %v2891 = vxor.u32 %v2846, 2147483648
          %v2892 = vxor.u32 %v2849, 2147483648
          %v2893 = vxor.u32 %v2852, 2147483648
          %v2894 = vxor.u32 %v2855, 2147483648
          %v2895 = vxor.u32 %v2858, 2147483648
          %v2896 = vxor.u32 %v2861, 2147483648
          %v2897 = vxor.u32 %v2864, 2147483648
          %v2898 = vxor.u32 %v2867, 2147483648
          %v2899 = vxor.u32 %v2870, 2147483648
          %v2900 = vxor.u32 %v2873, 2147483648
          %v2901 = vxor.u32 %v2876, 2147483648
          %v2902 = vxor.u32 %v2879, 2147483648
          %v2903 = vxor.u32 %v2882, 2147483648
          %v2904 = vxor.u32 %v2885, 2147483648
          %v2905 = vxor.u32 %v2888, 2147483648
          %v2906 = vmul.f32 %v2890, 1.442695
          %v2907 = vpow.pop %v2906
          %v2908 = vmul.f32 %v2891, 1.442695
          %v2909 = vpow.pop %v2908
          %v2910 = vmul.f32 %v2892, 1.442695
          %v2911 = vpow.pop %v2910
          %v2912 = vmul.f32 %v2893, 1.442695
          %v2913 = vpow.pop %v2912
          %v2914 = vmul.f32 %v2894, 1.442695
          %v2915 = vpow.pop %v2914
          %v2916 = vmul.f32 %v2895, 1.442695
          %v2917 = vpow.pop %v2916
          %v2918 = vmul.f32 %v2896, 1.442695
          %v2919 = vpow.pop %v2918
          %v2920 = vmul.f32 %v2897, 1.442695
          %v2921 = vpow.pop %v2920
          %v2922 = vmul.f32 %v2898, 1.442695
          %v2923 = vpow.pop %v2922
          %v2924 = vmul.f32 %v2899, 1.442695
          %v2925 = vpow.pop %v2924
          %v2926 = vmul.f32 %v2900, 1.442695
          %v2927 = vpow.pop %v2926
          %v2928 = vmul.f32 %v2901, 1.442695
          %v2929 = vpow.pop %v2928
          %v2930 = vmul.f32 %v2902, 1.442695
          %v2931 = vpow.pop %v2930
          %v2932 = vmul.f32 %v2903, 1.442695
          %v2933 = vpow.pop %v2932
          %v2934 = vmul.f32 %v2904, 1.442695
          %v2935 = vpow.pop %v2934
          %v2936 = vmul.f32 %v2905, 1.442695
          %v2937 = vpow.pop %v2936
          %v2938 = vadd.f32 %v2907, 1.0
          %v2939 = vadd.f32 %v2909, 1.0
          %v2940 = vadd.f32 %v2911, 1.0
          %v2941 = vadd.f32 %v2913, 1.0
          %v2942 = vadd.f32 %v2915, 1.0
          %v2943 = vadd.f32 %v2917, 1.0
          %v2944 = vadd.f32 %v2919, 1.0
          %v2945 = vadd.f32 %v2921, 1.0
          %v2946 = vadd.f32 %v2923, 1.0
          %v2947 = vadd.f32 %v2925, 1.0
          %v2948 = vadd.f32 %v2927, 1.0
          %v2949 = vadd.f32 %v2929, 1.0
          %v2950 = vadd.f32 %v2931, 1.0
          %v2951 = vadd.f32 %v2933, 1.0
          %v2952 = vadd.f32 %v2935, 1.0
          %v2953 = vadd.f32 %v2937, 1.0
          %v2954 = vrcp.pop %v2938
          %v2955 = vmul.f32 %v2938, %v2954
          %v2956 = vsub.f32 1.0, %v2955
          %v2957 = vmul.f32 %v2954, %v2956
          %v2958 = vadd.f32 %v2954, %v2957
          %vm2959 = vweird.f32 %v2938
          %vm2960 = vweird.f32 %v2954
          %vm2961 = vmor %vm2959, %vm2960
          %v2962 = vsel %vm2961, %v2954, %v2958
          %v2963 = vand.u32 2147483647, %v2938
          %vm2964 = vcmp.eq.f32.partialorder %v2963, 8.507059e+37
          %v2965 = vand.u32 %v2938, 2147483648
          %v2966 = vor.u32 1.1754944e-38, %v2965
          %v2967 = vsel %vm2964, %v2966, %v2962
          %v2968 = vmul.f32 1.0, %v2967
          %v2969 = vrcp.pop %v2939
          %v2970 = vmul.f32 %v2939, %v2969
          %v2971 = vsub.f32 1.0, %v2970
          %v2972 = vmul.f32 %v2969, %v2971
          %v2973 = vadd.f32 %v2969, %v2972
          %vm2974 = vweird.f32 %v2939
          %vm2975 = vweird.f32 %v2969
          %vm2976 = vmor %vm2974, %vm2975
          %v2977 = vsel %vm2976, %v2969, %v2973
          %v2978 = vand.u32 2147483647, %v2939
          %vm2979 = vcmp.eq.f32.partialorder %v2978, 8.507059e+37
          %v2980 = vand.u32 %v2939, 2147483648
          %v2981 = vor.u32 1.1754944e-38, %v2980
          %v2982 = vsel %vm2979, %v2981, %v2977
          %v2983 = vmul.f32 1.0, %v2982
          %v2984 = vrcp.pop %v2940
          %v2985 = vmul.f32 %v2940, %v2984
          %v2986 = vsub.f32 1.0, %v2985
          %v2987 = vmul.f32 %v2984, %v2986
          %v2988 = vadd.f32 %v2984, %v2987
          %vm2989 = vweird.f32 %v2940
          %vm2990 = vweird.f32 %v2984
          %vm2991 = vmor %vm2989, %vm2990
          %v2992 = vsel %vm2991, %v2984, %v2988
          %v2993 = vand.u32 2147483647, %v2940
          %vm2994 = vcmp.eq.f32.partialorder %v2993, 8.507059e+37
          %v2995 = vand.u32 %v2940, 2147483648
          %v2996 = vor.u32 1.1754944e-38, %v2995
          %v2997 = vsel %vm2994, %v2996, %v2992
          %v2998 = vmul.f32 1.0, %v2997
          %v2999 = vrcp.pop %v2941
          %v3000 = vmul.f32 %v2941, %v2999
          %v3001 = vsub.f32 1.0, %v3000
          %v3002 = vmul.f32 %v2999, %v3001
          %v3003 = vadd.f32 %v2999, %v3002
          %vm3004 = vweird.f32 %v2941
          %vm3005 = vweird.f32 %v2999
          %vm3006 = vmor %vm3004, %vm3005
          %v3007 = vsel %vm3006, %v2999, %v3003
          %v3008 = vand.u32 2147483647, %v2941
          %vm3009 = vcmp.eq.f32.partialorder %v3008, 8.507059e+37
          %v3010 = vand.u32 %v2941, 2147483648
          %v3011 = vor.u32 1.1754944e-38, %v3010
          %v3012 = vsel %vm3009, %v3011, %v3007
          %v3013 = vmul.f32 1.0, %v3012
          %v3014 = vrcp.pop %v2942
          %v3015 = vmul.f32 %v2942, %v3014
          %v3016 = vsub.f32 1.0, %v3015
          %v3017 = vmul.f32 %v3014, %v3016
          %v3018 = vadd.f32 %v3014, %v3017
          %vm3019 = vweird.f32 %v2942
          %vm3020 = vweird.f32 %v3014
          %vm3021 = vmor %vm3019, %vm3020
          %v3022 = vsel %vm3021, %v3014, %v3018
          %v3023 = vand.u32 2147483647, %v2942
          %vm3024 = vcmp.eq.f32.partialorder %v3023, 8.507059e+37
          %v3025 = vand.u32 %v2942, 2147483648
          %v3026 = vor.u32 1.1754944e-38, %v3025
          %v3027 = vsel %vm3024, %v3026, %v3022
          %v3028 = vmul.f32 1.0, %v3027
          %v3029 = vrcp.pop %v2943
          %v3030 = vmul.f32 %v2943, %v3029
          %v3031 = vsub.f32 1.0, %v3030
          %v3032 = vmul.f32 %v3029, %v3031
          %v3033 = vadd.f32 %v3029, %v3032
          %vm3034 = vweird.f32 %v2943
          %vm3035 = vweird.f32 %v3029
          %vm3036 = vmor %vm3034, %vm3035
          %v3037 = vsel %vm3036, %v3029, %v3033
          %v3038 = vand.u32 2147483647, %v2943
          %vm3039 = vcmp.eq.f32.partialorder %v3038, 8.507059e+37
          %v3040 = vand.u32 %v2943, 2147483648
          %v3041 = vor.u32 1.1754944e-38, %v3040
          %v3042 = vsel %vm3039, %v3041, %v3037
          %v3043 = vmul.f32 1.0, %v3042
          %v3044 = vrcp.pop %v2944
          %v3045 = vmul.f32 %v2944, %v3044
          %v3046 = vsub.f32 1.0, %v3045
          %v3047 = vmul.f32 %v3044, %v3046
          %v3048 = vadd.f32 %v3044, %v3047
          %vm3049 = vweird.f32 %v2944
          %vm3050 = vweird.f32 %v3044
          %vm3051 = vmor %vm3049, %vm3050
          %v3052 = vsel %vm3051, %v3044, %v3048
          %v3053 = vand.u32 2147483647, %v2944
          %vm3054 = vcmp.eq.f32.partialorder %v3053, 8.507059e+37
          %v3055 = vand.u32 %v2944, 2147483648
          %v3056 = vor.u32 1.1754944e-38, %v3055
          %v3057 = vsel %vm3054, %v3056, %v3052
          %v3058 = vmul.f32 1.0, %v3057
          %v3059 = vrcp.pop %v2945
          %v3060 = vmul.f32 %v2945, %v3059
          %v3061 = vsub.f32 1.0, %v3060
          %v3062 = vmul.f32 %v3059, %v3061
          %v3063 = vadd.f32 %v3059, %v3062
          %vm3064 = vweird.f32 %v2945
          %vm3065 = vweird.f32 %v3059
          %vm3066 = vmor %vm3064, %vm3065
          %v3067 = vsel %vm3066, %v3059, %v3063
          %v3068 = vand.u32 2147483647, %v2945
          %vm3069 = vcmp.eq.f32.partialorder %v3068, 8.507059e+37
          %v3070 = vand.u32 %v2945, 2147483648
          %v3071 = vor.u32 1.1754944e-38, %v3070
          %v3072 = vsel %vm3069, %v3071, %v3067
          %v3073 = vmul.f32 1.0, %v3072
          %v3074 = vrcp.pop %v2946
          %v3075 = vmul.f32 %v2946, %v3074
          %v3076 = vsub.f32 1.0, %v3075
          %v3077 = vmul.f32 %v3074, %v3076
          %v3078 = vadd.f32 %v3074, %v3077
          %vm3079 = vweird.f32 %v2946
          %vm3080 = vweird.f32 %v3074
          %vm3081 = vmor %vm3079, %vm3080
          %v3082 = vsel %vm3081, %v3074, %v3078
          %v3083 = vand.u32 2147483647, %v2946
          %vm3084 = vcmp.eq.f32.partialorder %v3083, 8.507059e+37
          %v3085 = vand.u32 %v2946, 2147483648
          %v3086 = vor.u32 1.1754944e-38, %v3085
          %v3087 = vsel %vm3084, %v3086, %v3082
          %v3088 = vmul.f32 1.0, %v3087
          %v3089 = vrcp.pop %v2947
          %v3090 = vmul.f32 %v2947, %v3089
          %v3091 = vsub.f32 1.0, %v3090
          %v3092 = vmul.f32 %v3089, %v3091
          %v3093 = vadd.f32 %v3089, %v3092
          %vm3094 = vweird.f32 %v2947
          %vm3095 = vweird.f32 %v3089
          %vm3096 = vmor %vm3094, %vm3095
          %v3097 = vsel %vm3096, %v3089, %v3093
          %v3098 = vand.u32 2147483647, %v2947
          %vm3099 = vcmp.eq.f32.partialorder %v3098, 8.507059e+37
          %v3100 = vand.u32 %v2947, 2147483648
          %v3101 = vor.u32 1.1754944e-38, %v3100
          %v3102 = vsel %vm3099, %v3101, %v3097
          %v3103 = vmul.f32 1.0, %v3102
          %v3104 = vrcp.pop %v2948
          %v3105 = vmul.f32 %v2948, %v3104
          %v3106 = vsub.f32 1.0, %v3105
          %v3107 = vmul.f32 %v3104, %v3106
          %v3108 = vadd.f32 %v3104, %v3107
          %vm3109 = vweird.f32 %v2948
          %vm3110 = vweird.f32 %v3104
          %vm3111 = vmor %vm3109, %vm3110
          %v3112 = vsel %vm3111, %v3104, %v3108
          %v3113 = vand.u32 2147483647, %v2948
          %vm3114 = vcmp.eq.f32.partialorder %v3113, 8.507059e+37
          %v3115 = vand.u32 %v2948, 2147483648
          %v3116 = vor.u32 1.1754944e-38, %v3115
          %v3117 = vsel %vm3114, %v3116, %v3112
          %v3118 = vmul.f32 1.0, %v3117
          %v3119 = vrcp.pop %v2949
          %v3120 = vmul.f32 %v2949, %v3119
          %v3121 = vsub.f32 1.0, %v3120
          %v3122 = vmul.f32 %v3119, %v3121
          %v3123 = vadd.f32 %v3119, %v3122
          %vm3124 = vweird.f32 %v2949
          %vm3125 = vweird.f32 %v3119
          %vm3126 = vmor %vm3124, %vm3125
          %v3127 = vsel %vm3126, %v3119, %v3123
          %v3128 = vand.u32 2147483647, %v2949
          %vm3129 = vcmp.eq.f32.partialorder %v3128, 8.507059e+37
          %v3130 = vand.u32 %v2949, 2147483648
          %v3131 = vor.u32 1.1754944e-38, %v3130
          %v3132 = vsel %vm3129, %v3131, %v3127
          %v3133 = vmul.f32 1.0, %v3132
          %v3134 = vrcp.pop %v2950
          %v3135 = vmul.f32 %v2950, %v3134
          %v3136 = vsub.f32 1.0, %v3135
          %v3137 = vmul.f32 %v3134, %v3136
          %v3138 = vadd.f32 %v3134, %v3137
          %vm3139 = vweird.f32 %v2950
          %vm3140 = vweird.f32 %v3134
          %vm3141 = vmor %vm3139, %vm3140
          %v3142 = vsel %vm3141, %v3134, %v3138
          %v3143 = vand.u32 2147483647, %v2950
          %vm3144 = vcmp.eq.f32.partialorder %v3143, 8.507059e+37
          %v3145 = vand.u32 %v2950, 2147483648
          %v3146 = vor.u32 1.1754944e-38, %v3145
          %v3147 = vsel %vm3144, %v3146, %v3142
          %v3148 = vmul.f32 1.0, %v3147
          %v3149 = vrcp.pop %v2951
          %v3150 = vmul.f32 %v2951, %v3149
          %v3151 = vsub.f32 1.0, %v3150
          %v3152 = vmul.f32 %v3149, %v3151
          %v3153 = vadd.f32 %v3149, %v3152
          %vm3154 = vweird.f32 %v2951
          %vm3155 = vweird.f32 %v3149
          %vm3156 = vmor %vm3154, %vm3155
          %v3157 = vsel %vm3156, %v3149, %v3153
          %v3158 = vand.u32 2147483647, %v2951
          %vm3159 = vcmp.eq.f32.partialorder %v3158, 8.507059e+37
          %v3160 = vand.u32 %v2951, 2147483648
          %v3161 = vor.u32 1.1754944e-38, %v3160
          %v3162 = vsel %vm3159, %v3161, %v3157
          %v3163 = vmul.f32 1.0, %v3162
          %v3164 = vrcp.pop %v2952
          %v3165 = vmul.f32 %v2952, %v3164
          %v3166 = vsub.f32 1.0, %v3165
          %v3167 = vmul.f32 %v3164, %v3166
          %v3168 = vadd.f32 %v3164, %v3167
          %vm3169 = vweird.f32 %v2952
          %vm3170 = vweird.f32 %v3164
          %vm3171 = vmor %vm3169, %vm3170
          %v3172 = vsel %vm3171, %v3164, %v3168
          %v3173 = vand.u32 2147483647, %v2952
          %vm3174 = vcmp.eq.f32.partialorder %v3173, 8.507059e+37
          %v3175 = vand.u32 %v2952, 2147483648
          %v3176 = vor.u32 1.1754944e-38, %v3175
          %v3177 = vsel %vm3174, %v3176, %v3172
          %v3178 = vmul.f32 1.0, %v3177
          %v3179 = vrcp.pop %v2953
          %v3180 = vmul.f32 %v2953, %v3179
          %v3181 = vsub.f32 1.0, %v3180
          %v3182 = vmul.f32 %v3179, %v3181
          %v3183 = vadd.f32 %v3179, %v3182
          %vm3184 = vweird.f32 %v2953
          %vm3185 = vweird.f32 %v3179
          %vm3186 = vmor %vm3184, %vm3185
          %v3187 = vsel %vm3186, %v3179, %v3183
          %v3188 = vand.u32 2147483647, %v2953
          %vm3189 = vcmp.eq.f32.partialorder %v3188, 8.507059e+37
          %v3190 = vand.u32 %v2953, 2147483648
          %v3191 = vor.u32 1.1754944e-38, %v3190
          %v3192 = vsel %vm3189, %v3191, %v3187
          %v3193 = vmul.f32 1.0, %v3192
          %v3194 = vmul.f32 %v2843, %v2968
          %v3195 = vmul.f32 %v2846, %v2983
          %v3196 = vmul.f32 %v2849, %v2998
          %v3197 = vmul.f32 %v2852, %v3013
          %v3198 = vmul.f32 %v2855, %v3028
          %v3199 = vmul.f32 %v2858, %v3043
          %v3200 = vmul.f32 %v2861, %v3058
          %v3201 = vmul.f32 %v2864, %v3073
          %v3202 = vmul.f32 %v2867, %v3088
          %v3203 = vmul.f32 %v2870, %v3103
          %v3204 = vmul.f32 %v2873, %v3118
          %v3205 = vmul.f32 %v2876, %v3133
          %v3206 = vmul.f32 %v2879, %v3148
          %v3207 = vmul.f32 %v2882, %v3163
          %v3208 = vmul.f32 %v2885, %v3178
          %v3209 = vmul.f32 %v2888, %v3193
          %s3210 = scalar_lea.vmem [#allocation4], 128
          %v3211 = vld [vmem:[%s3210] sm:$0xff]
          %v3212 = vld [vmem:[%s3210 + $0x8] sm:$0xff]
          %v3213 = vld [vmem:[%s3210 + $0x10] sm:$0xff]
          %v3214 = vld [vmem:[%s3210 + $0x18] sm:$0xff]
          %v3215 = vld [vmem:[%s3210 + $0x20] sm:$0xff]
          %v3216 = vld [vmem:[%s3210 + $0x28] sm:$0xff]
          %v3217 = vld [vmem:[%s3210 + $0x30] sm:$0xff]
          %v3218 = vld [vmem:[%s3210 + $0x38] sm:$0xff]
          %v3219 = vld [vmem:[%s3210 + $0x40] sm:$0xff]
          %v3220 = vld [vmem:[%s3210 + $0x48] sm:$0xff]
          %v3221 = vld [vmem:[%s3210 + $0x50] sm:$0xff]
          %v3222 = vld [vmem:[%s3210 + $0x58] sm:$0xff]
          %v3223 = vld [vmem:[%s3210 + $0x60] sm:$0xff]
          %v3224 = vld [vmem:[%s3210 + $0x68] sm:$0xff]
          %v3225 = vld [vmem:[%s3210 + $0x70] sm:$0xff]
          %v3226 = vld [vmem:[%s3210 + $0x78] sm:$0xff]
          %s3227 = scalar_lea.vmem [#allocation5], 1
          %v3228 = vld [vmem:[%s3227] sm:$0x1]
          %v3230 = vperm.slane %v3228, 0
          %3232 = vmatpush.msra.mxu0 %v3226
          %3233 = vmatpush.msra.mxu0 %v3225
          %3234 = vmatpush.msra.mxu0 %v3224
          %3235 = vmatpush.msra.mxu0 %v3223
          %3236 = vmatpush.msra.mxu0 %v3222
          %3237 = vmatpush.msra.mxu0 %v3221
          %3238 = vmatpush.msra.mxu0 %v3220
          %3239 = vmatpush.msra.mxu0 %v3219
          %3240 = vmatpush.msra.mxu0 %v3218
          %3241 = vmatpush.msra.mxu0 %v3217
          %3242 = vmatpush.msra.mxu0 %v3216
          %3243 = vmatpush.msra.mxu0 %v3215
          %3244 = vmatpush.msra.mxu0 %v3214
          %3245 = vmatpush.msra.mxu0 %v3213
          %3246 = vmatpush.msra.mxu0 %v3212
          %3247 = vmatpush.msra.mxu0 %v3211
          %3248 = vmatmul.f32.gmra.mxu0 %v3194
          %v3249 = vpop.f32.mrf.mxu0
          %v3250 = vadd.f32 %v3230, %v3249
          %3251 = vmatmul.f32.gmra.mxu0 %v3195
          %v3252 = vpop.f32.mrf.mxu0
          %v3253 = vadd.f32 %v3230, %v3252
          %3254 = vmatmul.f32.gmra.mxu0 %v3196
          %v3255 = vpop.f32.mrf.mxu0
          %v3256 = vadd.f32 %v3230, %v3255
          %3257 = vmatmul.f32.gmra.mxu0 %v3197
          %v3258 = vpop.f32.mrf.mxu0
          %v3259 = vadd.f32 %v3230, %v3258
          %3260 = vmatmul.f32.gmra.mxu0 %v3198
          %v3261 = vpop.f32.mrf.mxu0
          %v3262 = vadd.f32 %v3230, %v3261
          %3263 = vmatmul.f32.gmra.mxu0 %v3199
          %v3264 = vpop.f32.mrf.mxu0
          %v3265 = vadd.f32 %v3230, %v3264
          %3266 = vmatmul.f32.gmra.mxu0 %v3200
          %v3267 = vpop.f32.mrf.mxu0
          %v3268 = vadd.f32 %v3230, %v3267
          %3269 = vmatmul.f32.gmra.mxu0 %v3201
          %v3270 = vpop.f32.mrf.mxu0
          %v3271 = vadd.f32 %v3230, %v3270
          %3272 = vmatmul.f32.gmra.mxu0 %v3202
          %v3273 = vpop.f32.mrf.mxu0
          %v3274 = vadd.f32 %v3230, %v3273
          %3275 = vmatmul.f32.gmra.mxu0 %v3203
          %v3276 = vpop.f32.mrf.mxu0
          %v3277 = vadd.f32 %v3230, %v3276
          %3278 = vmatmul.f32.gmra.mxu0 %v3204
          %v3279 = vpop.f32.mrf.mxu0
          %v3280 = vadd.f32 %v3230, %v3279
          %3281 = vmatmul.f32.gmra.mxu0 %v3205
          %v3282 = vpop.f32.mrf.mxu0
          %v3283 = vadd.f32 %v3230, %v3282
          %3284 = vmatmul.f32.gmra.mxu0 %v3206
          %v3285 = vpop.f32.mrf.mxu0
          %v3286 = vadd.f32 %v3230, %v3285
          %3287 = vmatmul.f32.gmra.mxu0 %v3207
          %v3288 = vpop.f32.mrf.mxu0
          %v3289 = vadd.f32 %v3230, %v3288
          %3290 = vmatmul.f32.gmra.mxu0 %v3208
          %v3291 = vpop.f32.mrf.mxu0
          %v3292 = vadd.f32 %v3230, %v3291
          %3293 = vmatmul.f32.gmra.mxu0 %v3209
          %v3294 = vpop.f32.mrf.mxu0
          %v3295 = vadd.f32 %v3230, %v3294
          %3296 = vdwg.mxu0
          %v3297 = vxor.u32 %v3250, 2147483648
          %v3298 = vxor.u32 %v3253, 2147483648
          %v3299 = vxor.u32 %v3256, 2147483648
          %v3300 = vxor.u32 %v3259, 2147483648
          %v3301 = vxor.u32 %v3262, 2147483648
          %v3302 = vxor.u32 %v3265, 2147483648
          %v3303 = vxor.u32 %v3268, 2147483648
          %v3304 = vxor.u32 %v3271, 2147483648
          %v3305 = vxor.u32 %v3274, 2147483648
          %v3306 = vxor.u32 %v3277, 2147483648
          %v3307 = vxor.u32 %v3280, 2147483648
          %v3308 = vxor.u32 %v3283, 2147483648
          %v3309 = vxor.u32 %v3286, 2147483648
          %v3310 = vxor.u32 %v3289, 2147483648
          %v3311 = vxor.u32 %v3292, 2147483648
          %v3312 = vxor.u32 %v3295, 2147483648
          %v3313 = vmul.f32 %v3297, 1.442695
          %v3314 = vpow.pop %v3313
          %v3315 = vmul.f32 %v3298, 1.442695
          %v3316 = vpow.pop %v3315
          %v3317 = vmul.f32 %v3299, 1.442695
          %v3318 = vpow.pop %v3317
          %v3319 = vmul.f32 %v3300, 1.442695
          %v3320 = vpow.pop %v3319
          %v3321 = vmul.f32 %v3301, 1.442695
          %v3322 = vpow.pop %v3321
          %v3323 = vmul.f32 %v3302, 1.442695
          %v3324 = vpow.pop %v3323
          %v3325 = vmul.f32 %v3303, 1.442695
          %v3326 = vpow.pop %v3325
          %v3327 = vmul.f32 %v3304, 1.442695
          %v3328 = vpow.pop %v3327
          %v3329 = vmul.f32 %v3305, 1.442695
          %v3330 = vpow.pop %v3329
          %v3331 = vmul.f32 %v3306, 1.442695
          %v3332 = vpow.pop %v3331
          %v3333 = vmul.f32 %v3307, 1.442695
          %v3334 = vpow.pop %v3333
          %v3335 = vmul.f32 %v3308, 1.442695
          %v3336 = vpow.pop %v3335
          %v3337 = vmul.f32 %v3309, 1.442695
          %v3338 = vpow.pop %v3337
          %v3339 = vmul.f32 %v3310, 1.442695
          %v3340 = vpow.pop %v3339
          %v3341 = vmul.f32 %v3311, 1.442695
          %v3342 = vpow.pop %v3341
          %v3343 = vmul.f32 %v3312, 1.442695
          %v3344 = vpow.pop %v3343
          %v3345 = vadd.f32 %v3314, 1.0
          %v3346 = vadd.f32 %v3316, 1.0
          %v3347 = vadd.f32 %v3318, 1.0
          %v3348 = vadd.f32 %v3320, 1.0
          %v3349 = vadd.f32 %v3322, 1.0
          %v3350 = vadd.f32 %v3324, 1.0
          %v3351 = vadd.f32 %v3326, 1.0
          %v3352 = vadd.f32 %v3328, 1.0
          %v3353 = vadd.f32 %v3330, 1.0
          %v3354 = vadd.f32 %v3332, 1.0
          %v3355 = vadd.f32 %v3334, 1.0
          %v3356 = vadd.f32 %v3336, 1.0
          %v3357 = vadd.f32 %v3338, 1.0
          %v3358 = vadd.f32 %v3340, 1.0
          %v3359 = vadd.f32 %v3342, 1.0
          %v3360 = vadd.f32 %v3344, 1.0
          %v3361 = vrcp.pop %v3345
          %v3362 = vmul.f32 %v3345, %v3361
          %v3363 = vsub.f32 1.0, %v3362
          %v3364 = vmul.f32 %v3361, %v3363
          %v3365 = vadd.f32 %v3361, %v3364
          %vm3366 = vweird.f32 %v3345
          %vm3367 = vweird.f32 %v3361
          %vm3368 = vmor %vm3366, %vm3367
          %v3369 = vsel %vm3368, %v3361, %v3365
          %v3370 = vand.u32 2147483647, %v3345
          %vm3371 = vcmp.eq.f32.partialorder %v3370, 8.507059e+37
          %v3372 = vand.u32 %v3345, 2147483648
          %v3373 = vor.u32 1.1754944e-38, %v3372
          %v3374 = vsel %vm3371, %v3373, %v3369
          %v3375 = vmul.f32 1.0, %v3374
          %v3376 = vrcp.pop %v3346
          %v3377 = vmul.f32 %v3346, %v3376
          %v3378 = vsub.f32 1.0, %v3377
          %v3379 = vmul.f32 %v3376, %v3378
          %v3380 = vadd.f32 %v3376, %v3379
          %vm3381 = vweird.f32 %v3346
          %vm3382 = vweird.f32 %v3376
          %vm3383 = vmor %vm3381, %vm3382
          %v3384 = vsel %vm3383, %v3376, %v3380
          %v3385 = vand.u32 2147483647, %v3346
          %vm3386 = vcmp.eq.f32.partialorder %v3385, 8.507059e+37
          %v3387 = vand.u32 %v3346, 2147483648
          %v3388 = vor.u32 1.1754944e-38, %v3387
          %v3389 = vsel %vm3386, %v3388, %v3384
          %v3390 = vmul.f32 1.0, %v3389
          %v3391 = vrcp.pop %v3347
          %v3392 = vmul.f32 %v3347, %v3391
          %v3393 = vsub.f32 1.0, %v3392
          %v3394 = vmul.f32 %v3391, %v3393
          %v3395 = vadd.f32 %v3391, %v3394
          %vm3396 = vweird.f32 %v3347
          %vm3397 = vweird.f32 %v3391
          %vm3398 = vmor %vm3396, %vm3397
          %v3399 = vsel %vm3398, %v3391, %v3395
          %v3400 = vand.u32 2147483647, %v3347
          %vm3401 = vcmp.eq.f32.partialorder %v3400, 8.507059e+37
          %v3402 = vand.u32 %v3347, 2147483648
          %v3403 = vor.u32 1.1754944e-38, %v3402
          %v3404 = vsel %vm3401, %v3403, %v3399
          %v3405 = vmul.f32 1.0, %v3404
          %v3406 = vrcp.pop %v3348
          %v3407 = vmul.f32 %v3348, %v3406
          %v3408 = vsub.f32 1.0, %v3407
          %v3409 = vmul.f32 %v3406, %v3408
          %v3410 = vadd.f32 %v3406, %v3409
          %vm3411 = vweird.f32 %v3348
          %vm3412 = vweird.f32 %v3406
          %vm3413 = vmor %vm3411, %vm3412
          %v3414 = vsel %vm3413, %v3406, %v3410
          %v3415 = vand.u32 2147483647, %v3348
          %vm3416 = vcmp.eq.f32.partialorder %v3415, 8.507059e+37
          %v3417 = vand.u32 %v3348, 2147483648
          %v3418 = vor.u32 1.1754944e-38, %v3417
          %v3419 = vsel %vm3416, %v3418, %v3414
          %v3420 = vmul.f32 1.0, %v3419
          %v3421 = vrcp.pop %v3349
          %v3422 = vmul.f32 %v3349, %v3421
          %v3423 = vsub.f32 1.0, %v3422
          %v3424 = vmul.f32 %v3421, %v3423
          %v3425 = vadd.f32 %v3421, %v3424
          %vm3426 = vweird.f32 %v3349
          %vm3427 = vweird.f32 %v3421
          %vm3428 = vmor %vm3426, %vm3427
          %v3429 = vsel %vm3428, %v3421, %v3425
          %v3430 = vand.u32 2147483647, %v3349
          %vm3431 = vcmp.eq.f32.partialorder %v3430, 8.507059e+37
          %v3432 = vand.u32 %v3349, 2147483648
          %v3433 = vor.u32 1.1754944e-38, %v3432
          %v3434 = vsel %vm3431, %v3433, %v3429
          %v3435 = vmul.f32 1.0, %v3434
          %v3436 = vrcp.pop %v3350
          %v3437 = vmul.f32 %v3350, %v3436
          %v3438 = vsub.f32 1.0, %v3437
          %v3439 = vmul.f32 %v3436, %v3438
          %v3440 = vadd.f32 %v3436, %v3439
          %vm3441 = vweird.f32 %v3350
          %vm3442 = vweird.f32 %v3436
          %vm3443 = vmor %vm3441, %vm3442
          %v3444 = vsel %vm3443, %v3436, %v3440
          %v3445 = vand.u32 2147483647, %v3350
          %vm3446 = vcmp.eq.f32.partialorder %v3445, 8.507059e+37
          %v3447 = vand.u32 %v3350, 2147483648
          %v3448 = vor.u32 1.1754944e-38, %v3447
          %v3449 = vsel %vm3446, %v3448, %v3444
          %v3450 = vmul.f32 1.0, %v3449
          %v3451 = vrcp.pop %v3351
          %v3452 = vmul.f32 %v3351, %v3451
          %v3453 = vsub.f32 1.0, %v3452
          %v3454 = vmul.f32 %v3451, %v3453
          %v3455 = vadd.f32 %v3451, %v3454
          %vm3456 = vweird.f32 %v3351
          %vm3457 = vweird.f32 %v3451
          %vm3458 = vmor %vm3456, %vm3457
          %v3459 = vsel %vm3458, %v3451, %v3455
          %v3460 = vand.u32 2147483647, %v3351
          %vm3461 = vcmp.eq.f32.partialorder %v3460, 8.507059e+37
          %v3462 = vand.u32 %v3351, 2147483648
          %v3463 = vor.u32 1.1754944e-38, %v3462
          %v3464 = vsel %vm3461, %v3463, %v3459
          %v3465 = vmul.f32 1.0, %v3464
          %v3466 = vrcp.pop %v3352
          %v3467 = vmul.f32 %v3352, %v3466
          %v3468 = vsub.f32 1.0, %v3467
          %v3469 = vmul.f32 %v3466, %v3468
          %v3470 = vadd.f32 %v3466, %v3469
          %vm3471 = vweird.f32 %v3352
          %vm3472 = vweird.f32 %v3466
          %vm3473 = vmor %vm3471, %vm3472
          %v3474 = vsel %vm3473, %v3466, %v3470
          %v3475 = vand.u32 2147483647, %v3352
          %vm3476 = vcmp.eq.f32.partialorder %v3475, 8.507059e+37
          %v3477 = vand.u32 %v3352, 2147483648
          %v3478 = vor.u32 1.1754944e-38, %v3477
          %v3479 = vsel %vm3476, %v3478, %v3474
          %v3480 = vmul.f32 1.0, %v3479
          %v3481 = vrcp.pop %v3353
          %v3482 = vmul.f32 %v3353, %v3481
          %v3483 = vsub.f32 1.0, %v3482
          %v3484 = vmul.f32 %v3481, %v3483
          %v3485 = vadd.f32 %v3481, %v3484
          %vm3486 = vweird.f32 %v3353
          %vm3487 = vweird.f32 %v3481
          %vm3488 = vmor %vm3486, %vm3487
          %v3489 = vsel %vm3488, %v3481, %v3485
          %v3490 = vand.u32 2147483647, %v3353
          %vm3491 = vcmp.eq.f32.partialorder %v3490, 8.507059e+37
          %v3492 = vand.u32 %v3353, 2147483648
          %v3493 = vor.u32 1.1754944e-38, %v3492
          %v3494 = vsel %vm3491, %v3493, %v3489
          %v3495 = vmul.f32 1.0, %v3494
          %v3496 = vrcp.pop %v3354
          %v3497 = vmul.f32 %v3354, %v3496
          %v3498 = vsub.f32 1.0, %v3497
          %v3499 = vmul.f32 %v3496, %v3498
          %v3500 = vadd.f32 %v3496, %v3499
          %vm3501 = vweird.f32 %v3354
          %vm3502 = vweird.f32 %v3496
          %vm3503 = vmor %vm3501, %vm3502
          %v3504 = vsel %vm3503, %v3496, %v3500
          %v3505 = vand.u32 2147483647, %v3354
          %vm3506 = vcmp.eq.f32.partialorder %v3505, 8.507059e+37
          %v3507 = vand.u32 %v3354, 2147483648
          %v3508 = vor.u32 1.1754944e-38, %v3507
          %v3509 = vsel %vm3506, %v3508, %v3504
          %v3510 = vmul.f32 1.0, %v3509
          %v3511 = vrcp.pop %v3355
          %v3512 = vmul.f32 %v3355, %v3511
          %v3513 = vsub.f32 1.0, %v3512
          %v3514 = vmul.f32 %v3511, %v3513
          %v3515 = vadd.f32 %v3511, %v3514
          %vm3516 = vweird.f32 %v3355
          %vm3517 = vweird.f32 %v3511
          %vm3518 = vmor %vm3516, %vm3517
          %v3519 = vsel %vm3518, %v3511, %v3515
          %v3520 = vand.u32 2147483647, %v3355
          %vm3521 = vcmp.eq.f32.partialorder %v3520, 8.507059e+37
          %v3522 = vand.u32 %v3355, 2147483648
          %v3523 = vor.u32 1.1754944e-38, %v3522
          %v3524 = vsel %vm3521, %v3523, %v3519
          %v3525 = vmul.f32 1.0, %v3524
          %v3526 = vrcp.pop %v3356
          %v3527 = vmul.f32 %v3356, %v3526
          %v3528 = vsub.f32 1.0, %v3527
          %v3529 = vmul.f32 %v3526, %v3528
          %v3530 = vadd.f32 %v3526, %v3529
          %vm3531 = vweird.f32 %v3356
          %vm3532 = vweird.f32 %v3526
          %vm3533 = vmor %vm3531, %vm3532
          %v3534 = vsel %vm3533, %v3526, %v3530
          %v3535 = vand.u32 2147483647, %v3356
          %vm3536 = vcmp.eq.f32.partialorder %v3535, 8.507059e+37
          %v3537 = vand.u32 %v3356, 2147483648
          %v3538 = vor.u32 1.1754944e-38, %v3537
          %v3539 = vsel %vm3536, %v3538, %v3534
          %v3540 = vmul.f32 1.0, %v3539
          %v3541 = vrcp.pop %v3357
          %v3542 = vmul.f32 %v3357, %v3541
          %v3543 = vsub.f32 1.0, %v3542
          %v3544 = vmul.f32 %v3541, %v3543
          %v3545 = vadd.f32 %v3541, %v3544
          %vm3546 = vweird.f32 %v3357
          %vm3547 = vweird.f32 %v3541
          %vm3548 = vmor %vm3546, %vm3547
          %v3549 = vsel %vm3548, %v3541, %v3545
          %v3550 = vand.u32 2147483647, %v3357
          %vm3551 = vcmp.eq.f32.partialorder %v3550, 8.507059e+37
          %v3552 = vand.u32 %v3357, 2147483648
          %v3553 = vor.u32 1.1754944e-38, %v3552
          %v3554 = vsel %vm3551, %v3553, %v3549
          %v3555 = vmul.f32 1.0, %v3554
          %v3556 = vrcp.pop %v3358
          %v3557 = vmul.f32 %v3358, %v3556
          %v3558 = vsub.f32 1.0, %v3557
          %v3559 = vmul.f32 %v3556, %v3558
          %v3560 = vadd.f32 %v3556, %v3559
          %vm3561 = vweird.f32 %v3358
          %vm3562 = vweird.f32 %v3556
          %vm3563 = vmor %vm3561, %vm3562
          %v3564 = vsel %vm3563, %v3556, %v3560
          %v3565 = vand.u32 2147483647, %v3358
          %vm3566 = vcmp.eq.f32.partialorder %v3565, 8.507059e+37
          %v3567 = vand.u32 %v3358, 2147483648
          %v3568 = vor.u32 1.1754944e-38, %v3567
          %v3569 = vsel %vm3566, %v3568, %v3564
          %v3570 = vmul.f32 1.0, %v3569
          %v3571 = vrcp.pop %v3359
          %v3572 = vmul.f32 %v3359, %v3571
          %v3573 = vsub.f32 1.0, %v3572
          %v3574 = vmul.f32 %v3571, %v3573
          %v3575 = vadd.f32 %v3571, %v3574
          %vm3576 = vweird.f32 %v3359
          %vm3577 = vweird.f32 %v3571
          %vm3578 = vmor %vm3576, %vm3577
          %v3579 = vsel %vm3578, %v3571, %v3575
          %v3580 = vand.u32 2147483647, %v3359
          %vm3581 = vcmp.eq.f32.partialorder %v3580, 8.507059e+37
          %v3582 = vand.u32 %v3359, 2147483648
          %v3583 = vor.u32 1.1754944e-38, %v3582
          %v3584 = vsel %vm3581, %v3583, %v3579
          %v3585 = vmul.f32 1.0, %v3584
          %v3586 = vrcp.pop %v3360
          %v3587 = vmul.f32 %v3360, %v3586
          %v3588 = vsub.f32 1.0, %v3587
          %v3589 = vmul.f32 %v3586, %v3588
          %v3590 = vadd.f32 %v3586, %v3589
          %vm3591 = vweird.f32 %v3360
          %vm3592 = vweird.f32 %v3586
          %vm3593 = vmor %vm3591, %vm3592
          %v3594 = vsel %vm3593, %v3586, %v3590
          %v3595 = vand.u32 2147483647, %v3360
          %vm3596 = vcmp.eq.f32.partialorder %v3595, 8.507059e+37
          %v3597 = vand.u32 %v3360, 2147483648
          %v3598 = vor.u32 1.1754944e-38, %v3597
          %v3599 = vsel %vm3596, %v3598, %v3594
          %v3600 = vmul.f32 1.0, %v3599
          %v3601 = vmul.f32 %v3250, %v3375
          %v3602 = vmul.f32 %v3253, %v3390
          %v3603 = vmul.f32 %v3256, %v3405
          %v3604 = vmul.f32 %v3259, %v3420
          %v3605 = vmul.f32 %v3262, %v3435
          %v3606 = vmul.f32 %v3265, %v3450
          %v3607 = vmul.f32 %v3268, %v3465
          %v3608 = vmul.f32 %v3271, %v3480
          %v3609 = vmul.f32 %v3274, %v3495
          %v3610 = vmul.f32 %v3277, %v3510
          %v3611 = vmul.f32 %v3280, %v3525
          %v3612 = vmul.f32 %v3283, %v3540
          %v3613 = vmul.f32 %v3286, %v3555
          %v3614 = vmul.f32 %v3289, %v3570
          %v3615 = vmul.f32 %v3292, %v3585
          %v3616 = vmul.f32 %v3295, %v3600
          %v3617 = vld [vmem:[#allocation6] sm:$0xff]
          %v3618 = vld [vmem:[#allocation6 + $0x8] sm:$0xff]
          %v3619 = vld [vmem:[#allocation6 + $0x10] sm:$0xff]
          %v3620 = vld [vmem:[#allocation6 + $0x18] sm:$0xff]
          %v3621 = vld [vmem:[#allocation6 + $0x20] sm:$0xff]
          %v3622 = vld [vmem:[#allocation6 + $0x28] sm:$0xff]
          %v3623 = vld [vmem:[#allocation6 + $0x30] sm:$0xff]
          %v3624 = vld [vmem:[#allocation6 + $0x38] sm:$0xff]
          %v3625 = vld [vmem:[#allocation6 + $0x40] sm:$0xff]
          %v3626 = vld [vmem:[#allocation6 + $0x48] sm:$0xff]
          %v3627 = vld [vmem:[#allocation6 + $0x50] sm:$0xff]
          %v3628 = vld [vmem:[#allocation6 + $0x58] sm:$0xff]
          %v3629 = vld [vmem:[#allocation6 + $0x60] sm:$0xff]
          %v3630 = vld [vmem:[#allocation6 + $0x68] sm:$0xff]
          %v3631 = vld [vmem:[#allocation6 + $0x70] sm:$0xff]
          %v3632 = vld [vmem:[#allocation6 + $0x78] sm:$0xff]
          %3633 = vmatpush.msra.mxu0 %v3632
          %3634 = vmatpush.msra.mxu0 %v3631
          %3635 = vmatpush.msra.mxu0 %v3630
          %3636 = vmatpush.msra.mxu0 %v3629
          %3637 = vmatpush.msra.mxu0 %v3628
          %3638 = vmatpush.msra.mxu0 %v3627
          %3639 = vmatpush.msra.mxu0 %v3626
          %3640 = vmatpush.msra.mxu0 %v3625
          %3641 = vmatpush.msra.mxu0 %v3624
          %3642 = vmatpush.msra.mxu0 %v3623
          %3643 = vmatpush.msra.mxu0 %v3622
          %3644 = vmatpush.msra.mxu0 %v3621
          %3645 = vmatpush.msra.mxu0 %v3620
          %3646 = vmatpush.msra.mxu0 %v3619
          %3647 = vmatpush.msra.mxu0 %v3618
          %3648 = vmatpush.msra.mxu0 %v3617
          %3649 = vmatmul.f32.gmra.mxu0 %v3601
          %v3650 = vpop.f32.mrf.mxu0
          %v3651 = vadd.f32 0.0, %v3650
          %3652 = vmatmul.f32.gmra.mxu0 %v3602
          %v3653 = vpop.f32.mrf.mxu0
          %v3654 = vadd.f32 0.0, %v3653
          %3655 = vmatmul.f32.gmra.mxu0 %v3603
          %v3656 = vpop.f32.mrf.mxu0
          %v3657 = vadd.f32 0.0, %v3656
          %3658 = vmatmul.f32.gmra.mxu0 %v3604
          %v3659 = vpop.f32.mrf.mxu0
          %v3660 = vadd.f32 0.0, %v3659
          %3661 = vmatmul.f32.gmra.mxu0 %v3605
          %v3662 = vpop.f32.mrf.mxu0
          %v3663 = vadd.f32 0.0, %v3662
          %3664 = vmatmul.f32.gmra.mxu0 %v3606
          %v3665 = vpop.f32.mrf.mxu0
          %v3666 = vadd.f32 0.0, %v3665
          %3667 = vmatmul.f32.gmra.mxu0 %v3607
          %v3668 = vpop.f32.mrf.mxu0
          %v3669 = vadd.f32 0.0, %v3668
          %3670 = vmatmul.f32.gmra.mxu0 %v3608
          %v3671 = vpop.f32.mrf.mxu0
          %v3672 = vadd.f32 0.0, %v3671
          %3673 = vmatmul.f32.gmra.mxu0 %v3609
          %v3674 = vpop.f32.mrf.mxu0
          %v3675 = vadd.f32 0.0, %v3674
          %3676 = vmatmul.f32.gmra.mxu0 %v3610
          %v3677 = vpop.f32.mrf.mxu0
          %v3678 = vadd.f32 0.0, %v3677
          %3679 = vmatmul.f32.gmra.mxu0 %v3611
          %v3680 = vpop.f32.mrf.mxu0
          %v3681 = vadd.f32 0.0, %v3680
          %3682 = vmatmul.f32.gmra.mxu0 %v3612
          %v3683 = vpop.f32.mrf.mxu0
          %v3684 = vadd.f32 0.0, %v3683
          %3685 = vmatmul.f32.gmra.mxu0 %v3613
          %v3686 = vpop.f32.mrf.mxu0
          %v3687 = vadd.f32 0.0, %v3686
          %3688 = vmatmul.f32.gmra.mxu0 %v3614
          %v3689 = vpop.f32.mrf.mxu0
          %v3690 = vadd.f32 0.0, %v3689
          %3691 = vmatmul.f32.gmra.mxu0 %v3615
          %v3692 = vpop.f32.mrf.mxu0
          %v3693 = vadd.f32 0.0, %v3692
          %3694 = vmatmul.f32.gmra.mxu0 %v3616
          %v3695 = vpop.f32.mrf.mxu0
          %v3696 = vadd.f32 0.0, %v3695
          %3697 = vdwg.mxu0
          %3698 = vst [vmem:[#allocation14] sm:$0xff] %v3651
          %3699 = vst [vmem:[#allocation14 + $0x8] sm:$0xff] %v3654
          %3700 = vst [vmem:[#allocation14 + $0x10] sm:$0xff] %v3657
          %3701 = vst [vmem:[#allocation14 + $0x18] sm:$0xff] %v3660
          %3702 = vst [vmem:[#allocation14 + $0x20] sm:$0xff] %v3663
          %3703 = vst [vmem:[#allocation14 + $0x28] sm:$0xff] %v3666
          %3704 = vst [vmem:[#allocation14 + $0x30] sm:$0xff] %v3669
          %3705 = vst [vmem:[#allocation14 + $0x38] sm:$0xff] %v3672
          %3706 = vst [vmem:[#allocation14 + $0x40] sm:$0xff] %v3675
          %3707 = vst [vmem:[#allocation14 + $0x48] sm:$0xff] %v3678
          %3708 = vst [vmem:[#allocation14 + $0x50] sm:$0xff] %v3681
          %3709 = vst [vmem:[#allocation14 + $0x58] sm:$0xff] %v3684
          %3710 = vst [vmem:[#allocation14 + $0x60] sm:$0xff] %v3687
          %3711 = vst [vmem:[#allocation14 + $0x68] sm:$0xff] %v3690
          %3712 = vst [vmem:[#allocation14 + $0x70] sm:$0xff] %v3693
          %3713 = vst [vmem:[#allocation14 + $0x78] sm:$0xff] %v3696
        $region94: #{tpu_custom_call.1} parent=31 // pred_fallthru
          _
        // Predicated region
        $region95: #{tpu_custom_call.1} parent=31 // pred_check
          %p3714 = pneg %p116
        $region96: #{tpu_custom_call.1} parent=31 // pred_check_branch
          %3716 = sbr.rel (%p3714) target = $region98
        $region97: #{tpu_custom_call.1} parent=31 // pred_region
          %3718 = vsyncadd [#allocation10], 0
          %s3719 = sshll.u32 [#allocation14], 4
          %s3720 = int_to_ptr.vmem [resolvable:$true] %s3719
          %s3721 = sshll.u32 %s7, 4
          %s3722 = int_to_ptr.hbm [resolvable:$true] %s3721
          %3727 = dma.vmem_to_hbm [thread:$0]  %s3720, 2048, %s3722, [#allocation10], 128, 128, 8
        $region98: #{tpu_custom_call.1} parent=31 // pred_fallthru
          _
        // Predicated region
        $region99: #{tpu_custom_call.1} parent=31 // pred_check
          %p3728 = pneg %p116
        $region100: #{tpu_custom_call.1} parent=31 // pred_check_branch
          %3730 = sbr.rel (%p3728) target = $region102
        $region101: #{tpu_custom_call.1} parent=31 // pred_region
          %3732 = dma.done [#allocation10], 2048
        $region102: #{tpu_custom_call.1} parent=31 // pred_fallthru
          _
      $region32: #{tpu_custom_call.1} parent=5 // pred_fallthru
        _
      %p3733 = scmp.le.s32.totalorder 2, %s20
      // Predicated region
      $region103: #{tpu_custom_call.1} parent=5 // pred_check
        %p3734 = pneg %p3733
      $region104: #{tpu_custom_call.1} parent=5 // pred_check_branch
        %3736 = sbr.rel (%p3734) target = $region106
      $region105: #{tpu_custom_call.1} parent=5 // pred_region
        %s3737 = ssub.s32 %s20, 2
      $region106: #{tpu_custom_call.1} parent=5 // pred_fallthru
        _
    $region6: #{tpu_custom_call.1} parent=1 // loop_footer
      %s24 = sadd.s32 1, %s20
    $region7: #{tpu_custom_call.1} parent=1 // loop_footer_branch
      %19 = sbr.rel target = $region3
    $region8: #{tpu_custom_call.1} parent=1 // loop_exit
      _
    %3738 = vsyncpa [#allocation9], 1
    %s3739 = scalar_lea.sflag [#allocation9], 1
    %3740 = vsyncpa %s3739, 1
    %3741 = vsyncpa [#allocation12], 1
    %s3742 = scalar_lea.sflag [#allocation12], 1
    %3743 = vsyncpa %s3742, 1
    %3744 = vsyncpa [#allocation10], 1
    %s3745 = scalar_lea.sflag [#allocation10], 1
    %3746 = vsyncpa %s3745, 1
  %3747 = vsyncmov [#allocation7]
  %s3748 = vpop.sfrf %3747
  %p3749 = scmp.eq.s32.totalorder %s3748, 0
  %p3750 = pneg %p3749
  %3752 = shalt.err (%p3750)
  %s3753 = scalar_lea.sflag [#allocation7], 1
  %3754 = vsyncmov %s3753
  %s3755 = vpop.sfrf %3754
  %p3756 = scmp.eq.s32.totalorder %s3755, 0
  %p3757 = pneg %p3756
  %3759 = shalt.err (%p3757)
  %s3760 = scalar_lea.sflag [#allocation7], 2
  %3761 = vsyncmov %s3760
  %s3762 = vpop.sfrf %3761
  %p3763 = scmp.eq.s32.totalorder %s3762, 0
  %p3764 = pneg %p3763
  %3766 = shalt.err (%p3764)
  %s3767 = scalar_lea.sflag [#allocation7], 3
  %3768 = vsyncmov %s3767
  %s3769 = vpop.sfrf %3768
  %p3770 = scmp.eq.s32.totalorder %s3769, 0
  %p3771 = pneg %p3770
  %3773 = shalt.err (%p3771)

</llo_original>
